<compile_context>
chip_gen: v6e
topology: v6e:2x2x1
jax: 0.10.0
libtpu: 0.0.40
codegen_flags: <defaults>
</compile_context>

<pallas_src>
import numpy as np
import jax
import jax.numpy as jnp
from jax.experimental import pallas as pl
from jax.experimental.pallas import tpu as pltpu

N_NODES = 16
FEATURES = 32
HIDDEN = 32
NUM_CLASS = 2
N_EDGES = 48
LANES = 128
NEG_PAD = -1e30            # pad-lane logit bias -> exp() == 0 in the log-softmax

BM = 128                   # node rows per grid step (8 graphs * 16 nodes)
GRAPHS_PER_BLOCK = BM // N_NODES
NUM_GRAPHS = 32            # -> 4 grid steps

# Row offsets of the weight blocks inside the packed bf16 slab [W_ROWS, 128].
# K-padded (128-row) blocks are fed by full-width [BM,128] activations.
R_FIRST = 0      # [32,128]  first_lin
R_C1T   = 32     # [128,128] con_lin1 top half   (multiplies A   @ x)
R_C1B   = 160    # [128,128] con_lin1 bottom half(multiplies A_re@ x)
R_C2T   = 288    # [128,128] con_lin2 top half
R_C2B   = 416    # [128,128] con_lin2 bottom half
R_IH    = 544    # [128,128] GRU weight_ih (lanes 0:96)
R_HH    = 672    # [128,128] GRU weight_hh (lanes 0:96)
R_L1    = 800    # [32,128]  lin1
R_OUT   = 832    # [32,128]  out (lanes 0:2)
W_ROWS  = 864


# ----------------------------------------------------------------------------
# Pallas kernel: one block of 8 graphs (128 node rows) per grid step.
# ----------------------------------------------------------------------------
def gated_gin_kernel(x_ref, acat_ref, w_ref, b_ref, out_ref):
    H = HIDDEN

    def mm(a, b):
        # bf16 operands on the MXU, fp32 accumulation (no-op cast for bf16 inputs).
        return jnp.dot(a.astype(jnp.bfloat16), b.astype(jnp.bfloat16),
                       preferred_element_type=jnp.float32)

    # GRU bias rows (reused by both GRU calls); kept as tiny [1, W] rows.
    b_rz = b_ref[4:5, 0:2 * H]
    b_in = b_ref[5:6, 0:H]
    b_hn = b_ref[6:7, 0:H]

    def conv_block(xv, r_top, r_bot, b_row):
        # One block-diagonal matmul gives both (fwd + reversed) propagations.
        s = mm(acat_ref[...], xv).astype(jnp.bfloat16)          # [2*BM, 128]
        # concat-then-linear as two matmul-accumulates (no lane concat).
        return (mm(s[0:BM, :], w_ref[r_top:r_top + 128, :])
                + mm(s[BM:2 * BM, :], w_ref[r_bot:r_bot + 128, :])
                + b_ref[b_row:b_row + 1, :])                     # [BM, 128]

    def gru(gi, gh, h_low):
        # gi/gh: [BM,128] with gates in lanes (r: 0:H, z: H:2H, n: 2H:3H).
        # Fused r/z sigmoid over a lane-dense [BM, 2H] slice.
        rz = jax.nn.sigmoid(gi[:, 0:2 * H] + gh[:, 0:2 * H] + b_rz)
        r = rz[:, 0:H]
        z = rz[:, H:2 * H]
        n = jnp.tanh(gi[:, 2 * H:3 * H] + b_in + r * (gh[:, 2 * H:3 * H] + b_hn))
        return (1.0 - z) * n + z * h_low                         # [BM, H]

    # first_lin (+ dropout p=0.5, identity in eval); result lane-padded to 128.
    x = mm(x_ref[...], w_ref[R_FIRST:R_FIRST + 32, :]) + b_ref[0:1, :]   # [BM,128]
    h_low = x[:, 0:H]                                   # GRU hidden state h0
    gh0 = mm(x, w_ref[R_HH:R_HH + 128, :])              # shared h0 @ w_hh

    # conv1 (forward + reversed graph) + con_lin1
    x = conv_block(x, R_C1T, R_C1B, 1)
    # GRUCell #1 (hidden state = h0)
    x = gru(mm(x, w_ref[R_IH:R_IH + 128, :]), gh0, h_low)                # [BM,H]
    # lin1 (+ dropout p=0.2, identity in eval)
    x = mm(x, w_ref[R_L1:R_L1 + 32, :]) + b_ref[3:4, :]                  # [BM,128]
    # conv2 + con_lin2
    x = conv_block(x, R_C2T, R_C2B, 2)
    # GRUCell #2 (same cell, same h0)
    x = gru(mm(x, w_ref[R_IH:R_IH + 128, :]), gh0, h_low)                # [BM,H]

    # out linear + log_softmax, lane-dense [BM, 128]; pad-lane bias = -1e30.
    logits = mm(x, w_ref[R_OUT:R_OUT + 32, :]) + b_ref[7:8, :]
    stats = logits[:, 0:8]                         # real classes in lanes 0:2
    m = jnp.max(stats, axis=-1, keepdims=True)
    lse = m + jnp.log(jnp.sum(jnp.exp(stats - m), axis=-1, keepdims=True))
    out_ref[...] = logits - lse


def gated_gin_forward(x_pack, acat_pack, w_slab, b_slab):
    total_rows = x_pack.shape[0]
    assert total_rows % BM == 0
    num_blocks = total_rows // BM

    # ~12 MXU matmuls / block at M=128 (~49 MFLOP); sigmoid/tanh/exp/log ~26k/block.
    bytes_accessed = int(x_pack.size * 2 + acat_pack.size * 2
                         + w_slab.size * 2 + b_slab.size * 4
                         + total_rows * LANES * 4)
    cost = pl.CostEstimate(flops=int(num_blocks * 49_300_000),
                           transcendentals=int(num_blocks * 26_000),
                           bytes_accessed=bytes_accessed)

    out = pl.pallas_call(
        gated_gin_kernel,
        out_shape=jax.ShapeDtypeStruct((total_rows, LANES), jnp.float32),
        grid=(num_blocks,),
        in_specs=[
            pl.BlockSpec((BM, FEATURES), lambda g: (g, 0)),        # node features
            pl.BlockSpec((2 * BM, BM), lambda g: (g, 0)),          # block-diag [A; A_re]
            pl.BlockSpec((W_ROWS, LANES), lambda g: (0, 0)),       # weights: resident
            pl.BlockSpec((8, LANES), lambda g: (0, 0)),            # biases:  resident
        ],
        out_specs=pl.BlockSpec((BM, LANES), lambda g: (g, 0)),
        compiler_params=pltpu.CompilerParams(
            dimension_semantics=("parallel",)),                    # megacore / v7x 2xTC
        cost_estimate=cost,
    )(x_pack, acat_pack, w_slab, b_slab)
    return out[:, :NUM_CLASS]


# ----------------------------------------------------------------------------
# Deterministic parameter init (shapes match the PyTorch module __init__)
# ----------------------------------------------------------------------------
def init_params(key):
    def lin(k, fan_in, fan_out):
        k1, k2 = jax.random.split(k)
        bound = 1.0 / np.sqrt(fan_in)
        w = jax.random.uniform(k1, (fan_in, fan_out), jnp.float32, -bound, bound)
        b = jax.random.uniform(k2, (1, fan_out), jnp.float32, -bound, bound)
        return w, b

    keys = jax.random.split(key, 7)
    H = HIDDEN
    w_first, b_first = lin(keys[0], FEATURES, H)          # first_lin
    w_c1, b_c1 = lin(keys[1], 2 * H, H)                   # con_lin1
    w_c2, b_c2 = lin(keys[2], 2 * H, H)                   # con_lin2
    w_l1, b_l1 = lin(keys[3], H, H)                       # lin1
    w_out, b_out = lin(keys[4], H, NUM_CLASS)             # out
    w_ih, b_ih = lin(keys[5], H, 3 * H)                   # GRUCell weight_ih / bias_ih
    w_hh, b_hh = lin(keys[6], H, 3 * H)                   # GRUCell weight_hh / bias_hh
    return {
        "w_first": w_first, "b_first": b_first,
        "w_c1": w_c1, "b_c1": b_c1,
        "w_c2": w_c2, "b_c2": b_c2,
        "w_l1": w_l1, "b_l1": b_l1,
        "w_out": w_out, "b_out": b_out,
        "w_ih": w_ih, "w_hh": w_hh,
        # PyTorch GRU gate order (r, z, n); r/z biases pre-summed.
        "b_r": b_ih[:, 0 * H:1 * H] + b_hh[:, 0 * H:1 * H],
        "b_z": b_ih[:, 1 * H:2 * H] + b_hh[:, 1 * H:2 * H],
        "b_in": b_ih[:, 2 * H:3 * H],
        "b_hn": b_hh[:, 2 * H:3 * H],
    }


def pack_params(sp):
    """Pack parameters into one bf16 weight slab [W_ROWS,128] + one fp32 bias slab [8,128]."""
    H = HIDDEN
    w = np.zeros((W_ROWS, LANES), np.float32)
    w[R_FIRST:R_FIRST + 32, 0:H]       = np.asarray(sp["w_first"])
    w[R_C1T:R_C1T + H, 0:H]            = np.asarray(sp["w_c1"])[:H, :]
    w[R_C1B:R_C1B + H, 0:H]            = np.asarray(sp["w_c1"])[H:, :]
    w[R_C2T:R_C2T + H, 0:H]            = np.asarray(sp["w_c2"])[:H, :]
    w[R_C2B:R_C2B + H, 0:H]            = np.asarray(sp["w_c2"])[H:, :]
    w[R_IH:R_IH + H, 0:3 * H]          = np.asarray(sp["w_ih"])
    w[R_HH:R_HH + H, 0:3 * H]          = np.asarray(sp["w_hh"])
    w[R_L1:R_L1 + H, 0:H]              = np.asarray(sp["w_l1"])
    w[R_OUT:R_OUT + H, 0:NUM_CLASS]    = np.asarray(sp["w_out"])

    b = np.zeros((8, LANES), np.float32)
    b[0, 0:H]         = np.asarray(sp["b_first"])[0]
    b[1, 0:H]         = np.asarray(sp["b_c1"])[0]
    b[2, 0:H]         = np.asarray(sp["b_c2"])[0]
    b[3, 0:H]         = np.asarray(sp["b_l1"])[0]
    b[4, 0:H]         = np.asarray(sp["b_r"])[0]
    b[4, H:2 * H]     = np.asarray(sp["b_z"])[0]
    b[5, 0:H]         = np.asarray(sp["b_in"])[0]
    b[6, 0:H]         = np.asarray(sp["b_hn"])[0]
    b[7, :]           = NEG_PAD
    b[7, 0:NUM_CLASS] = np.asarray(sp["b_out"])[0]
    return jnp.asarray(w, jnp.bfloat16), jnp.asarray(b, jnp.float32)


def build_graph(key, n_nodes, n_edges):
    k1, k2, k3 = jax.random.split(key, 3)
    src = jax.random.randint(k1, (n_edges,), 0, n_nodes)
    dst = jax.random.randint(k2, (n_edges,), 0, n_nodes)
    w = jax.random.uniform(k3, (n_edges,), jnp.float32)
    # A[target, source] accumulates edge weights -> A @ x == weighted scatter-add
    adj = jnp.zeros((n_nodes, n_nodes), jnp.float32).at[dst, src].add(w)
    # reversed graph: edge_index_re = edge_index[[1, 0], :] with the same weights
    adj_re = jnp.zeros((n_nodes, n_nodes), jnp.float32).at[src, dst].add(w)
    return adj, adj_re


def pack_batch(xs, adjs, adjs_re):
    """Stack graphs into [num_blocks*BM, F] features and block-diagonal [A;A_re] tiles."""
    num_graphs = len(xs)
    assert num_graphs % GRAPHS_PER_BLOCK == 0
    num_blocks = num_graphs // GRAPHS_PER_BLOCK
    x_pack = np.zeros((num_blocks * BM, FEATURES), np.float32)
    acat_pack = np.zeros((num_blocks * 2 * BM, BM), np.float32)
    for i in range(num_graphs):
        blk, slot = divmod(i, GRAPHS_PER_BLOCK)
        r0 = blk * BM + slot * N_NODES
        c0 = slot * N_NODES
        a0 = blk * 2 * BM
        x_pack[r0:r0 + N_NODES, :] = np.asarray(xs[i])
        acat_pack[a0 + c0:a0 + c0 + N_NODES, c0:c0 + N_NODES] = np.asarray(adjs[i])
        acat_pack[a0 + BM + c0:a0 + BM + c0 + N_NODES, c0:c0 + N_NODES] = np.asarray(adjs_re[i])
    # pre-cast to bf16 host-side (the MXU operands are bf16 anyway)
    return jnp.asarray(x_pack, jnp.bfloat16), jnp.asarray(acat_pack, jnp.bfloat16)


# ----------------------------------------------------------------------------
# Pure-JAX reference (per graph); mm_dtype selects fp32 or bf16 matmul operands
# ----------------------------------------------------------------------------
def reference_forward(x, adj, adj_re, sp, mm_dtype=jnp.float32):
    H = HIDDEN

    def mm(a, b):
        return jnp.dot(a.astype(mm_dtype), b.astype(mm_dtype),
                       preferred_element_type=jnp.float32)

    def gru(xx, hh):
        gi = mm(xx, sp["w_ih"])
        gh = mm(hh, sp["w_hh"])
        r = jax.nn.sigmoid(gi[:, 0:H] + gh[:, 0:H] + sp["b_r"])
        z = jax.nn.sigmoid(gi[:, H:2 * H] + gh[:, H:2 * H] + sp["b_z"])
        n = jnp.tanh(gi[:, 2 * H:3 * H] + sp["b_in"]
                     + r * (gh[:, 2 * H:3 * H] + sp["b_hn"]))
        return (1.0 - z) * n + z * hh

    x = mm(x, sp["w_first"]) + sp["b_first"]
    h0 = x
    x = mm(jnp.concatenate([mm(adj, x), mm(adj_re, x)], axis=-1), sp["w_c1"]) + sp["b_c1"]
    x = gru(x, h0)
    x = mm(x, sp["w_l1"]) + sp["b_l1"]
    x = mm(jnp.concatenate([mm(adj, x), mm(adj_re, x)], axis=-1), sp["w_c2"]) + sp["b_c2"]
    x = gru(x, h0)
    logits = mm(x, sp["w_out"]) + sp["b_out"]
    return jax.nn.log_softmax(logits, axis=-1)


if __name__ == "__main__":
    key = jax.random.PRNGKey(0)
    kx, kg, kp = jax.random.split(key, 3)
    xkeys = jax.random.split(kx, NUM_GRAPHS)
    gkeys = jax.random.split(kg, NUM_GRAPHS)

    xs, adjs, adjs_re = [], [], []
    for g in range(NUM_GRAPHS):
        xs.append(jax.random.normal(xkeys[g], (N_NODES, FEATURES), jnp.float32))
        a, ar = build_graph(gkeys[g], N_NODES, N_EDGES)
        adjs.append(a)
        adjs_re.append(ar)

    sp = init_params(kp)
    w_slab, b_slab = pack_params(sp)
    x_pack, acat_pack = pack_batch(xs, adjs, adjs_re)

    out = gated_gin_forward(x_pack, acat_pack, w_slab, b_slab)
    out = jax.block_until_ready(out)
    assert out.shape == (NUM_GRAPHS * N_NODES, NUM_CLASS)

    # Exact-math check: per-graph reference using the same bf16-operand /
    # f32-accumulate matmuls (batch-packing + block-diag adjacency must match).
    ref_bf16 = jnp.concatenate(
        [reference_forward(xs[g], adjs[g], adjs_re[g], sp, mm_dtype=jnp.bfloat16)
         for g in range(NUM_GRAPHS)], axis=0)
    np.testing.assert_allclose(np.asarray(out), np.asarray(ref_bf16),
                               rtol=5e-3, atol=5e-3)

    # Approximation sanity check vs. the full-fp32 reference (bf16 MXU error budget).
    ref_f32 = jnp.concatenate(
        [reference_forward(xs[g], adjs[g], adjs_re[g], sp, mm_dtype=jnp.float32)
         for g in range(NUM_GRAPHS)], axis=0)
    max_err = float(jnp.max(jnp.abs(out - ref_f32)))
    assert max_err < 1.5e-1, f"bf16 approximation error too large: {max_err}"

    print("KERNEL_OK")
</pallas_src>

<mosaic_0001>
module attributes {stable_mosaic.version = 11 : i64} {
  func.func @gated_gin_kernel(%arg0: i32, %arg1: memref<128x32xbf16, #tpu.memory_space<vmem>>, %arg2: memref<256x128xbf16, #tpu.memory_space<vmem>>, %arg3: memref<864x128xbf16, #tpu.memory_space<vmem>>, %arg4: memref<8x128xf32, #tpu.memory_space<vmem>>, %arg5: memref<128x128xf32, #tpu.memory_space<vmem>>) attributes {dimension_semantics = [#tpu.dimension_semantics<parallel>], iteration_bounds = array<i64: 4>, scalar_prefetch = 0 : i64, scratch_operands = 0 : i64, tpu.core_type = #tpu.core_type<tc>, window_params = [{transform_indices = @transform_0, window_bounds = array<i64: 128, 32>}, {transform_indices = @transform_1, window_bounds = array<i64: 256, 128>}, {pipeline_mode = #tpu.pipeline_mode<synchronous>, transform_indices = @transform_2, window_bounds = array<i64: 864, 128>}, {pipeline_mode = #tpu.pipeline_mode<synchronous>, transform_indices = @transform_3, window_bounds = array<i64: 8, 128>}, {transform_indices = @transform_4, window_bounds = array<i64: 128, 128>}]} {
    %c4 = arith.constant 4 : index
    %c0 = arith.constant 0 : index
    %0 = vector.load %arg4[%c4, %c0] : memref<8x128xf32, #tpu.memory_space<vmem>>, vector<1x64xf32>
    %c5 = arith.constant 5 : index
    %c0_0 = arith.constant 0 : index
    %1 = vector.load %arg4[%c5, %c0_0] : memref<8x128xf32, #tpu.memory_space<vmem>>, vector<1x32xf32>
    %c6 = arith.constant 6 : index
    %c0_1 = arith.constant 0 : index
    %2 = vector.load %arg4[%c6, %c0_1] : memref<8x128xf32, #tpu.memory_space<vmem>>, vector<1x32xf32>
    %c0_2 = arith.constant 0 : index
    %c0_3 = arith.constant 0 : index
    %3 = vector.load %arg1[%c0_2, %c0_3] : memref<128x32xbf16, #tpu.memory_space<vmem>>, vector<128x32xbf16>
    %c0_4 = arith.constant 0 : index
    %c0_5 = arith.constant 0 : index
    %4 = vector.load %arg3[%c0_4, %c0_5] : memref<864x128xbf16, #tpu.memory_space<vmem>>, vector<32x128xbf16>
    %cst = arith.constant dense<0.000000e+00> : vector<128x128xf32>
    %5 = tpu.matmul %3, %4, %cst {dimension_numbers = #tpu.dot_dimension_numbers<[1], [0], [0], [1], [0, 0, 1, 1], [], []>} : vector<128x32xbf16>, vector<32x128xbf16>, vector<128x128xf32> -> vector<128x128xf32>
    %c0_6 = arith.constant 0 : index
    %c0_7 = arith.constant 0 : index
    %6 = vector.load %arg4[%c0_6, %c0_7] : memref<8x128xf32, #tpu.memory_space<vmem>>, vector<1x128xf32>
    %7 = vector.broadcast %6 : vector<1x128xf32> to vector<128x128xf32>
    %8 = arith.addf %5, %7 : vector<128x128xf32>
    %9 = vector.extract_strided_slice %8 {offsets = [0, 0], sizes = [128, 32], strides = [1, 1]} : vector<128x128xf32> to vector<128x32xf32>
    %c672 = arith.constant 672 : index
    %c0_8 = arith.constant 0 : index
    %10 = vector.load %arg3[%c672, %c0_8] : memref<864x128xbf16, #tpu.memory_space<vmem>>, vector<128x128xbf16>
    %11 = arith.truncf %8 : vector<128x128xf32> to vector<128x128xbf16>
    %cst_9 = arith.constant dense<0.000000e+00> : vector<128x128xf32>
    %12 = tpu.matmul %11, %10, %cst_9 {dimension_numbers = #tpu.dot_dimension_numbers<[1], [0], [0], [1], [0, 0, 1, 1], [], []>} : vector<128x128xbf16>, vector<128x128xbf16>, vector<128x128xf32> -> vector<128x128xf32>
    %c0_10 = arith.constant 0 : index
    %c0_11 = arith.constant 0 : index
    %13 = vector.load %arg2[%c0_10, %c0_11] : memref<256x128xbf16, #tpu.memory_space<vmem>>, vector<256x128xbf16>
    %14 = arith.truncf %8 : vector<128x128xf32> to vector<128x128xbf16>
    %cst_12 = arith.constant dense<0.000000e+00> : vector<256x128xf32>
    %15 = tpu.matmul %13, %14, %cst_12 {dimension_numbers = #tpu.dot_dimension_numbers<[1], [0], [0], [1], [0, 0, 1, 1], [], []>} : vector<256x128xbf16>, vector<128x128xbf16>, vector<256x128xf32> -> vector<256x128xf32>
    %16 = arith.truncf %15 : vector<256x128xf32> to vector<256x128xbf16>
    %17 = vector.extract_strided_slice %16 {offsets = [0, 0], sizes = [128, 128], strides = [1, 1]} : vector<256x128xbf16> to vector<128x128xbf16>
    %c32 = arith.constant 32 : index
    %c0_13 = arith.constant 0 : index
    %18 = vector.load %arg3[%c32, %c0_13] : memref<864x128xbf16, #tpu.memory_space<vmem>>, vector<128x128xbf16>
    %cst_14 = arith.constant dense<0.000000e+00> : vector<128x128xf32>
    %19 = tpu.matmul %17, %18, %cst_14 {dimension_numbers = #tpu.dot_dimension_numbers<[1], [0], [0], [1], [0, 0, 1, 1], [], []>} : vector<128x128xbf16>, vector<128x128xbf16>, vector<128x128xf32> -> vector<128x128xf32>
    %20 = vector.extract_strided_slice %16 {offsets = [128, 0], sizes = [128, 128], strides = [1, 1]} : vector<256x128xbf16> to vector<128x128xbf16>
    %c160 = arith.constant 160 : index
    %c0_15 = arith.constant 0 : index
    %21 = vector.load %arg3[%c160, %c0_15] : memref<864x128xbf16, #tpu.memory_space<vmem>>, vector<128x128xbf16>
    %cst_16 = arith.constant dense<0.000000e+00> : vector<128x128xf32>
    %22 = tpu.matmul %20, %21, %cst_16 {dimension_numbers = #tpu.dot_dimension_numbers<[1], [0], [0], [1], [0, 0, 1, 1], [], []>} : vector<128x128xbf16>, vector<128x128xbf16>, vector<128x128xf32> -> vector<128x128xf32>
    %23 = arith.addf %19, %22 : vector<128x128xf32>
    %c1 = arith.constant 1 : index
    %c0_17 = arith.constant 0 : index
    %24 = vector.load %arg4[%c1, %c0_17] : memref<8x128xf32, #tpu.memory_space<vmem>>, vector<1x128xf32>
    %25 = vector.broadcast %24 : vector<1x128xf32> to vector<128x128xf32>
    %26 = arith.addf %23, %25 : vector<128x128xf32>
    %c544 = arith.constant 544 : index
    %c0_18 = arith.constant 0 : index
    %27 = vector.load %arg3[%c544, %c0_18] : memref<864x128xbf16, #tpu.memory_space<vmem>>, vector<128x128xbf16>
    %28 = arith.truncf %26 : vector<128x128xf32> to vector<128x128xbf16>
    %cst_19 = arith.constant dense<0.000000e+00> : vector<128x128xf32>
    %29 = tpu.matmul %28, %27, %cst_19 {dimension_numbers = #tpu.dot_dimension_numbers<[1], [0], [0], [1], [0, 0, 1, 1], [], []>} : vector<128x128xbf16>, vector<128x128xbf16>, vector<128x128xf32> -> vector<128x128xf32>
    %30 = vector.extract_strided_slice %29 {offsets = [0, 0], sizes = [128, 64], strides = [1, 1]} : vector<128x128xf32> to vector<128x64xf32>
    %31 = vector.extract_strided_slice %12 {offsets = [0, 0], sizes = [128, 64], strides = [1, 1]} : vector<128x128xf32> to vector<128x64xf32>
    %32 = arith.addf %30, %31 : vector<128x64xf32>
    %33 = vector.broadcast %0 : vector<1x64xf32> to vector<128x64xf32>
    %34 = arith.addf %32, %33 : vector<128x64xf32>
    %35 = arith.negf %34 : vector<128x64xf32>
    %36 = math.exp %35 : vector<128x64xf32>
    %cst_20 = arith.constant 1.000000e+00 : f32
    %37 = vector.broadcast %cst_20 : f32 to vector<128x64xf32>
    %38 = arith.addf %37, %36 : vector<128x64xf32>
    %39 = arith.divf %37, %38 : vector<128x64xf32>
    %40 = vector.extract_strided_slice %39 {offsets = [0, 0], sizes = [128, 32], strides = [1, 1]} : vector<128x64xf32> to vector<128x32xf32>
    %41 = vector.extract_strided_slice %39 {offsets = [0, 32], sizes = [128, 32], strides = [1, 1]} : vector<128x64xf32> to vector<128x32xf32>
    %42 = vector.extract_strided_slice %29 {offsets = [0, 64], sizes = [128, 32], strides = [1, 1]} : vector<128x128xf32> to vector<128x32xf32>
    %43 = vector.broadcast %1 : vector<1x32xf32> to vector<128x32xf32>
    %44 = arith.addf %42, %43 : vector<128x32xf32>
    %45 = vector.extract_strided_slice %12 {offsets = [0, 64], sizes = [128, 32], strides = [1, 1]} : vector<128x128xf32> to vector<128x32xf32>
    %46 = vector.broadcast %2 : vector<1x32xf32> to vector<128x32xf32>
    %47 = arith.addf %45, %46 : vector<128x32xf32>
    %48 = arith.mulf %40, %47 : vector<128x32xf32>
    %49 = arith.addf %44, %48 : vector<128x32xf32>
    %50 = math.tanh %49 : vector<128x32xf32>
    %cst_21 = arith.constant 1.000000e+00 : f32
    %51 = vector.broadcast %cst_21 : f32 to vector<128x32xf32>
    %52 = arith.subf %51, %41 : vector<128x32xf32>
    %53 = arith.mulf %52, %50 : vector<128x32xf32>
    %54 = arith.mulf %41, %9 : vector<128x32xf32>
    %55 = arith.addf %53, %54 : vector<128x32xf32>
    %c800 = arith.constant 800 : index
    %c0_22 = arith.constant 0 : index
    %56 = vector.load %arg3[%c800, %c0_22] : memref<864x128xbf16, #tpu.memory_space<vmem>>, vector<32x128xbf16>
    %57 = arith.truncf %55 : vector<128x32xf32> to vector<128x32xbf16>
    %cst_23 = arith.constant dense<0.000000e+00> : vector<128x128xf32>
    %58 = tpu.matmul %57, %56, %cst_23 {dimension_numbers = #tpu.dot_dimension_numbers<[1], [0], [0], [1], [0, 0, 1, 1], [], []>} : vector<128x32xbf16>, vector<32x128xbf16>, vector<128x128xf32> -> vector<128x128xf32>
    %c3 = arith.constant 3 : index
    %c0_24 = arith.constant 0 : index
    %59 = vector.load %arg4[%c3, %c0_24] : memref<8x128xf32, #tpu.memory_space<vmem>>, vector<1x128xf32>
    %60 = vector.broadcast %59 : vector<1x128xf32> to vector<128x128xf32>
    %61 = arith.addf %58, %60 : vector<128x128xf32>
    %c0_25 = arith.constant 0 : index
    %c0_26 = arith.constant 0 : index
    %62 = vector.load %arg2[%c0_25, %c0_26] : memref<256x128xbf16, #tpu.memory_space<vmem>>, vector<256x128xbf16>
    %63 = arith.truncf %61 : vector<128x128xf32> to vector<128x128xbf16>
    %cst_27 = arith.constant dense<0.000000e+00> : vector<256x128xf32>
    %64 = tpu.matmul %62, %63, %cst_27 {dimension_numbers = #tpu.dot_dimension_numbers<[1], [0], [0], [1], [0, 0, 1, 1], [], []>} : vector<256x128xbf16>, vector<128x128xbf16>, vector<256x128xf32> -> vector<256x128xf32>
    %65 = arith.truncf %64 : vector<256x128xf32> to vector<256x128xbf16>
    %66 = vector.extract_strided_slice %65 {offsets = [0, 0], sizes = [128, 128], strides = [1, 1]} : vector<256x128xbf16> to vector<128x128xbf16>
    %c288 = arith.constant 288 : index
    %c0_28 = arith.constant 0 : index
    %67 = vector.load %arg3[%c288, %c0_28] : memref<864x128xbf16, #tpu.memory_space<vmem>>, vector<128x128xbf16>
    %cst_29 = arith.constant dense<0.000000e+00> : vector<128x128xf32>
    %68 = tpu.matmul %66, %67, %cst_29 {dimension_numbers = #tpu.dot_dimension_numbers<[1], [0], [0], [1], [0, 0, 1, 1], [], []>} : vector<128x128xbf16>, vector<128x128xbf16>, vector<128x128xf32> -> vector<128x128xf32>
    %69 = vector.extract_strided_slice %65 {offsets = [128, 0], sizes = [128, 128], strides = [1, 1]} : vector<256x128xbf16> to vector<128x128xbf16>
    %c416 = arith.constant 416 : index
    %c0_30 = arith.constant 0 : index
    %70 = vector.load %arg3[%c416, %c0_30] : memref<864x128xbf16, #tpu.memory_space<vmem>>, vector<128x128xbf16>
    %cst_31 = arith.constant dense<0.000000e+00> : vector<128x128xf32>
    %71 = tpu.matmul %69, %70, %cst_31 {dimension_numbers = #tpu.dot_dimension_numbers<[1], [0], [0], [1], [0, 0, 1, 1], [], []>} : vector<128x128xbf16>, vector<128x128xbf16>, vector<128x128xf32> -> vector<128x128xf32>
    %72 = arith.addf %68, %71 : vector<128x128xf32>
    %c2 = arith.constant 2 : index
    %c0_32 = arith.constant 0 : index
    %73 = vector.load %arg4[%c2, %c0_32] : memref<8x128xf32, #tpu.memory_space<vmem>>, vector<1x128xf32>
    %74 = vector.broadcast %73 : vector<1x128xf32> to vector<128x128xf32>
    %75 = arith.addf %72, %74 : vector<128x128xf32>
    %c544_33 = arith.constant 544 : index
    %c0_34 = arith.constant 0 : index
    %76 = vector.load %arg3[%c544_33, %c0_34] : memref<864x128xbf16, #tpu.memory_space<vmem>>, vector<128x128xbf16>
    %77 = arith.truncf %75 : vector<128x128xf32> to vector<128x128xbf16>
    %cst_35 = arith.constant dense<0.000000e+00> : vector<128x128xf32>
    %78 = tpu.matmul %77, %76, %cst_35 {dimension_numbers = #tpu.dot_dimension_numbers<[1], [0], [0], [1], [0, 0, 1, 1], [], []>} : vector<128x128xbf16>, vector<128x128xbf16>, vector<128x128xf32> -> vector<128x128xf32>
    %79 = vector.extract_strided_slice %78 {offsets = [0, 0], sizes = [128, 64], strides = [1, 1]} : vector<128x128xf32> to vector<128x64xf32>
    %80 = vector.extract_strided_slice %12 {offsets = [0, 0], sizes = [128, 64], strides = [1, 1]} : vector<128x128xf32> to vector<128x64xf32>
    %81 = arith.addf %79, %80 : vector<128x64xf32>
    %82 = vector.broadcast %0 : vector<1x64xf32> to vector<128x64xf32>
    %83 = arith.addf %81, %82 : vector<128x64xf32>
    %84 = arith.negf %83 : vector<128x64xf32>
    %85 = math.exp %84 : vector<128x64xf32>
    %cst_36 = arith.constant 1.000000e+00 : f32
    %86 = vector.broadcast %cst_36 : f32 to vector<128x64xf32>
    %87 = arith.addf %86, %85 : vector<128x64xf32>
    %88 = arith.divf %86, %87 : vector<128x64xf32>
    %89 = vector.extract_strided_slice %88 {offsets = [0, 0], sizes = [128, 32], strides = [1, 1]} : vector<128x64xf32> to vector<128x32xf32>
    %90 = vector.extract_strided_slice %88 {offsets = [0, 32], sizes = [128, 32], strides = [1, 1]} : vector<128x64xf32> to vector<128x32xf32>
    %91 = vector.extract_strided_slice %78 {offsets = [0, 64], sizes = [128, 32], strides = [1, 1]} : vector<128x128xf32> to vector<128x32xf32>
    %92 = vector.broadcast %1 : vector<1x32xf32> to vector<128x32xf32>
    %93 = arith.addf %91, %92 : vector<128x32xf32>
    %94 = vector.extract_strided_slice %12 {offsets = [0, 64], sizes = [128, 32], strides = [1, 1]} : vector<128x128xf32> to vector<128x32xf32>
    %95 = vector.broadcast %2 : vector<1x32xf32> to vector<128x32xf32>
    %96 = arith.addf %94, %95 : vector<128x32xf32>
    %97 = arith.mulf %89, %96 : vector<128x32xf32>
    %98 = arith.addf %93, %97 : vector<128x32xf32>
    %99 = math.tanh %98 : vector<128x32xf32>
    %cst_37 = arith.constant 1.000000e+00 : f32
    %100 = vector.broadcast %cst_37 : f32 to vector<128x32xf32>
    %101 = arith.subf %100, %90 : vector<128x32xf32>
    %102 = arith.mulf %101, %99 : vector<128x32xf32>
    %103 = arith.mulf %90, %9 : vector<128x32xf32>
    %104 = arith.addf %102, %103 : vector<128x32xf32>
    %c832 = arith.constant 832 : index
    %c0_38 = arith.constant 0 : index
    %105 = vector.load %arg3[%c832, %c0_38] : memref<864x128xbf16, #tpu.memory_space<vmem>>, vector<32x128xbf16>
    %106 = arith.truncf %104 : vector<128x32xf32> to vector<128x32xbf16>
    %cst_39 = arith.constant dense<0.000000e+00> : vector<128x128xf32>
    %107 = tpu.matmul %106, %105, %cst_39 {dimension_numbers = #tpu.dot_dimension_numbers<[1], [0], [0], [1], [0, 0, 1, 1], [], []>} : vector<128x32xbf16>, vector<32x128xbf16>, vector<128x128xf32> -> vector<128x128xf32>
    %c7 = arith.constant 7 : index
    %c0_40 = arith.constant 0 : index
    %108 = vector.load %arg4[%c7, %c0_40] : memref<8x128xf32, #tpu.memory_space<vmem>>, vector<1x128xf32>
    %109 = vector.broadcast %108 : vector<1x128xf32> to vector<128x128xf32>
    %110 = arith.addf %107, %109 : vector<128x128xf32>
    %111 = vector.extract_strided_slice %110 {offsets = [0, 0], sizes = [128, 8], strides = [1, 1]} : vector<128x128xf32> to vector<128x8xf32>
    %cst_41 = arith.constant dense<0xFF800000> : vector<128xf32>
    %112 = vector.multi_reduction <maximumf>, %111, %cst_41 [1] : vector<128x8xf32> to vector<128xf32>
    %113 = vector.shape_cast %112 : vector<128xf32> to vector<128x1xf32>
    %114 = vector.broadcast %113 : vector<128x1xf32> to vector<128x8xf32>
    %115 = arith.subf %111, %114 : vector<128x8xf32>
    %116 = math.exp %115 : vector<128x8xf32>
    %cst_42 = arith.constant dense<0.000000e+00> : vector<128xf32>
    %117 = vector.multi_reduction <add>, %116, %cst_42 [1] : vector<128x8xf32> to vector<128xf32>
    %118 = vector.shape_cast %117 : vector<128xf32> to vector<128x1xf32>
    %119 = math.log %118 : vector<128x1xf32>
    %120 = arith.addf %113, %119 : vector<128x1xf32>
    %121 = vector.broadcast %120 : vector<128x1xf32> to vector<128x128xf32>
    %122 = arith.subf %110, %121 : vector<128x128xf32>
    %c0_43 = arith.constant 0 : index
    %c0_44 = arith.constant 0 : index
    %123 = vector.load %arg5[%c0_43, %c0_44] : memref<128x128xf32, #tpu.memory_space<vmem>>, vector<128x128xf32>
    tpu.vector_store %arg5[%c0_43, %c0_44], %122 {strides = array<i32>} : memref<128x128xf32, #tpu.memory_space<vmem>>, vector<128x128xf32>,
    return
  }
  func.func @transform_0(%arg0: i32) -> (i32, i32) {
    %c0_i32 = arith.constant 0 : i32
    %c0_i32_0 = arith.constant 0 : i32
    return %arg0, %c0_i32 : i32, i32
  }
  func.func @transform_1(%arg0: i32) -> (i32, i32) {
    %c0_i32 = arith.constant 0 : i32
    %c0_i32_0 = arith.constant 0 : i32
    return %arg0, %c0_i32 : i32, i32
  }
  func.func @transform_2(%arg0: i32) -> (i32, i32) {
    %c0_i32 = arith.constant 0 : i32
    %c0_i32_0 = arith.constant 0 : i32
    %c0_i32_1 = arith.constant 0 : i32
    return %c0_i32, %c0_i32_0 : i32, i32
  }
  func.func @transform_3(%arg0: i32) -> (i32, i32) {
    %c0_i32 = arith.constant 0 : i32
    %c0_i32_0 = arith.constant 0 : i32
    %c0_i32_1 = arith.constant 0 : i32
    return %c0_i32, %c0_i32_0 : i32, i32
  }
  func.func @transform_4(%arg0: i32) -> (i32, i32) {
    %c0_i32 = arith.constant 0 : i32
    %c0_i32_0 = arith.constant 0 : i32
    return %arg0, %c0_i32 : i32, i32
  }
}

</mosaic_0001>

<llo_original>
// kernel: tpu_custom_call.1
$region0: #{tpu_custom_call.1}
  #allocation0 [shape = 'u32[]', space=smem, size = 0x4, offset = 0x4, fixed_abs, tag = 'smem constant byte address 0x4 - core index']
  #allocation1 [shape = 'u32[144,128]{1,0:T(1,128)}', space=vmem, size = 0x12000, scoped, tag = 'internal scratch']
  %s0 = inlined_call_operand.vmem [shape: bf16[512,32], index: 0, kind: input, shape index: {}]
  %s1 = inlined_call_operand.hbm [shape: bf16[1024,128], index: 1, kind: input, shape index: {}]
  %s2 = inlined_call_operand.hbm [shape: bf16[864,128], index: 2, kind: input, shape index: {}]
  %s3 = inlined_call_operand.vmem [shape: f32[8,128], index: 3, kind: input, shape index: {}]
  %s4 = inlined_call_operand.hbm [shape: f32[512,128], index: 4, kind: output, shape index: {}]
  %s5 = sld [smem:[#allocation0]]
  $region57: #{tpu_custom_call.1} parent=0
    _
  %s7 = ssub.s32 1, %s5
  %s8 = scalar_select 0, %s7, %s5
  $region1: #{tpu_custom_call.1} parent=0
    #allocation2 [shape = 'u8[131072]{0}', space=vmem, size = 0x20000, scoped, tag = 'input window, operand 1']
    #allocation3 [shape = 's32[2]{0}', space=sflag, size = 0x8, scoped, tag = 'scoped memory for tpu_custom_call.1']
    #allocation4 [shape = 's32[2]{0}', space=sflag, size = 0x8, scoped, tag = 'scoped memory for tpu_custom_call.1']
    #allocation5 [shape = 'u8[221184]{0}', space=vmem, size = 0x36000, scoped, tag = 'input window, operand 2, single buffered']
    #allocation6 [shape = 's32[1]{0}', space=sflag, size = 0x4, scoped, tag = 'scoped memory for tpu_custom_call.1']
    #allocation7 [shape = 'u8[131072]{0}', space=vmem, size = 0x20000, scoped, tag = 'output window, operand 0']
    %9 = vsyncpa [#allocation3], 0
    %s10 = scalar_lea.sflag [#allocation3], 1
    %11 = vsyncpa %s10, 0
    %12 = vsyncpa [#allocation6], 0
    %13 = vsyncpa [#allocation4], 0
    %s14 = scalar_lea.sflag [#allocation4], 1
    %15 = vsyncpa %s14, 0
    loop: start=0, step=1, limit=6
    $region2: #{tpu_custom_call.1} parent=1 // loop_pre_header
      _
    $region3: #{tpu_custom_call.1} parent=1 // loop_header
      %s17 = sphi 0, %s21
      %p18 = scmp.ge.s32.totalorder %s17, 6
      %s27 = sphi 0, %s29
      %s30 = sphi 0, %s27
      %s31 = sphi 0, %s30
      %s47 = sphi 0, %s31
      %s53 = sphi 0, %s55
      %s56 = sphi 0, %s53
      %s57 = sphi 0, %s56
      %s73 = sphi 0, %s57
      %s77 = sphi 0, %s77
      %s79 = sphi 0, %s77
      %s80 = sphi 0, %s79
      %s94 = sphi 0, %s80
      %s98 = sphi 0, %s98
      %s100 = sphi 0, %s98
      %s101 = sphi 0, %s100
      %s115 = sphi 0, %s101
      %s121 = sphi 0, %s123
      %s124 = sphi 0, %s121
      %s125 = sphi 0, %s124
      %s141 = sphi 0, %s125
    $region4: #{tpu_custom_call.1} parent=1 // loop_header_branch
      %20 = sbr.rel (%p18) target = $region8
    $region5: #{tpu_custom_call.1} parent=1 // loop_body
      %s22 = ssub.s32 %s17, 1
      %s23 = ssub.s32 %s17, 2
      %s24 = sadd.s32 %s17, 1
      %s25 = ssub.s32 %s17, %s24
      %p26 = scmp.eq.s32.totalorder %s25, 0
      %s28 = sadd.s32 %s27, 1
      %s29 = scalar_select %p26, %s27, %s28
      %p32 = pneg %p26
      %p33 = scmp.eq.s32.totalorder %s17, 3
      %p34 = por %p32, %p33
      %p35 = scmp.ne.s32.totalorder %s27, %s30
      %p36 = scmp.eq.s32.totalorder %s17, 0
      %p37 = por %p35, %p36
      %p38 = scmp.ne.s32.totalorder %s27, %s30
      %p39 = scmp.eq.s32.totalorder %s22, 3
      %p40 = por %p38, %p39
      %p41 = scmp.ne.s32.totalorder %s30, %s31
      %p42 = scmp.eq.s32.totalorder %s22, 0
      %p43 = por %p41, %p42
      %p44 = scmp.ne.s32.totalorder %s30, %s31
      %p45 = scmp.eq.s32.totalorder %s23, 3
      %p46 = por %p44, %p45
      %p48 = scmp.ne.s32.totalorder %s31, %s47
      %p49 = scmp.eq.s32.totalorder %s23, 0
      %p50 = por %p48, %p49
      %s51 = ssub.s32 %s17, %s24
      %p52 = scmp.eq.s32.totalorder %s51, 0
      %s54 = sadd.s32 %s53, 1
      %s55 = scalar_select %p52, %s53, %s54
      %p58 = pneg %p52
      %p59 = scmp.eq.s32.totalorder %s17, 3
      %p60 = por %p58, %p59
      %p61 = scmp.ne.s32.totalorder %s53, %s56
      %p62 = scmp.eq.s32.totalorder %s17, 0
      %p63 = por %p61, %p62
      %p64 = scmp.ne.s32.totalorder %s53, %s56
      %p65 = scmp.eq.s32.totalorder %s22, 3
      %p66 = por %p64, %p65
      %p67 = scmp.ne.s32.totalorder %s56, %s57
      %p68 = scmp.eq.s32.totalorder %s22, 0
      %p69 = por %p67, %p68
      %p70 = scmp.ne.s32.totalorder %s56, %s57
      %p71 = scmp.eq.s32.totalorder %s23, 3
      %p72 = por %p70, %p71
      %p74 = scmp.ne.s32.totalorder %s57, %s73
      %p75 = scmp.eq.s32.totalorder %s23, 0
      %p76 = por %p74, %p75
      %s78 = sadd.s32 %s77, 1
      %p81 = scmp.eq.s32.totalorder %s17, 3
      %p82 = scmp.ne.s32.totalorder %s77, %s79
      %p83 = scmp.eq.s32.totalorder %s17, 0
      %p84 = por %p82, %p83
      %p85 = scmp.ne.s32.totalorder %s77, %s79
      %p86 = scmp.eq.s32.totalorder %s22, 3
      %p87 = por %p85, %p86
      %p88 = scmp.ne.s32.totalorder %s79, %s80
      %p89 = scmp.eq.s32.totalorder %s22, 0
      %p90 = por %p88, %p89
      %p91 = scmp.ne.s32.totalorder %s79, %s80
      %p92 = scmp.eq.s32.totalorder %s23, 3
      %p93 = por %p91, %p92
      %p95 = scmp.ne.s32.totalorder %s80, %s94
      %p96 = scmp.eq.s32.totalorder %s23, 0
      %p97 = por %p95, %p96
      %s99 = sadd.s32 %s98, 1
      %p102 = scmp.eq.s32.totalorder %s17, 3
      %p103 = scmp.ne.s32.totalorder %s98, %s100
      %p104 = scmp.eq.s32.totalorder %s17, 0
      %p105 = por %p103, %p104
      %p106 = scmp.ne.s32.totalorder %s98, %s100
      %p107 = scmp.eq.s32.totalorder %s22, 3
      %p108 = por %p106, %p107
      %p109 = scmp.ne.s32.totalorder %s100, %s101
      %p110 = scmp.eq.s32.totalorder %s22, 0
      %p111 = por %p109, %p110
      %p112 = scmp.ne.s32.totalorder %s100, %s101
      %p113 = scmp.eq.s32.totalorder %s23, 3
      %p114 = por %p112, %p113
      %p116 = scmp.ne.s32.totalorder %s101, %s115
      %p117 = scmp.eq.s32.totalorder %s23, 0
      %p118 = por %p116, %p117
      %s119 = ssub.s32 %s17, %s24
      %p120 = scmp.eq.s32.totalorder %s119, 0
      %s122 = sadd.s32 %s121, 1
      %s123 = scalar_select %p120, %s121, %s122
      %p126 = pneg %p120
      %p127 = scmp.eq.s32.totalorder %s17, 3
      %p128 = por %p126, %p127
      %p129 = scmp.ne.s32.totalorder %s121, %s124
      %p130 = scmp.eq.s32.totalorder %s17, 0
      %p131 = por %p129, %p130
      %p132 = scmp.ne.s32.totalorder %s121, %s124
      %p133 = scmp.eq.s32.totalorder %s22, 3
      %p134 = por %p132, %p133
      %p135 = scmp.ne.s32.totalorder %s124, %s125
      %p136 = scmp.eq.s32.totalorder %s22, 0
      %p137 = por %p135, %p136
      %p138 = scmp.ne.s32.totalorder %s124, %s125
      %p139 = scmp.eq.s32.totalorder %s23, 3
      %p140 = por %p138, %p139
      %p142 = scmp.ne.s32.totalorder %s125, %s141
      %p143 = scmp.eq.s32.totalorder %s23, 0
      %p144 = por %p142, %p143
      %p145 = scmp.le.s32.totalorder 1, %s17
      %p146 = scmp.lt.s32.totalorder %s17, 5
      %p147 = pnand %p145, %p146
      %p148 = pneg %p147
      // Predicated region
      $region9: #{tpu_custom_call.1} parent=5 // pred_check
        _
      $region10: #{tpu_custom_call.1} parent=5 // pred_check_branch
        %150 = sbr.rel (%p147) target = $region12
      $region11: #{tpu_custom_call.1} parent=5 // pred_region
        %s151 = ssub.s32 %s17, 1
        // Predicated region
        $region13: #{tpu_custom_call.1} parent=11 // pred_check
          %p152 = pneg %p90
        $region14: #{tpu_custom_call.1} parent=11 // pred_check_branch
          %154 = sbr.rel (%p152) target = $region16
        $region15: #{tpu_custom_call.1} parent=11 // pred_region
          %s156 = ssub.s32 6912, 6912
          %157 = vsyncadd [#allocation6], %s156
          %s158 = sshll.u32 [#allocation5], 4
          %s159 = int_to_ptr.vmem [resolvable:$true] %s158
          %164 = dma.hbm_to_vmem [thread:$0]  %s2, 6912, %s159, [#allocation6], 64, 64, 4
        $region16: #{tpu_custom_call.1} parent=11 // pred_fallthru
          _
        // Predicated region
        $region17: #{tpu_custom_call.1} parent=11 // pred_check
          %p165 = pneg %p111
        $region18: #{tpu_custom_call.1} parent=11 // pred_check_branch
          %167 = sbr.rel (%p165) target = $region20
        $region19: #{tpu_custom_call.1} parent=11 // pred_region
          _
        $region20: #{tpu_custom_call.1} parent=11 // pred_fallthru
          _
      $region12: #{tpu_custom_call.1} parent=5 // pred_fallthru
        _
      %p168 = scmp.lt.s32.totalorder %s17, 4
      // Predicated region
      $region21: #{tpu_custom_call.1} parent=5 // pred_check
        %p169 = pneg %p168
      $region22: #{tpu_custom_call.1} parent=5 // pred_check_branch
        %171 = sbr.rel (%p169) target = $region24
      $region23: #{tpu_custom_call.1} parent=5 // pred_region
        // Predicated region
        $region25: #{tpu_custom_call.1} parent=23 // pred_check
          %p172 = pneg %p37
        $region26: #{tpu_custom_call.1} parent=23 // pred_check_branch
          %174 = sbr.rel (%p172) target = $region28
        $region27: #{tpu_custom_call.1} parent=23 // pred_region
          %s175 = smul.u32 16, %s17
          %p176 = scmp.lt.s32.totalorder %s175, 63
          %s177 = scalar_select %p176, %s175, 63
          %s178 = smul.addr %s177, 4
          %s179 = scalar_lea.vmem %s0, %s178
          %s180 = smul.u32 16, %s17
        $region28: #{tpu_custom_call.1} parent=23 // pred_fallthru
          _
        // Predicated region
        $region29: #{tpu_custom_call.1} parent=23 // pred_check
          %p181 = pneg %p63
        $region30: #{tpu_custom_call.1} parent=23 // pred_check_branch
          %183 = sbr.rel (%p181) target = $region32
        $region31: #{tpu_custom_call.1} parent=23 // pred_region
          %s184 = sand.u32 %s53, 1
          %s185 = scalar_lea.sflag [#allocation3], %s184
          %s186 = sand.u32 %s53, 1
          %s187 = smul.addr %s186, 128
          %s188 = scalar_lea.vmem [#allocation2], %s187
          %s189 = smul.u32 32, %s17
          %s191 = ssub.s32 2048, 2048
          %192 = vsyncadd %s185, %s191
          %s193 = smul.addr %s189, 64
          %s194 = scalar_lea.hbm %s1, %s193
          %s195 = sshll.u32 %s188, 4
          %s196 = int_to_ptr.vmem [resolvable:$true] %s195
          %201 = dma.hbm_to_vmem [thread:$0]  %s194, 2048, %s196, %s185, 64, 64, 4
        $region32: #{tpu_custom_call.1} parent=23 // pred_fallthru
          _
      $region24: #{tpu_custom_call.1} parent=5 // pred_fallthru
        _
      %p202 = scmp.le.s32.totalorder 1, %s17
      %p203 = scmp.lt.s32.totalorder %s17, 5
      %p204 = pnand %p202, %p203
      %p205 = pneg %p204
      // Predicated region
      $region33: #{tpu_custom_call.1} parent=5 // pred_check
        _
      $region34: #{tpu_custom_call.1} parent=5 // pred_check_branch
        %207 = sbr.rel (%p204) target = $region36
      $region35: #{tpu_custom_call.1} parent=5 // pred_region
        %s208 = ssub.s32 %s17, 1
        %s209 = sand.u32 %s56, 1
        %s210 = scalar_lea.sflag [#allocation3], %s209
        %s211 = sand.u32 %s56, 1
        %s212 = smul.addr %s211, 128
        %s213 = scalar_lea.vmem [#allocation2], %s212
        // Predicated region
        $region37: #{tpu_custom_call.1} parent=35 // pred_check
          %p214 = pneg %p69
        $region38: #{tpu_custom_call.1} parent=35 // pred_check_branch
          %216 = sbr.rel (%p214) target = $region40
        $region39: #{tpu_custom_call.1} parent=35 // pred_region
          %217 = dma.done %s210, 2048
        $region40: #{tpu_custom_call.1} parent=35 // pred_fallthru
          _
        // Predicated region
        $region41: #{tpu_custom_call.1} parent=35 // pred_check
          %p218 = pneg %p90
        $region42: #{tpu_custom_call.1} parent=35 // pred_check_branch
          %220 = sbr.rel (%p218) target = $region44
        $region43: #{tpu_custom_call.1} parent=35 // pred_region
          %221 = dma.done [#allocation6], 6912
        $region44: #{tpu_custom_call.1} parent=35 // pred_fallthru
          _
        %s222 = smul.u32 16, %s22
        %p223 = scmp.lt.s32.totalorder %s222, 63
        %s224 = scalar_select %p223, %s222, 63
        %s225 = smul.addr %s224, 4
        %s226 = scalar_lea.vmem %s0, %s225
        %p227 = pneg %p43
        %p228 = pneg %p40
        %s229 = sand.u32 %s56, 1
        %s230 = scalar_lea.sflag [#allocation3], %s229
        %s231 = sand.u32 %s56, 1
        %s232 = smul.addr %s231, 128
        %s233 = scalar_lea.vmem [#allocation2], %s232
        %p234 = pneg %p69
        %p235 = pneg %p66
        %p236 = pneg %p90
        %p237 = pneg %p87
        %p238 = pneg %p111
        %p239 = pneg %p108
        %p240 = pneg %p137
        %p241 = pneg %p134
        %s242 = sand.u32 %s124, 1
        %s243 = scalar_lea.sflag [#allocation4], %s242
        %s244 = sand.u32 %s124, 1
        %s245 = smul.addr %s244, 128
        %s246 = scalar_lea.vmem [#allocation7], %s245
        %s247 = smul.u32 16, %s22
        %p248 = scmp.lt.s32.totalorder %s247, 63
        %s249 = scalar_select %p248, %s247, 63
        %s250 = smul.addr %s249, 4
        %s251 = scalar_lea.vmem %s0, %s250
        %s252 = smul.u32 16, %s22
        %s253 = smul.u32 32, %s22
        %s254 = smul.u32 16, %s22
        %v256 = vld [vmem:[%s3 + $0x4] sm:$0x1]
        %v257 = vld [vmem:[%s3 + $0x5] sm:$0x1]
        %v258 = vld [vmem:[%s3 + $0x6] sm:$0x1]
        %v259 = vld [vmem:[%s251] sm:$0xf]
        %v260 = vld [vmem:[%s251 + $0x4] sm:$0xf]
        %v261 = vld [vmem:[%s251 + $0x8] sm:$0xf]
        %v262 = vld [vmem:[%s251 + $0xc] sm:$0xf]
        %v263 = vld [vmem:[%s251 + $0x10] sm:$0xf]
        %v264 = vld [vmem:[%s251 + $0x14] sm:$0xf]
        %v265 = vld [vmem:[%s251 + $0x18] sm:$0xf]
        %v266 = vld [vmem:[%s251 + $0x1c] sm:$0xf]
        %v267 = vld [vmem:[%s251 + $0x20] sm:$0xf]
        %v268 = vld [vmem:[%s251 + $0x24] sm:$0xf]
        %v269 = vld [vmem:[%s251 + $0x28] sm:$0xf]
        %v270 = vld [vmem:[%s251 + $0x2c] sm:$0xf]
        %v271 = vld [vmem:[%s251 + $0x30] sm:$0xf]
        %v272 = vld [vmem:[%s251 + $0x34] sm:$0xf]
        %v273 = vld [vmem:[%s251 + $0x38] sm:$0xf]
        %v274 = vld [vmem:[%s251 + $0x3c] sm:$0xf]
        %v275 = vld [vmem:[#allocation5] sm:$0xf]
        %v276 = vld [vmem:[#allocation5 + $0x4] sm:$0xf]
        %v277 = vld [vmem:[#allocation5 + $0x8] sm:$0xf]
        %v278 = vld [vmem:[#allocation5 + $0xc] sm:$0xf]
        %v279 = vld [vmem:[%s3] sm:$0x1]
        %v280 = vlaneseq
        %v281 = vshrl.u32 %v280, 7
        %v282 = vsub.s32 0, %v281
        %v283 = vrot.slane %v279, %v282
        %v300 = vunpack.c.l.b16 %v259
        %v301 = vunpack.c.l.b16 %v260
        %v302 = vunpack.c.l.b16 %v261
        %v303 = vunpack.c.l.b16 %v262
        %v304 = vunpack.c.l.b16 %v263
        %v305 = vunpack.c.l.b16 %v264
        %v306 = vunpack.c.l.b16 %v265
        %v307 = vunpack.c.l.b16 %v266
        %v308 = vunpack.c.l.b16 %v267
        %v309 = vunpack.c.l.b16 %v268
        %v310 = vunpack.c.l.b16 %v269
        %v311 = vunpack.c.l.b16 %v270
        %v312 = vunpack.c.l.b16 %v271
        %v313 = vunpack.c.l.b16 %v272
        %v314 = vunpack.c.l.b16 %v273
        %v315 = vunpack.c.l.b16 %v274
        %v316 = vpack.c.b16 %v301, %v300
        %v317 = vpack.c.b16 %v303, %v302
        %v318 = vpack.c.b16 %v305, %v304
        %v319 = vpack.c.b16 %v307, %v306
        %v320 = vpack.c.b16 %v309, %v308
        %v321 = vpack.c.b16 %v311, %v310
        %v322 = vpack.c.b16 %v313, %v312
        %v323 = vpack.c.b16 %v315, %v314
        %v328 = vunpack.c.l.b16 %v275
        %v329 = vunpack.c.l.b16 %v276
        %v330 = vunpack.c.l.b16 %v277
        %v331 = vunpack.c.l.b16 %v278
        %v332 = vpack.c.b16 %v329, %v328
        %v333 = vpack.c.b16 %v331, %v330
        %vm336 = vcmask 261120
        %v338 = vsel %vm336, %v316, 0
        %v341 = vsel %vm336, %v317, 0
        %v344 = vsel %vm336, %v318, 0
        %v347 = vsel %vm336, %v319, 0
        %v350 = vsel %vm336, %v320, 0
        %v353 = vsel %vm336, %v321, 0
        %v356 = vsel %vm336, %v322, 0
        %v359 = vsel %vm336, %v323, 0
        %361 = vmatprep.subr.bf16.mxu0 0
        %362 = vmatpush1.bf16.msra.mxu0 0
        %363 = vmatprep.subr.bf16.mxu0 0
        %364 = vmatpush1.bf16.msra.mxu0 0
        %365 = vmatprep.subr.bf16.mxu0 0
        %366 = vmatpush1.bf16.msra.mxu0 0
        %367 = vmatprep.subr.bf16.mxu0 0
        %368 = vmatpush1.bf16.msra.mxu0 0
        %369 = vmatprep.subr.bf16.mxu0 0
        %370 = vmatpush1.bf16.msra.mxu0 0
        %371 = vmatprep.subr.bf16.mxu0 0
        %372 = vmatpush1.bf16.msra.mxu0 0
        %373 = vmatprep.subr.bf16.mxu0 0
        %374 = vmatpush1.bf16.msra.mxu0 %v333
        %375 = vmatprep.subr.bf16.mxu0 0
        %376 = vmatpush1.bf16.msra.mxu0 %v332
        %377 = vmatprep.subr.bf16.mxu0 0
        %378 = vmatpush2.bf16.msra.mxu0 0
        %379 = vmatprep.subr.bf16.mxu0 0
        %380 = vmatpush2.bf16.msra.mxu0 0
        %381 = vmatprep.subr.bf16.mxu0 0
        %382 = vmatpush2.bf16.msra.mxu0 0
        %383 = vmatprep.subr.bf16.mxu0 0
        %384 = vmatpush2.bf16.msra.mxu0 0
        %385 = vmatprep.subr.bf16.mxu0 0
        %386 = vmatpush2.bf16.msra.mxu0 0
        %387 = vmatprep.subr.bf16.mxu0 0
        %388 = vmatpush2.bf16.msra.mxu0 0
        %389 = vmatprep.subr.bf16.mxu0 0
        %390 = vmatpush2.bf16.msra.mxu0 0
        %391 = vmatprep.subr.bf16.mxu0 0
        %392 = vmatpush2.bf16.msra.mxu0 0
        %393 = vmatprep.mubr.bf16.mxu0 0
        %394 = vmatmul.mubr.bf16.gmra.mxu0 %v338
        %v395 = vpop.f32.mrf.mxu0
        %v396 = vadd.f32 %v283, %v395
        %v397 = vpop.f32.mrf.mxu0
        %v398 = vpop.f32.mrf.mxu0
        %v399 = vadd.f32 %v283, %v398
        %v400 = vpop.f32.mrf.mxu0
        %401 = vmatprep.mubr.bf16.mxu0 0
        %402 = vmatmul.mubr.bf16.gmra.mxu0 %v341
        %v403 = vpop.f32.mrf.mxu0
        %v404 = vadd.f32 %v283, %v403
        %v405 = vpop.f32.mrf.mxu0
        %v406 = vpop.f32.mrf.mxu0
        %v407 = vadd.f32 %v283, %v406
        %v408 = vpop.f32.mrf.mxu0
        %409 = vmatprep.mubr.bf16.mxu0 0
        %410 = vmatmul.mubr.bf16.gmra.mxu0 %v344
        %v411 = vpop.f32.mrf.mxu0
        %v412 = vadd.f32 %v283, %v411
        %v413 = vpop.f32.mrf.mxu0
        %v414 = vpop.f32.mrf.mxu0
        %v415 = vadd.f32 %v283, %v414
        %v416 = vpop.f32.mrf.mxu0
        %417 = vmatprep.mubr.bf16.mxu0 0
        %418 = vmatmul.mubr.bf16.gmra.mxu0 %v347
        %v419 = vpop.f32.mrf.mxu0
        %v420 = vadd.f32 %v283, %v419
        %v421 = vpop.f32.mrf.mxu0
        %v422 = vpop.f32.mrf.mxu0
        %v423 = vadd.f32 %v283, %v422
        %v424 = vpop.f32.mrf.mxu0
        %425 = vmatprep.mubr.bf16.mxu0 0
        %426 = vmatmul.mubr.bf16.gmra.mxu0 %v350
        %v427 = vpop.f32.mrf.mxu0
        %v428 = vadd.f32 %v283, %v427
        %v429 = vpop.f32.mrf.mxu0
        %v430 = vpop.f32.mrf.mxu0
        %v431 = vadd.f32 %v283, %v430
        %v432 = vpop.f32.mrf.mxu0
        %433 = vmatprep.mubr.bf16.mxu0 0
        %434 = vmatmul.mubr.bf16.gmra.mxu0 %v353
        %v435 = vpop.f32.mrf.mxu0
        %v436 = vadd.f32 %v283, %v435
        %v437 = vpop.f32.mrf.mxu0
        %v438 = vpop.f32.mrf.mxu0
        %v439 = vadd.f32 %v283, %v438
        %v440 = vpop.f32.mrf.mxu0
        %441 = vmatprep.mubr.bf16.mxu0 0
        %442 = vmatmul.mubr.bf16.gmra.mxu0 %v356
        %v443 = vpop.f32.mrf.mxu0
        %v444 = vadd.f32 %v283, %v443
        %v445 = vpop.f32.mrf.mxu0
        %v446 = vpop.f32.mrf.mxu0
        %v447 = vadd.f32 %v283, %v446
        %v448 = vpop.f32.mrf.mxu0
        %449 = vmatprep.mubr.bf16.mxu0 0
        %450 = vmatmul.mubr.bf16.gmra.mxu0 %v359
        %v451 = vpop.f32.mrf.mxu0
        %v452 = vadd.f32 %v283, %v451
        %v453 = vpop.f32.mrf.mxu0
        %v454 = vpop.f32.mrf.mxu0
        %v455 = vadd.f32 %v283, %v454
        %v456 = vpop.f32.mrf.mxu0
        %457 = vdwg.mxu0
        %v458 = vld [vmem:[#allocation5 + $0x150] sm:$0xf]
        %v459 = vld [vmem:[#allocation5 + $0x154] sm:$0xf]
        %v460 = vld [vmem:[#allocation5 + $0x158] sm:$0xf]
        %v461 = vld [vmem:[#allocation5 + $0x15c] sm:$0xf]
        %v462 = vld [vmem:[#allocation5 + $0x160] sm:$0xf]
        %v463 = vld [vmem:[#allocation5 + $0x164] sm:$0xf]
        %v464 = vld [vmem:[#allocation5 + $0x168] sm:$0xf]
        %v465 = vld [vmem:[#allocation5 + $0x16c] sm:$0xf]
        %v466 = vld [vmem:[#allocation5 + $0x170] sm:$0xf]
        %v467 = vld [vmem:[#allocation5 + $0x174] sm:$0xf]
        %v468 = vld [vmem:[#allocation5 + $0x178] sm:$0xf]
        %v469 = vld [vmem:[#allocation5 + $0x17c] sm:$0xf]
        %v470 = vld [vmem:[#allocation5 + $0x180] sm:$0xf]
        %v471 = vld [vmem:[#allocation5 + $0x184] sm:$0xf]
        %v472 = vld [vmem:[#allocation5 + $0x188] sm:$0xf]
        %v473 = vld [vmem:[#allocation5 + $0x18c] sm:$0xf]
        %v474 = vpack.c.bf16 %v399, %v396
        %v475 = vpack.c.bf16 %v407, %v404
        %v476 = vpack.c.bf16 %v415, %v412
        %v477 = vpack.c.bf16 %v423, %v420
        %v478 = vpack.c.bf16 %v431, %v428
        %v479 = vpack.c.bf16 %v439, %v436
        %v480 = vpack.c.bf16 %v447, %v444
        %v481 = vpack.c.bf16 %v455, %v452
        %v498 = vunpack.c.l.b16 %v458
        %v499 = vunpack.c.l.b16 %v459
        %v500 = vunpack.c.l.b16 %v460
        %v501 = vunpack.c.l.b16 %v461
        %v502 = vunpack.c.l.b16 %v462
        %v503 = vunpack.c.l.b16 %v463
        %v504 = vunpack.c.l.b16 %v464
        %v505 = vunpack.c.l.b16 %v465
        %v506 = vunpack.c.l.b16 %v466
        %v507 = vunpack.c.l.b16 %v467
        %v508 = vunpack.c.l.b16 %v468
        %v509 = vunpack.c.l.b16 %v469
        %v510 = vunpack.c.l.b16 %v470
        %v511 = vunpack.c.l.b16 %v471
        %v512 = vunpack.c.l.b16 %v472
        %v513 = vunpack.c.l.b16 %v473
        %v514 = vpack.c.b16 %v499, %v498
        %v515 = vpack.c.b16 %v501, %v500
        %v516 = vpack.c.b16 %v503, %v502
        %v517 = vpack.c.b16 %v505, %v504
        %v518 = vpack.c.b16 %v507, %v506
        %v519 = vpack.c.b16 %v509, %v508
        %v520 = vpack.c.b16 %v511, %v510
        %v521 = vpack.c.b16 %v513, %v512
        %530 = vmatprep.subr.bf16.mxu0 0
        %531 = vmatpush1.bf16.msra.mxu0 %v521
        %532 = vmatprep.subr.bf16.mxu0 0
        %533 = vmatpush1.bf16.msra.mxu0 %v520
        %534 = vmatprep.subr.bf16.mxu0 0
        %535 = vmatpush1.bf16.msra.mxu0 %v519
        %536 = vmatprep.subr.bf16.mxu0 0
        %537 = vmatpush1.bf16.msra.mxu0 %v518
        %538 = vmatprep.subr.bf16.mxu0 0
        %539 = vmatpush1.bf16.msra.mxu0 %v517
        %540 = vmatprep.subr.bf16.mxu0 0
        %541 = vmatpush1.bf16.msra.mxu0 %v516
        %542 = vmatprep.subr.bf16.mxu0 0
        %543 = vmatpush1.bf16.msra.mxu0 %v515
        %544 = vmatprep.subr.bf16.mxu0 0
        %545 = vmatpush1.bf16.msra.mxu0 %v514
        %546 = vmatprep.subr.bf16.mxu0 0
        %547 = vmatpush2.bf16.msra.mxu0 0
        %548 = vmatprep.subr.bf16.mxu0 0
        %549 = vmatpush2.bf16.msra.mxu0 0
        %550 = vmatprep.subr.bf16.mxu0 0
        %551 = vmatpush2.bf16.msra.mxu0 0
        %552 = vmatprep.subr.bf16.mxu0 0
        %553 = vmatpush2.bf16.msra.mxu0 0
        %554 = vmatprep.subr.bf16.mxu0 0
        %555 = vmatpush2.bf16.msra.mxu0 0
        %556 = vmatprep.subr.bf16.mxu0 0
        %557 = vmatpush2.bf16.msra.mxu0 0
        %558 = vmatprep.subr.bf16.mxu0 0
        %559 = vmatpush2.bf16.msra.mxu0 0
        %560 = vmatprep.subr.bf16.mxu0 0
        %561 = vmatpush2.bf16.msra.mxu0 0
        %562 = vmatprep.mubr.bf16.mxu0 0
        %563 = vmatmul.mubr.bf16.gmra.mxu0 %v474
        %v564 = vpop.f32.mrf.mxu0
        %v565 = vadd.f32 0.0, %v564
        %v566 = vpop.f32.mrf.mxu0
        %v567 = vpop.f32.mrf.mxu0
        %v568 = vadd.f32 0.0, %v567
        %v569 = vpop.f32.mrf.mxu0
        %570 = vmatprep.mubr.bf16.mxu0 0
        %571 = vmatmul.mubr.bf16.gmra.mxu0 %v475
        %v572 = vpop.f32.mrf.mxu0
        %v573 = vadd.f32 0.0, %v572
        %v574 = vpop.f32.mrf.mxu0
        %v575 = vpop.f32.mrf.mxu0
        %v576 = vadd.f32 0.0, %v575
        %v577 = vpop.f32.mrf.mxu0
        %578 = vmatprep.mubr.bf16.mxu0 0
        %579 = vmatmul.mubr.bf16.gmra.mxu0 %v476
        %v580 = vpop.f32.mrf.mxu0
        %v581 = vadd.f32 0.0, %v580
        %v582 = vpop.f32.mrf.mxu0
        %v583 = vpop.f32.mrf.mxu0
        %v584 = vadd.f32 0.0, %v583
        %v585 = vpop.f32.mrf.mxu0
        %586 = vmatprep.mubr.bf16.mxu0 0
        %587 = vmatmul.mubr.bf16.gmra.mxu0 %v477
        %v588 = vpop.f32.mrf.mxu0
        %v589 = vadd.f32 0.0, %v588
        %v590 = vpop.f32.mrf.mxu0
        %v591 = vpop.f32.mrf.mxu0
        %v592 = vadd.f32 0.0, %v591
        %v593 = vpop.f32.mrf.mxu0
        %594 = vmatprep.mubr.bf16.mxu0 0
        %595 = vmatmul.mubr.bf16.gmra.mxu0 %v478
        %v596 = vpop.f32.mrf.mxu0
        %v597 = vadd.f32 0.0, %v596
        %v598 = vpop.f32.mrf.mxu0
        %v599 = vpop.f32.mrf.mxu0
        %v600 = vadd.f32 0.0, %v599
        %v601 = vpop.f32.mrf.mxu0
        %602 = vmatprep.mubr.bf16.mxu0 0
        %603 = vmatmul.mubr.bf16.gmra.mxu0 %v479
        %v604 = vpop.f32.mrf.mxu0
        %v605 = vadd.f32 0.0, %v604
        %v606 = vpop.f32.mrf.mxu0
        %v607 = vpop.f32.mrf.mxu0
        %v608 = vadd.f32 0.0, %v607
        %v609 = vpop.f32.mrf.mxu0
        %610 = vmatprep.mubr.bf16.mxu0 0
        %611 = vmatmul.mubr.bf16.gmra.mxu0 %v480
        %v612 = vpop.f32.mrf.mxu0
        %v613 = vadd.f32 0.0, %v612
        %v614 = vpop.f32.mrf.mxu0
        %v615 = vpop.f32.mrf.mxu0
        %v616 = vadd.f32 0.0, %v615
        %v617 = vpop.f32.mrf.mxu0
        %618 = vmatprep.mubr.bf16.mxu0 0
        %619 = vmatmul.mubr.bf16.gmra.mxu0 %v481
        %v620 = vpop.f32.mrf.mxu0
        %v621 = vadd.f32 0.0, %v620
        %v622 = vpop.f32.mrf.mxu0
        %v623 = vpop.f32.mrf.mxu0
        %v624 = vadd.f32 0.0, %v623
        %v625 = vpop.f32.mrf.mxu0
        %626 = vdwg.mxu0
        %v627 = vld [vmem:[%s213] sm:$0xf]
        %v628 = vld [vmem:[%s213 + $0x4] sm:$0xf]
        %v629 = vld [vmem:[%s213 + $0x8] sm:$0xf]
        %v630 = vld [vmem:[%s213 + $0xc] sm:$0xf]
        %v631 = vld [vmem:[%s213 + $0x10] sm:$0xf]
        %v632 = vld [vmem:[%s213 + $0x14] sm:$0xf]
        %v633 = vld [vmem:[%s213 + $0x18] sm:$0xf]
        %v634 = vld [vmem:[%s213 + $0x1c] sm:$0xf]
        %v635 = vld [vmem:[%s213 + $0x20] sm:$0xf]
        %v636 = vld [vmem:[%s213 + $0x24] sm:$0xf]
        %v637 = vld [vmem:[%s213 + $0x28] sm:$0xf]
        %v638 = vld [vmem:[%s213 + $0x2c] sm:$0xf]
        %v639 = vld [vmem:[%s213 + $0x30] sm:$0xf]
        %v640 = vld [vmem:[%s213 + $0x34] sm:$0xf]
        %v641 = vld [vmem:[%s213 + $0x38] sm:$0xf]
        %v642 = vld [vmem:[%s213 + $0x3c] sm:$0xf]
        %v643 = vld [vmem:[%s213 + $0x40] sm:$0xf]
        %v644 = vld [vmem:[%s213 + $0x44] sm:$0xf]
        %v645 = vld [vmem:[%s213 + $0x48] sm:$0xf]
        %v646 = vld [vmem:[%s213 + $0x4c] sm:$0xf]
        %v647 = vld [vmem:[%s213 + $0x50] sm:$0xf]
        %v648 = vld [vmem:[%s213 + $0x54] sm:$0xf]
        %v649 = vld [vmem:[%s213 + $0x58] sm:$0xf]
        %v650 = vld [vmem:[%s213 + $0x5c] sm:$0xf]
        %v651 = vld [vmem:[%s213 + $0x60] sm:$0xf]
        %v652 = vld [vmem:[%s213 + $0x64] sm:$0xf]
        %v653 = vld [vmem:[%s213 + $0x68] sm:$0xf]
        %v654 = vld [vmem:[%s213 + $0x6c] sm:$0xf]
        %v655 = vld [vmem:[%s213 + $0x70] sm:$0xf]
        %v656 = vld [vmem:[%s213 + $0x74] sm:$0xf]
        %v657 = vld [vmem:[%s213 + $0x78] sm:$0xf]
        %v658 = vld [vmem:[%s213 + $0x7c] sm:$0xf]
        %v691 = vunpack.c.l.b16 %v627
        %v692 = vunpack.c.l.b16 %v628
        %v693 = vunpack.c.l.b16 %v629
        %v694 = vunpack.c.l.b16 %v630
        %v695 = vunpack.c.l.b16 %v631
        %v696 = vunpack.c.l.b16 %v632
        %v697 = vunpack.c.l.b16 %v633
        %v698 = vunpack.c.l.b16 %v634
        %v699 = vunpack.c.l.b16 %v635
        %v700 = vunpack.c.l.b16 %v636
        %v701 = vunpack.c.l.b16 %v637
        %v702 = vunpack.c.l.b16 %v638
        %v703 = vunpack.c.l.b16 %v639
        %v704 = vunpack.c.l.b16 %v640
        %v705 = vunpack.c.l.b16 %v641
        %v706 = vunpack.c.l.b16 %v642
        %v707 = vunpack.c.l.b16 %v643
        %v708 = vunpack.c.l.b16 %v644
        %v709 = vunpack.c.l.b16 %v645
        %v710 = vunpack.c.l.b16 %v646
        %v711 = vunpack.c.l.b16 %v647
        %v712 = vunpack.c.l.b16 %v648
        %v713 = vunpack.c.l.b16 %v649
        %v714 = vunpack.c.l.b16 %v650
        %v715 = vunpack.c.l.b16 %v651
        %v716 = vunpack.c.l.b16 %v652
        %v717 = vunpack.c.l.b16 %v653
        %v718 = vunpack.c.l.b16 %v654
        %v719 = vunpack.c.l.b16 %v655
        %v720 = vunpack.c.l.b16 %v656
        %v721 = vunpack.c.l.b16 %v657
        %v722 = vunpack.c.l.b16 %v658
        %v723 = vpack.c.b16 %v692, %v691
        %v724 = vpack.c.b16 %v694, %v693
        %v725 = vpack.c.b16 %v696, %v695
        %v726 = vpack.c.b16 %v698, %v697
        %v727 = vpack.c.b16 %v700, %v699
        %v728 = vpack.c.b16 %v702, %v701
        %v729 = vpack.c.b16 %v704, %v703
        %v730 = vpack.c.b16 %v706, %v705
        %v731 = vpack.c.b16 %v708, %v707
        %v732 = vpack.c.b16 %v710, %v709
        %v733 = vpack.c.b16 %v712, %v711
        %v734 = vpack.c.b16 %v714, %v713
        %v735 = vpack.c.b16 %v716, %v715
        %v736 = vpack.c.b16 %v718, %v717
        %v737 = vpack.c.b16 %v720, %v719
        %v738 = vpack.c.b16 %v722, %v721
        %755 = vmatprep.subr.bf16.mxu0 0
        %756 = vmatpush1.bf16.msra.mxu0 %v481
        %757 = vmatprep.subr.bf16.mxu0 0
        %758 = vmatpush1.bf16.msra.mxu0 %v480
        %759 = vmatprep.subr.bf16.mxu0 0
        %760 = vmatpush1.bf16.msra.mxu0 %v479
        %761 = vmatprep.subr.bf16.mxu0 0
        %762 = vmatpush1.bf16.msra.mxu0 %v478
        %763 = vmatprep.subr.bf16.mxu0 0
        %764 = vmatpush1.bf16.msra.mxu0 %v477
        %765 = vmatprep.subr.bf16.mxu0 0
        %766 = vmatpush1.bf16.msra.mxu0 %v476
        %767 = vmatprep.subr.bf16.mxu0 0
        %768 = vmatpush1.bf16.msra.mxu0 %v475
        %769 = vmatprep.subr.bf16.mxu0 0
        %770 = vmatpush1.bf16.msra.mxu0 %v474
        %771 = vmatprep.subr.bf16.mxu0 0
        %772 = vmatpush2.bf16.msra.mxu0 0
        %773 = vmatprep.subr.bf16.mxu0 0
        %774 = vmatpush2.bf16.msra.mxu0 0
        %775 = vmatprep.subr.bf16.mxu0 0
        %776 = vmatpush2.bf16.msra.mxu0 0
        %777 = vmatprep.subr.bf16.mxu0 0
        %778 = vmatpush2.bf16.msra.mxu0 0
        %779 = vmatprep.subr.bf16.mxu0 0
        %780 = vmatpush2.bf16.msra.mxu0 0
        %781 = vmatprep.subr.bf16.mxu0 0
        %782 = vmatpush2.bf16.msra.mxu0 0
        %783 = vmatprep.subr.bf16.mxu0 0
        %784 = vmatpush2.bf16.msra.mxu0 0
        %785 = vmatprep.subr.bf16.mxu0 0
        %786 = vmatpush2.bf16.msra.mxu0 0
        %787 = vmatprep.mubr.bf16.mxu0 0
        %788 = vmatmul.mubr.bf16.gmra.mxu0 %v723
        %v789 = vpop.f32.mrf.mxu0
        %v790 = vadd.f32 0.0, %v789
        %v791 = vpop.f32.mrf.mxu0
        %v792 = vpop.f32.mrf.mxu0
        %v793 = vadd.f32 0.0, %v792
        %v794 = vpop.f32.mrf.mxu0
        %795 = vmatprep.mubr.bf16.mxu0 0
        %796 = vmatmul.mubr.bf16.gmra.mxu0 %v724
        %v797 = vpop.f32.mrf.mxu0
        %v798 = vadd.f32 0.0, %v797
        %v799 = vpop.f32.mrf.mxu0
        %v800 = vpop.f32.mrf.mxu0
        %v801 = vadd.f32 0.0, %v800
        %v802 = vpop.f32.mrf.mxu0
        %803 = vmatprep.mubr.bf16.mxu0 0
        %804 = vmatmul.mubr.bf16.gmra.mxu0 %v725
        %v805 = vpop.f32.mrf.mxu0
        %v806 = vadd.f32 0.0, %v805
        %v807 = vpop.f32.mrf.mxu0
        %v808 = vpop.f32.mrf.mxu0
        %v809 = vadd.f32 0.0, %v808
        %v810 = vpop.f32.mrf.mxu0
        %811 = vmatprep.mubr.bf16.mxu0 0
        %812 = vmatmul.mubr.bf16.gmra.mxu0 %v726
        %v813 = vpop.f32.mrf.mxu0
        %v814 = vadd.f32 0.0, %v813
        %v815 = vpop.f32.mrf.mxu0
        %v816 = vpop.f32.mrf.mxu0
        %v817 = vadd.f32 0.0, %v816
        %v818 = vpop.f32.mrf.mxu0
        %819 = vmatprep.mubr.bf16.mxu0 0
        %820 = vmatmul.mubr.bf16.gmra.mxu0 %v727
        %v821 = vpop.f32.mrf.mxu0
        %v822 = vadd.f32 0.0, %v821
        %v823 = vpop.f32.mrf.mxu0
        %v824 = vpop.f32.mrf.mxu0
        %v825 = vadd.f32 0.0, %v824
        %v826 = vpop.f32.mrf.mxu0
        %827 = vmatprep.mubr.bf16.mxu0 0
        %828 = vmatmul.mubr.bf16.gmra.mxu0 %v728
        %v829 = vpop.f32.mrf.mxu0
        %v830 = vadd.f32 0.0, %v829
        %v831 = vpop.f32.mrf.mxu0
        %v832 = vpop.f32.mrf.mxu0
        %v833 = vadd.f32 0.0, %v832
        %v834 = vpop.f32.mrf.mxu0
        %835 = vmatprep.mubr.bf16.mxu0 0
        %836 = vmatmul.mubr.bf16.gmra.mxu0 %v729
        %v837 = vpop.f32.mrf.mxu0
        %v838 = vadd.f32 0.0, %v837
        %v839 = vpop.f32.mrf.mxu0
        %v840 = vpop.f32.mrf.mxu0
        %v841 = vadd.f32 0.0, %v840
        %v842 = vpop.f32.mrf.mxu0
        %843 = vmatprep.mubr.bf16.mxu0 0
        %844 = vmatmul.mubr.bf16.gmra.mxu0 %v730
        %v845 = vpop.f32.mrf.mxu0
        %v846 = vadd.f32 0.0, %v845
        %v847 = vpop.f32.mrf.mxu0
        %v848 = vpop.f32.mrf.mxu0
        %v849 = vadd.f32 0.0, %v848
        %v850 = vpop.f32.mrf.mxu0
        %851 = vmatprep.mubr.bf16.mxu0 0
        %852 = vmatmul.mubr.bf16.gmra.mxu0 %v731
        %v853 = vpop.f32.mrf.mxu0
        %v854 = vadd.f32 0.0, %v853
        %v855 = vpop.f32.mrf.mxu0
        %v856 = vpop.f32.mrf.mxu0
        %v857 = vadd.f32 0.0, %v856
        %v858 = vpop.f32.mrf.mxu0
        %859 = vmatprep.mubr.bf16.mxu0 0
        %860 = vmatmul.mubr.bf16.gmra.mxu0 %v732
        %v861 = vpop.f32.mrf.mxu0
        %v862 = vadd.f32 0.0, %v861
        %v863 = vpop.f32.mrf.mxu0
        %v864 = vpop.f32.mrf.mxu0
        %v865 = vadd.f32 0.0, %v864
        %v866 = vpop.f32.mrf.mxu0
        %867 = vmatprep.mubr.bf16.mxu0 0
        %868 = vmatmul.mubr.bf16.gmra.mxu0 %v733
        %v869 = vpop.f32.mrf.mxu0
        %v870 = vadd.f32 0.0, %v869
        %v871 = vpop.f32.mrf.mxu0
        %v872 = vpop.f32.mrf.mxu0
        %v873 = vadd.f32 0.0, %v872
        %v874 = vpop.f32.mrf.mxu0
        %875 = vmatprep.mubr.bf16.mxu0 0
        %876 = vmatmul.mubr.bf16.gmra.mxu0 %v734
        %v877 = vpop.f32.mrf.mxu0
        %v878 = vadd.f32 0.0, %v877
        %v879 = vpop.f32.mrf.mxu0
        %v880 = vpop.f32.mrf.mxu0
        %v881 = vadd.f32 0.0, %v880
        %v882 = vpop.f32.mrf.mxu0
        %883 = vmatprep.mubr.bf16.mxu0 0
        %884 = vmatmul.mubr.bf16.gmra.mxu0 %v735
        %v885 = vpop.f32.mrf.mxu0
        %v886 = vadd.f32 0.0, %v885
        %v887 = vpop.f32.mrf.mxu0
        %v888 = vpop.f32.mrf.mxu0
        %v889 = vadd.f32 0.0, %v888
        %v890 = vpop.f32.mrf.mxu0
        %891 = vmatprep.mubr.bf16.mxu0 0
        %892 = vmatmul.mubr.bf16.gmra.mxu0 %v736
        %v893 = vpop.f32.mrf.mxu0
        %v894 = vadd.f32 0.0, %v893
        %v895 = vpop.f32.mrf.mxu0
        %v896 = vpop.f32.mrf.mxu0
        %v897 = vadd.f32 0.0, %v896
        %v898 = vpop.f32.mrf.mxu0
        %899 = vmatprep.mubr.bf16.mxu0 0
        %900 = vmatmul.mubr.bf16.gmra.mxu0 %v737
        %v901 = vpop.f32.mrf.mxu0
        %v902 = vadd.f32 0.0, %v901
        %v903 = vpop.f32.mrf.mxu0
        %v904 = vpop.f32.mrf.mxu0
        %v905 = vadd.f32 0.0, %v904
        %v906 = vpop.f32.mrf.mxu0
        %907 = vmatprep.mubr.bf16.mxu0 0
        %908 = vmatmul.mubr.bf16.gmra.mxu0 %v738
        %v909 = vpop.f32.mrf.mxu0
        %v910 = vadd.f32 0.0, %v909
        %v911 = vpop.f32.mrf.mxu0
        %v912 = vpop.f32.mrf.mxu0
        %v913 = vadd.f32 0.0, %v912
        %v914 = vpop.f32.mrf.mxu0
        %915 = vdwg.mxu0
        %v916 = vpack.c.bf16 %v793, %v790
        %v917 = vpack.c.bf16 %v801, %v798
        %v918 = vpack.c.bf16 %v809, %v806
        %v919 = vpack.c.bf16 %v817, %v814
        %v920 = vpack.c.bf16 %v825, %v822
        %v921 = vpack.c.bf16 %v833, %v830
        %v922 = vpack.c.bf16 %v841, %v838
        %v923 = vpack.c.bf16 %v849, %v846
        %v924 = vpack.c.bf16 %v857, %v854
        %v925 = vpack.c.bf16 %v865, %v862
        %v926 = vpack.c.bf16 %v873, %v870
        %v927 = vpack.c.bf16 %v881, %v878
        %v928 = vpack.c.bf16 %v889, %v886
        %v929 = vpack.c.bf16 %v897, %v894
        %v930 = vpack.c.bf16 %v905, %v902
        %v931 = vpack.c.bf16 %v913, %v910
        %v932 = vld [vmem:[#allocation5 + $0x10] sm:$0xf]
        %v933 = vld [vmem:[#allocation5 + $0x14] sm:$0xf]
        %v934 = vld [vmem:[#allocation5 + $0x18] sm:$0xf]
        %v935 = vld [vmem:[#allocation5 + $0x1c] sm:$0xf]
        %v936 = vld [vmem:[#allocation5 + $0x20] sm:$0xf]
        %v937 = vld [vmem:[#allocation5 + $0x24] sm:$0xf]
        %v938 = vld [vmem:[#allocation5 + $0x28] sm:$0xf]
        %v939 = vld [vmem:[#allocation5 + $0x2c] sm:$0xf]
        %v940 = vld [vmem:[#allocation5 + $0x30] sm:$0xf]
        %v941 = vld [vmem:[#allocation5 + $0x34] sm:$0xf]
        %v942 = vld [vmem:[#allocation5 + $0x38] sm:$0xf]
        %v943 = vld [vmem:[#allocation5 + $0x3c] sm:$0xf]
        %v944 = vld [vmem:[#allocation5 + $0x40] sm:$0xf]
        %v945 = vld [vmem:[#allocation5 + $0x44] sm:$0xf]
        %v946 = vld [vmem:[#allocation5 + $0x48] sm:$0xf]
        %v947 = vld [vmem:[#allocation5 + $0x4c] sm:$0xf]
        %v948 = vld [vmem:[#allocation5 + $0x50] sm:$0xf]
        %v949 = vld [vmem:[#allocation5 + $0x54] sm:$0xf]
        %v950 = vld [vmem:[#allocation5 + $0x58] sm:$0xf]
        %v951 = vld [vmem:[#allocation5 + $0x5c] sm:$0xf]
        %v952 = vld [vmem:[#allocation5 + $0x60] sm:$0xf]
        %v953 = vld [vmem:[#allocation5 + $0x64] sm:$0xf]
        %v954 = vld [vmem:[#allocation5 + $0x68] sm:$0xf]
        %v955 = vld [vmem:[#allocation5 + $0x6c] sm:$0xf]
        %v956 = vld [vmem:[#allocation5 + $0x70] sm:$0xf]
        %v957 = vld [vmem:[#allocation5 + $0x74] sm:$0xf]
        %v958 = vld [vmem:[#allocation5 + $0x78] sm:$0xf]
        %v959 = vld [vmem:[#allocation5 + $0x7c] sm:$0xf]
        %v960 = vld [vmem:[#allocation5 + $0x80] sm:$0xf]
        %v961 = vld [vmem:[#allocation5 + $0x84] sm:$0xf]
        %v962 = vld [vmem:[#allocation5 + $0x88] sm:$0xf]
        %v963 = vld [vmem:[#allocation5 + $0x8c] sm:$0xf]
        %v980 = vunpack.c.l.b16 %v948
        %v981 = vunpack.c.l.b16 %v949
        %v982 = vunpack.c.l.b16 %v950
        %v983 = vunpack.c.l.b16 %v951
        %v984 = vunpack.c.l.b16 %v952
        %v985 = vunpack.c.l.b16 %v953
        %v986 = vunpack.c.l.b16 %v954
        %v987 = vunpack.c.l.b16 %v955
        %v988 = vunpack.c.l.b16 %v956
        %v989 = vunpack.c.l.b16 %v957
        %v990 = vunpack.c.l.b16 %v958
        %v991 = vunpack.c.l.b16 %v959
        %v992 = vunpack.c.l.b16 %v960
        %v993 = vunpack.c.l.b16 %v961
        %v994 = vunpack.c.l.b16 %v962
        %v995 = vunpack.c.l.b16 %v963
        %v996 = vpack.c.b16 %v981, %v980
        %v997 = vpack.c.b16 %v983, %v982
        %v998 = vpack.c.b16 %v985, %v984
        %v999 = vpack.c.b16 %v987, %v986
        %v1000 = vpack.c.b16 %v989, %v988
        %v1001 = vpack.c.b16 %v991, %v990
        %v1002 = vpack.c.b16 %v993, %v992
        %v1003 = vpack.c.b16 %v995, %v994
        %1012 = vmatprep.subr.bf16.mxu0 0
        %1013 = vmatpush1.bf16.msra.mxu0 %v1003
        %1014 = vmatprep.subr.bf16.mxu0 0
        %1015 = vmatpush1.bf16.msra.mxu0 %v1002
        %1016 = vmatprep.subr.bf16.mxu0 0
        %1017 = vmatpush1.bf16.msra.mxu0 %v1001
        %1018 = vmatprep.subr.bf16.mxu0 0
        %1019 = vmatpush1.bf16.msra.mxu0 %v1000
        %1020 = vmatprep.subr.bf16.mxu0 0
        %1021 = vmatpush1.bf16.msra.mxu0 %v999
        %1022 = vmatprep.subr.bf16.mxu0 0
        %1023 = vmatpush1.bf16.msra.mxu0 %v998
        %1024 = vmatprep.subr.bf16.mxu0 0
        %1025 = vmatpush1.bf16.msra.mxu0 %v997
        %1026 = vmatprep.subr.bf16.mxu0 0
        %1027 = vmatpush1.bf16.msra.mxu0 %v996
        %1028 = vmatprep.subr.bf16.mxu0 0
        %1029 = vmatpush2.bf16.msra.mxu0 0
        %1030 = vmatprep.subr.bf16.mxu0 0
        %1031 = vmatpush2.bf16.msra.mxu0 0
        %1032 = vmatprep.subr.bf16.mxu0 0
        %1033 = vmatpush2.bf16.msra.mxu0 0
        %1034 = vmatprep.subr.bf16.mxu0 0
        %1035 = vmatpush2.bf16.msra.mxu0 0
        %1036 = vmatprep.subr.bf16.mxu0 0
        %1037 = vmatpush2.bf16.msra.mxu0 0
        %1038 = vmatprep.subr.bf16.mxu0 0
        %1039 = vmatpush2.bf16.msra.mxu0 0
        %1040 = vmatprep.subr.bf16.mxu0 0
        %1041 = vmatpush2.bf16.msra.mxu0 0
        %1042 = vmatprep.subr.bf16.mxu0 0
        %1043 = vmatpush2.bf16.msra.mxu0 0
        %1044 = vmatprep.mubr.bf16.mxu0 0
        %1045 = vmatmul.mubr.bf16.gmra.mxu0 %v924
        %v1046 = vpop.f32.mrf.mxu0
        %v1047 = vadd.f32 0.0, %v1046
        %v1048 = vpop.f32.mrf.mxu0
        %v1049 = vpop.f32.mrf.mxu0
        %v1050 = vadd.f32 0.0, %v1049
        %v1051 = vpop.f32.mrf.mxu0
        %1052 = vmatprep.mubr.bf16.mxu0 0
        %1053 = vmatmul.mubr.bf16.gmra.mxu0 %v925
        %v1054 = vpop.f32.mrf.mxu0
        %v1055 = vadd.f32 0.0, %v1054
        %v1056 = vpop.f32.mrf.mxu0
        %v1057 = vpop.f32.mrf.mxu0
        %v1058 = vadd.f32 0.0, %v1057
        %v1059 = vpop.f32.mrf.mxu0
        %1060 = vmatprep.mubr.bf16.mxu0 0
        %1061 = vmatmul.mubr.bf16.gmra.mxu0 %v926
        %v1062 = vpop.f32.mrf.mxu0
        %v1063 = vadd.f32 0.0, %v1062
        %v1064 = vpop.f32.mrf.mxu0
        %v1065 = vpop.f32.mrf.mxu0
        %v1066 = vadd.f32 0.0, %v1065
        %v1067 = vpop.f32.mrf.mxu0
        %1068 = vmatprep.mubr.bf16.mxu0 0
        %1069 = vmatmul.mubr.bf16.gmra.mxu0 %v927
        %v1070 = vpop.f32.mrf.mxu0
        %v1071 = vadd.f32 0.0, %v1070
        %v1072 = vpop.f32.mrf.mxu0
        %v1073 = vpop.f32.mrf.mxu0
        %v1074 = vadd.f32 0.0, %v1073
        %v1075 = vpop.f32.mrf.mxu0
        %1076 = vmatprep.mubr.bf16.mxu0 0
        %1077 = vmatmul.mubr.bf16.gmra.mxu0 %v928
        %v1078 = vpop.f32.mrf.mxu0
        %v1079 = vadd.f32 0.0, %v1078
        %v1080 = vpop.f32.mrf.mxu0
        %v1081 = vpop.f32.mrf.mxu0
        %v1082 = vadd.f32 0.0, %v1081
        %v1083 = vpop.f32.mrf.mxu0
        %1084 = vmatprep.mubr.bf16.mxu0 0
        %1085 = vmatmul.mubr.bf16.gmra.mxu0 %v929
        %v1086 = vpop.f32.mrf.mxu0
        %v1087 = vadd.f32 0.0, %v1086
        %v1088 = vpop.f32.mrf.mxu0
        %v1089 = vpop.f32.mrf.mxu0
        %v1090 = vadd.f32 0.0, %v1089
        %v1091 = vpop.f32.mrf.mxu0
        %1092 = vmatprep.mubr.bf16.mxu0 0
        %1093 = vmatmul.mubr.bf16.gmra.mxu0 %v930
        %v1094 = vpop.f32.mrf.mxu0
        %v1095 = vadd.f32 0.0, %v1094
        %v1096 = vpop.f32.mrf.mxu0
        %v1097 = vpop.f32.mrf.mxu0
        %v1098 = vadd.f32 0.0, %v1097
        %v1099 = vpop.f32.mrf.mxu0
        %1100 = vmatprep.mubr.bf16.mxu0 0
        %1101 = vmatmul.mubr.bf16.gmra.mxu0 %v931
        %v1102 = vpop.f32.mrf.mxu0
        %v1103 = vadd.f32 0.0, %v1102
        %v1104 = vpop.f32.mrf.mxu0
        %v1105 = vpop.f32.mrf.mxu0
        %v1106 = vadd.f32 0.0, %v1105
        %v1107 = vpop.f32.mrf.mxu0
        %1108 = vdwg.mxu0
        %v1125 = vunpack.c.l.b16 %v932
        %v1126 = vunpack.c.l.b16 %v933
        %v1127 = vunpack.c.l.b16 %v934
        %v1128 = vunpack.c.l.b16 %v935
        %v1129 = vunpack.c.l.b16 %v936
        %v1130 = vunpack.c.l.b16 %v937
        %v1131 = vunpack.c.l.b16 %v938
        %v1132 = vunpack.c.l.b16 %v939
        %v1133 = vunpack.c.l.b16 %v940
        %v1134 = vunpack.c.l.b16 %v941
        %v1135 = vunpack.c.l.b16 %v942
        %v1136 = vunpack.c.l.b16 %v943
        %v1137 = vunpack.c.l.b16 %v944
        %v1138 = vunpack.c.l.b16 %v945
        %v1139 = vunpack.c.l.b16 %v946
        %v1140 = vunpack.c.l.b16 %v947
        %v1141 = vpack.c.b16 %v1126, %v1125
        %v1142 = vpack.c.b16 %v1128, %v1127
        %v1143 = vpack.c.b16 %v1130, %v1129
        %v1144 = vpack.c.b16 %v1132, %v1131
        %v1145 = vpack.c.b16 %v1134, %v1133
        %v1146 = vpack.c.b16 %v1136, %v1135
        %v1147 = vpack.c.b16 %v1138, %v1137
        %v1148 = vpack.c.b16 %v1140, %v1139
        %1157 = vmatprep.subr.bf16.mxu0 0
        %1158 = vmatpush1.bf16.msra.mxu0 %v1148
        %1159 = vmatprep.subr.bf16.mxu0 0
        %1160 = vmatpush1.bf16.msra.mxu0 %v1147
        %1161 = vmatprep.subr.bf16.mxu0 0
        %1162 = vmatpush1.bf16.msra.mxu0 %v1146
        %1163 = vmatprep.subr.bf16.mxu0 0
        %1164 = vmatpush1.bf16.msra.mxu0 %v1145
        %1165 = vmatprep.subr.bf16.mxu0 0
        %1166 = vmatpush1.bf16.msra.mxu0 %v1144
        %1167 = vmatprep.subr.bf16.mxu0 0
        %1168 = vmatpush1.bf16.msra.mxu0 %v1143
        %1169 = vmatprep.subr.bf16.mxu0 0
        %1170 = vmatpush1.bf16.msra.mxu0 %v1142
        %1171 = vmatprep.subr.bf16.mxu0 0
        %1172 = vmatpush1.bf16.msra.mxu0 %v1141
        %1173 = vmatprep.subr.bf16.mxu0 0
        %1174 = vmatpush2.bf16.msra.mxu0 0
        %1175 = vmatprep.subr.bf16.mxu0 0
        %1176 = vmatpush2.bf16.msra.mxu0 0
        %1177 = vmatprep.subr.bf16.mxu0 0
        %1178 = vmatpush2.bf16.msra.mxu0 0
        %1179 = vmatprep.subr.bf16.mxu0 0
        %1180 = vmatpush2.bf16.msra.mxu0 0
        %1181 = vmatprep.subr.bf16.mxu0 0
        %1182 = vmatpush2.bf16.msra.mxu0 0
        %1183 = vmatprep.subr.bf16.mxu0 0
        %1184 = vmatpush2.bf16.msra.mxu0 0
        %1185 = vmatprep.subr.bf16.mxu0 0
        %1186 = vmatpush2.bf16.msra.mxu0 0
        %1187 = vmatprep.subr.bf16.mxu0 0
        %1188 = vmatpush2.bf16.msra.mxu0 0
        %1189 = vmatprep.mubr.bf16.mxu0 0
        %1190 = vmatmul.mubr.bf16.gmra.mxu0 %v916
        %v1191 = vpop.f32.mrf.mxu0
        %v1192 = vadd.f32 %v1047, %v1191
        %v1193 = vpop.f32.mrf.mxu0
        %v1194 = vpop.f32.mrf.mxu0
        %v1195 = vadd.f32 %v1050, %v1194
        %v1196 = vpop.f32.mrf.mxu0
        %1197 = vmatprep.mubr.bf16.mxu0 0
        %1198 = vmatmul.mubr.bf16.gmra.mxu0 %v917
        %v1199 = vpop.f32.mrf.mxu0
        %v1200 = vadd.f32 %v1055, %v1199
        %v1201 = vpop.f32.mrf.mxu0
        %v1202 = vpop.f32.mrf.mxu0
        %v1203 = vadd.f32 %v1058, %v1202
        %v1204 = vpop.f32.mrf.mxu0
        %1205 = vmatprep.mubr.bf16.mxu0 0
        %1206 = vmatmul.mubr.bf16.gmra.mxu0 %v918
        %v1207 = vpop.f32.mrf.mxu0
        %v1208 = vadd.f32 %v1063, %v1207
        %v1209 = vpop.f32.mrf.mxu0
        %v1210 = vpop.f32.mrf.mxu0
        %v1211 = vadd.f32 %v1066, %v1210
        %v1212 = vpop.f32.mrf.mxu0
        %1213 = vmatprep.mubr.bf16.mxu0 0
        %1214 = vmatmul.mubr.bf16.gmra.mxu0 %v919
        %v1215 = vpop.f32.mrf.mxu0
        %v1216 = vadd.f32 %v1071, %v1215
        %v1217 = vpop.f32.mrf.mxu0
        %v1218 = vpop.f32.mrf.mxu0
        %v1219 = vadd.f32 %v1074, %v1218
        %v1220 = vpop.f32.mrf.mxu0
        %1221 = vmatprep.mubr.bf16.mxu0 0
        %1222 = vmatmul.mubr.bf16.gmra.mxu0 %v920
        %v1223 = vpop.f32.mrf.mxu0
        %v1224 = vadd.f32 %v1079, %v1223
        %v1225 = vpop.f32.mrf.mxu0
        %v1226 = vpop.f32.mrf.mxu0
        %v1227 = vadd.f32 %v1082, %v1226
        %v1228 = vpop.f32.mrf.mxu0
        %1229 = vmatprep.mubr.bf16.mxu0 0
        %1230 = vmatmul.mubr.bf16.gmra.mxu0 %v921
        %v1231 = vpop.f32.mrf.mxu0
        %v1232 = vadd.f32 %v1087, %v1231
        %v1233 = vpop.f32.mrf.mxu0
        %v1234 = vpop.f32.mrf.mxu0
        %v1235 = vadd.f32 %v1090, %v1234
        %v1236 = vpop.f32.mrf.mxu0
        %1237 = vmatprep.mubr.bf16.mxu0 0
        %1238 = vmatmul.mubr.bf16.gmra.mxu0 %v922
        %v1239 = vpop.f32.mrf.mxu0
        %v1240 = vadd.f32 %v1095, %v1239
        %v1241 = vpop.f32.mrf.mxu0
        %v1242 = vpop.f32.mrf.mxu0
        %v1243 = vadd.f32 %v1098, %v1242
        %v1244 = vpop.f32.mrf.mxu0
        %1245 = vmatprep.mubr.bf16.mxu0 0
        %1246 = vmatmul.mubr.bf16.gmra.mxu0 %v923
        %v1247 = vpop.f32.mrf.mxu0
        %v1248 = vadd.f32 %v1103, %v1247
        %v1249 = vpop.f32.mrf.mxu0
        %v1250 = vpop.f32.mrf.mxu0
        %v1251 = vadd.f32 %v1106, %v1250
        %v1252 = vpop.f32.mrf.mxu0
        %1253 = vdwg.mxu0
        %v1254 = vld [vmem:[%s3 + $0x1] sm:$0x1]
        %v1255 = vlaneseq
        %v1256 = vshrl.u32 %v1255, 7
        %v1257 = vsub.s32 0, %v1256
        %v1258 = vrot.slane %v1254, %v1257
        %v1259 = vadd.f32 %v1192, %v1258
        %v1260 = vadd.f32 %v1195, %v1258
        %v1261 = vadd.f32 %v1200, %v1258
        %v1262 = vadd.f32 %v1203, %v1258
        %v1263 = vadd.f32 %v1208, %v1258
        %v1264 = vadd.f32 %v1211, %v1258
        %v1265 = vadd.f32 %v1216, %v1258
        %v1266 = vadd.f32 %v1219, %v1258
        %v1267 = vadd.f32 %v1224, %v1258
        %v1268 = vadd.f32 %v1227, %v1258
        %v1269 = vadd.f32 %v1232, %v1258
        %v1270 = vadd.f32 %v1235, %v1258
        %v1271 = vadd.f32 %v1240, %v1258
        %v1272 = vadd.f32 %v1243, %v1258
        %v1273 = vadd.f32 %v1248, %v1258
        %v1274 = vadd.f32 %v1251, %v1258
        %v1275 = vld [vmem:[#allocation5 + $0x110] sm:$0xf]
        %v1276 = vld [vmem:[#allocation5 + $0x114] sm:$0xf]
        %v1277 = vld [vmem:[#allocation5 + $0x118] sm:$0xf]
        %v1278 = vld [vmem:[#allocation5 + $0x11c] sm:$0xf]
        %v1279 = vld [vmem:[#allocation5 + $0x120] sm:$0xf]
        %v1280 = vld [vmem:[#allocation5 + $0x124] sm:$0xf]
        %v1281 = vld [vmem:[#allocation5 + $0x128] sm:$0xf]
        %v1282 = vld [vmem:[#allocation5 + $0x12c] sm:$0xf]
        %v1283 = vld [vmem:[#allocation5 + $0x130] sm:$0xf]
        %v1284 = vld [vmem:[#allocation5 + $0x134] sm:$0xf]
        %v1285 = vld [vmem:[#allocation5 + $0x138] sm:$0xf]
        %v1286 = vld [vmem:[#allocation5 + $0x13c] sm:$0xf]
        %v1287 = vld [vmem:[#allocation5 + $0x140] sm:$0xf]
        %v1288 = vld [vmem:[#allocation5 + $0x144] sm:$0xf]
        %v1289 = vld [vmem:[#allocation5 + $0x148] sm:$0xf]
        %v1290 = vld [vmem:[#allocation5 + $0x14c] sm:$0xf]
        %v1291 = vpack.c.bf16 %v1260, %v1259
        %v1292 = vpack.c.bf16 %v1262, %v1261
        %v1293 = vpack.c.bf16 %v1264, %v1263
        %v1294 = vpack.c.bf16 %v1266, %v1265
        %v1295 = vpack.c.bf16 %v1268, %v1267
        %v1296 = vpack.c.bf16 %v1270, %v1269
        %v1297 = vpack.c.bf16 %v1272, %v1271
        %v1298 = vpack.c.bf16 %v1274, %v1273
        %v1315 = vunpack.c.l.b16 %v1275
        %v1316 = vunpack.c.l.b16 %v1276
        %v1317 = vunpack.c.l.b16 %v1277
        %v1318 = vunpack.c.l.b16 %v1278
        %v1319 = vunpack.c.l.b16 %v1279
        %v1320 = vunpack.c.l.b16 %v1280
        %v1321 = vunpack.c.l.b16 %v1281
        %v1322 = vunpack.c.l.b16 %v1282
        %v1323 = vunpack.c.l.b16 %v1283
        %v1324 = vunpack.c.l.b16 %v1284
        %v1325 = vunpack.c.l.b16 %v1285
        %v1326 = vunpack.c.l.b16 %v1286
        %v1327 = vunpack.c.l.b16 %v1287
        %v1328 = vunpack.c.l.b16 %v1288
        %v1329 = vunpack.c.l.b16 %v1289
        %v1330 = vunpack.c.l.b16 %v1290
        %v1331 = vpack.c.b16 %v1316, %v1315
        %v1332 = vpack.c.b16 %v1318, %v1317
        %v1333 = vpack.c.b16 %v1320, %v1319
        %v1334 = vpack.c.b16 %v1322, %v1321
        %v1335 = vpack.c.b16 %v1324, %v1323
        %v1336 = vpack.c.b16 %v1326, %v1325
        %v1337 = vpack.c.b16 %v1328, %v1327
        %v1338 = vpack.c.b16 %v1330, %v1329
        %1347 = vmatprep.subr.bf16.mxu0 0
        %1348 = vmatpush1.bf16.msra.mxu0 %v1338
        %1349 = vmatprep.subr.bf16.mxu0 0
        %1350 = vmatpush1.bf16.msra.mxu0 %v1337
        %1351 = vmatprep.subr.bf16.mxu0 0
        %1352 = vmatpush1.bf16.msra.mxu0 %v1336
        %1353 = vmatprep.subr.bf16.mxu0 0
        %1354 = vmatpush1.bf16.msra.mxu0 %v1335
        %1355 = vmatprep.subr.bf16.mxu0 0
        %1356 = vmatpush1.bf16.msra.mxu0 %v1334
        %1357 = vmatprep.subr.bf16.mxu0 0
        %1358 = vmatpush1.bf16.msra.mxu0 %v1333
        %1359 = vmatprep.subr.bf16.mxu0 0
        %1360 = vmatpush1.bf16.msra.mxu0 %v1332
        %1361 = vmatprep.subr.bf16.mxu0 0
        %1362 = vmatpush1.bf16.msra.mxu0 %v1331
        %1363 = vmatprep.subr.bf16.mxu0 0
        %1364 = vmatpush2.bf16.msra.mxu0 0
        %1365 = vmatprep.subr.bf16.mxu0 0
        %1366 = vmatpush2.bf16.msra.mxu0 0
        %1367 = vmatprep.subr.bf16.mxu0 0
        %1368 = vmatpush2.bf16.msra.mxu0 0
        %1369 = vmatprep.subr.bf16.mxu0 0
        %1370 = vmatpush2.bf16.msra.mxu0 0
        %1371 = vmatprep.subr.bf16.mxu0 0
        %1372 = vmatpush2.bf16.msra.mxu0 0
        %1373 = vmatprep.subr.bf16.mxu0 0
        %1374 = vmatpush2.bf16.msra.mxu0 0
        %1375 = vmatprep.subr.bf16.mxu0 0
        %1376 = vmatpush2.bf16.msra.mxu0 0
        %1377 = vmatprep.subr.bf16.mxu0 0
        %1378 = vmatpush2.bf16.msra.mxu0 0
        %1379 = vmatprep.mubr.bf16.mxu0 0
        %1380 = vmatmul.mubr.bf16.gmra.mxu0 %v1291
        %v1381 = vpop.f32.mrf.mxu0
        %v1382 = vadd.f32 0.0, %v1381
        %v1383 = vpop.f32.mrf.mxu0
        %v1384 = vpop.f32.mrf.mxu0
        %v1385 = vadd.f32 0.0, %v1384
        %v1386 = vpop.f32.mrf.mxu0
        %1387 = vmatprep.mubr.bf16.mxu0 0
        %1388 = vmatmul.mubr.bf16.gmra.mxu0 %v1292
        %v1389 = vpop.f32.mrf.mxu0
        %v1390 = vadd.f32 0.0, %v1389
        %v1391 = vpop.f32.mrf.mxu0
        %v1392 = vpop.f32.mrf.mxu0
        %v1393 = vadd.f32 0.0, %v1392
        %v1394 = vpop.f32.mrf.mxu0
        %1395 = vmatprep.mubr.bf16.mxu0 0
        %1396 = vmatmul.mubr.bf16.gmra.mxu0 %v1293
        %v1397 = vpop.f32.mrf.mxu0
        %v1398 = vadd.f32 0.0, %v1397
        %v1399 = vpop.f32.mrf.mxu0
        %v1400 = vpop.f32.mrf.mxu0
        %v1401 = vadd.f32 0.0, %v1400
        %v1402 = vpop.f32.mrf.mxu0
        %1403 = vmatprep.mubr.bf16.mxu0 0
        %1404 = vmatmul.mubr.bf16.gmra.mxu0 %v1294
        %v1405 = vpop.f32.mrf.mxu0
        %v1406 = vadd.f32 0.0, %v1405
        %v1407 = vpop.f32.mrf.mxu0
        %v1408 = vpop.f32.mrf.mxu0
        %v1409 = vadd.f32 0.0, %v1408
        %v1410 = vpop.f32.mrf.mxu0
        %1411 = vmatprep.mubr.bf16.mxu0 0
        %1412 = vmatmul.mubr.bf16.gmra.mxu0 %v1295
        %v1413 = vpop.f32.mrf.mxu0
        %v1414 = vadd.f32 0.0, %v1413
        %v1415 = vpop.f32.mrf.mxu0
        %v1416 = vpop.f32.mrf.mxu0
        %v1417 = vadd.f32 0.0, %v1416
        %v1418 = vpop.f32.mrf.mxu0
        %1419 = vmatprep.mubr.bf16.mxu0 0
        %1420 = vmatmul.mubr.bf16.gmra.mxu0 %v1296
        %v1421 = vpop.f32.mrf.mxu0
        %v1422 = vadd.f32 0.0, %v1421
        %v1423 = vpop.f32.mrf.mxu0
        %v1424 = vpop.f32.mrf.mxu0
        %v1425 = vadd.f32 0.0, %v1424
        %v1426 = vpop.f32.mrf.mxu0
        %1427 = vmatprep.mubr.bf16.mxu0 0
        %1428 = vmatmul.mubr.bf16.gmra.mxu0 %v1297
        %v1429 = vpop.f32.mrf.mxu0
        %v1430 = vadd.f32 0.0, %v1429
        %v1431 = vpop.f32.mrf.mxu0
        %v1432 = vpop.f32.mrf.mxu0
        %v1433 = vadd.f32 0.0, %v1432
        %v1434 = vpop.f32.mrf.mxu0
        %1435 = vmatprep.mubr.bf16.mxu0 0
        %1436 = vmatmul.mubr.bf16.gmra.mxu0 %v1298
        %v1437 = vpop.f32.mrf.mxu0
        %v1438 = vadd.f32 0.0, %v1437
        %v1439 = vpop.f32.mrf.mxu0
        %v1440 = vpop.f32.mrf.mxu0
        %v1441 = vadd.f32 0.0, %v1440
        %v1442 = vpop.f32.mrf.mxu0
        %1443 = vdwg.mxu0
        %v1444 = vadd.f32 %v1382, %v565
        %v1445 = vadd.f32 %v1385, %v568
        %v1446 = vadd.f32 %v1390, %v573
        %v1447 = vadd.f32 %v1393, %v576
        %v1448 = vadd.f32 %v1398, %v581
        %v1449 = vadd.f32 %v1401, %v584
        %v1450 = vadd.f32 %v1406, %v589
        %v1451 = vadd.f32 %v1409, %v592
        %v1452 = vadd.f32 %v1414, %v597
        %v1453 = vadd.f32 %v1417, %v600
        %v1454 = vadd.f32 %v1422, %v605
        %v1455 = vadd.f32 %v1425, %v608
        %v1456 = vadd.f32 %v1430, %v613
        %v1457 = vadd.f32 %v1433, %v616
        %v1458 = vadd.f32 %v1438, %v621
        %v1459 = vadd.f32 %v1441, %v624
        %v1460 = vlaneseq
        %v1461 = vshrl.u32 %v1460, 7
        %v1462 = vsub.s32 0, %v1461
        %v1463 = vrot.slane %v256, %v1462
        %v1464 = vadd.f32 %v1444, %v1463
        %v1465 = vadd.f32 %v1445, %v1463
        %v1466 = vadd.f32 %v1446, %v1463
        %v1467 = vadd.f32 %v1447, %v1463
        %v1468 = vadd.f32 %v1448, %v1463
        %v1469 = vadd.f32 %v1449, %v1463
        %v1470 = vadd.f32 %v1450, %v1463
        %v1471 = vadd.f32 %v1451, %v1463
        %v1472 = vadd.f32 %v1452, %v1463
        %v1473 = vadd.f32 %v1453, %v1463
        %v1474 = vadd.f32 %v1454, %v1463
        %v1475 = vadd.f32 %v1455, %v1463
        %v1476 = vadd.f32 %v1456, %v1463
        %v1477 = vadd.f32 %v1457, %v1463
        %v1478 = vadd.f32 %v1458, %v1463
        %v1479 = vadd.f32 %v1459, %v1463
        %v1480 = vxor.u32 %v1464, 2147483648
        %v1481 = vxor.u32 %v1465, 2147483648
        %v1482 = vxor.u32 %v1466, 2147483648
        %v1483 = vxor.u32 %v1467, 2147483648
        %v1484 = vxor.u32 %v1468, 2147483648
        %v1485 = vxor.u32 %v1469, 2147483648
        %v1486 = vxor.u32 %v1470, 2147483648
        %v1487 = vxor.u32 %v1471, 2147483648
        %v1488 = vxor.u32 %v1472, 2147483648
        %v1489 = vxor.u32 %v1473, 2147483648
        %v1490 = vxor.u32 %v1474, 2147483648
        %v1491 = vxor.u32 %v1475, 2147483648
        %v1492 = vxor.u32 %v1476, 2147483648
        %v1493 = vxor.u32 %v1477, 2147483648
        %v1494 = vxor.u32 %v1478, 2147483648
        %v1495 = vxor.u32 %v1479, 2147483648
        %v1496 = vmul.f32 %v1480, 1.442695
        %v1497 = vpow.pop %v1496
        %v1498 = vmul.f32 %v1481, 1.442695
        %v1499 = vpow.pop %v1498
        %v1500 = vmul.f32 %v1482, 1.442695
        %v1501 = vpow.pop %v1500
        %v1502 = vmul.f32 %v1483, 1.442695
        %v1503 = vpow.pop %v1502
        %v1504 = vmul.f32 %v1484, 1.442695
        %v1505 = vpow.pop %v1504
        %v1506 = vmul.f32 %v1485, 1.442695
        %v1507 = vpow.pop %v1506
        %v1508 = vmul.f32 %v1486, 1.442695
        %v1509 = vpow.pop %v1508
        %v1510 = vmul.f32 %v1487, 1.442695
        %v1511 = vpow.pop %v1510
        %v1512 = vmul.f32 %v1488, 1.442695
        %v1513 = vpow.pop %v1512
        %v1514 = vmul.f32 %v1489, 1.442695
        %v1515 = vpow.pop %v1514
        %v1516 = vmul.f32 %v1490, 1.442695
        %v1517 = vpow.pop %v1516
        %v1518 = vmul.f32 %v1491, 1.442695
        %v1519 = vpow.pop %v1518
        %v1520 = vmul.f32 %v1492, 1.442695
        %v1521 = vpow.pop %v1520
        %v1522 = vmul.f32 %v1493, 1.442695
        %v1523 = vpow.pop %v1522
        %v1524 = vmul.f32 %v1494, 1.442695
        %v1525 = vpow.pop %v1524
        %v1526 = vmul.f32 %v1495, 1.442695
        %v1527 = vpow.pop %v1526
        %v1528 = vadd.f32 %v1497, 1.0
        %v1529 = vadd.f32 %v1499, 1.0
        %v1530 = vadd.f32 %v1501, 1.0
        %v1531 = vadd.f32 %v1503, 1.0
        %v1532 = vadd.f32 %v1505, 1.0
        %v1533 = vadd.f32 %v1507, 1.0
        %v1534 = vadd.f32 %v1509, 1.0
        %v1535 = vadd.f32 %v1511, 1.0
        %v1536 = vadd.f32 %v1513, 1.0
        %v1537 = vadd.f32 %v1515, 1.0
        %v1538 = vadd.f32 %v1517, 1.0
        %v1539 = vadd.f32 %v1519, 1.0
        %v1540 = vadd.f32 %v1521, 1.0
        %v1541 = vadd.f32 %v1523, 1.0
        %v1542 = vadd.f32 %v1525, 1.0
        %v1543 = vadd.f32 %v1527, 1.0
        %v1544 = vrcp.pop %v1528
        %v1545 = vmul.f32 1.0, %v1544
        %v1546 = vrcp.pop %v1529
        %v1547 = vmul.f32 1.0, %v1546
        %v1548 = vrcp.pop %v1530
        %v1549 = vmul.f32 1.0, %v1548
        %v1550 = vrcp.pop %v1531
        %v1551 = vmul.f32 1.0, %v1550
        %v1552 = vrcp.pop %v1532
        %v1553 = vmul.f32 1.0, %v1552
        %v1554 = vrcp.pop %v1533
        %v1555 = vmul.f32 1.0, %v1554
        %v1556 = vrcp.pop %v1534
        %v1557 = vmul.f32 1.0, %v1556
        %v1558 = vrcp.pop %v1535
        %v1559 = vmul.f32 1.0, %v1558
        %v1560 = vrcp.pop %v1536
        %v1561 = vmul.f32 1.0, %v1560
        %v1562 = vrcp.pop %v1537
        %v1563 = vmul.f32 1.0, %v1562
        %v1564 = vrcp.pop %v1538
        %v1565 = vmul.f32 1.0, %v1564
        %v1566 = vrcp.pop %v1539
        %v1567 = vmul.f32 1.0, %v1566
        %v1568 = vrcp.pop %v1540
        %v1569 = vmul.f32 1.0, %v1568
        %v1570 = vrcp.pop %v1541
        %v1571 = vmul.f32 1.0, %v1570
        %v1572 = vrcp.pop %v1542
        %v1573 = vmul.f32 1.0, %v1572
        %v1574 = vrcp.pop %v1543
        %v1575 = vmul.f32 1.0, %v1574
        %v1576 = vlaneseq
        %v1577 = vshrl.u32 %v1576, 7
        %v1578 = vsub.s32 0, %v1577
        %v1579 = vrot.slane %v257, %v1578
        %1581 = vrot.lane.b32.xlu0 %v1579, 64
        %v1582 = vpop.permute.xlu0 %1581
        %v1584 = vadd.f32 %v1382, %v1582
        %v1585 = vadd.f32 %v1385, %v1582
        %v1586 = vadd.f32 %v1390, %v1582
        %v1587 = vadd.f32 %v1393, %v1582
        %v1588 = vadd.f32 %v1398, %v1582
        %v1589 = vadd.f32 %v1401, %v1582
        %v1590 = vadd.f32 %v1406, %v1582
        %v1591 = vadd.f32 %v1409, %v1582
        %v1592 = vadd.f32 %v1414, %v1582
        %v1593 = vadd.f32 %v1417, %v1582
        %v1594 = vadd.f32 %v1422, %v1582
        %v1595 = vadd.f32 %v1425, %v1582
        %v1596 = vadd.f32 %v1430, %v1582
        %v1597 = vadd.f32 %v1433, %v1582
        %v1598 = vadd.f32 %v1438, %v1582
        %v1599 = vadd.f32 %v1441, %v1582
        %v1600 = vlaneseq
        %v1601 = vshrl.u32 %v1600, 7
        %v1602 = vsub.s32 0, %v1601
        %v1603 = vrot.slane %v258, %v1602
        %1605 = vrot.lane.b32.xlu0 %v1603, 64
        %v1606 = vpop.permute.xlu0 %1605
        %v1608 = vadd.f32 %v565, %v1606
        %v1609 = vadd.f32 %v568, %v1606
        %v1610 = vadd.f32 %v573, %v1606
        %v1611 = vadd.f32 %v576, %v1606
        %v1612 = vadd.f32 %v581, %v1606
        %v1613 = vadd.f32 %v584, %v1606
        %v1614 = vadd.f32 %v589, %v1606
        %v1615 = vadd.f32 %v592, %v1606
        %v1616 = vadd.f32 %v597, %v1606
        %v1617 = vadd.f32 %v600, %v1606
        %v1618 = vadd.f32 %v605, %v1606
        %v1619 = vadd.f32 %v608, %v1606
        %v1620 = vadd.f32 %v613, %v1606
        %v1621 = vadd.f32 %v616, %v1606
        %v1622 = vadd.f32 %v621, %v1606
        %v1623 = vadd.f32 %v624, %v1606
        %1640 = vrot.lane.b32.xlu0 %v1608, 64
        %v1641 = vpop.permute.xlu0 %1640
        %1642 = vrot.lane.b32.xlu0 %v1609, 64
        %v1643 = vpop.permute.xlu0 %1642
        %1644 = vrot.lane.b32.xlu0 %v1610, 64
        %v1645 = vpop.permute.xlu0 %1644
        %1646 = vrot.lane.b32.xlu0 %v1611, 64
        %v1647 = vpop.permute.xlu0 %1646
        %1648 = vrot.lane.b32.xlu0 %v1612, 64
        %v1649 = vpop.permute.xlu0 %1648
        %1650 = vrot.lane.b32.xlu0 %v1613, 64
        %v1651 = vpop.permute.xlu0 %1650
        %1652 = vrot.lane.b32.xlu0 %v1614, 64
        %v1653 = vpop.permute.xlu0 %1652
        %1654 = vrot.lane.b32.xlu0 %v1615, 64
        %v1655 = vpop.permute.xlu0 %1654
        %1656 = vrot.lane.b32.xlu0 %v1616, 64
        %v1657 = vpop.permute.xlu0 %1656
        %1658 = vrot.lane.b32.xlu0 %v1617, 64
        %v1659 = vpop.permute.xlu0 %1658
        %1660 = vrot.lane.b32.xlu0 %v1618, 64
        %v1661 = vpop.permute.xlu0 %1660
        %1662 = vrot.lane.b32.xlu0 %v1619, 64
        %v1663 = vpop.permute.xlu0 %1662
        %1664 = vrot.lane.b32.xlu0 %v1620, 64
        %v1665 = vpop.permute.xlu0 %1664
        %1666 = vrot.lane.b32.xlu0 %v1621, 64
        %v1667 = vpop.permute.xlu0 %1666
        %1668 = vrot.lane.b32.xlu0 %v1622, 64
        %v1669 = vpop.permute.xlu0 %1668
        %1670 = vrot.lane.b32.xlu0 %v1623, 64
        %v1671 = vpop.permute.xlu0 %1670
        %v1688 = vmul.f32 %v1545, %v1641
        %v1689 = vmul.f32 %v1547, %v1643
        %v1690 = vmul.f32 %v1549, %v1645
        %v1691 = vmul.f32 %v1551, %v1647
        %v1692 = vmul.f32 %v1553, %v1649
        %v1693 = vmul.f32 %v1555, %v1651
        %v1694 = vmul.f32 %v1557, %v1653
        %v1695 = vmul.f32 %v1559, %v1655
        %v1696 = vmul.f32 %v1561, %v1657
        %v1697 = vmul.f32 %v1563, %v1659
        %v1698 = vmul.f32 %v1565, %v1661
        %v1699 = vmul.f32 %v1567, %v1663
        %v1700 = vmul.f32 %v1569, %v1665
        %v1701 = vmul.f32 %v1571, %v1667
        %v1702 = vmul.f32 %v1573, %v1669
        %v1703 = vmul.f32 %v1575, %v1671
        %1720 = vrot.lane.b32.xlu0 %v1688, 64
        %v1721 = vpop.permute.xlu0 %1720
        %1722 = vrot.lane.b32.xlu0 %v1689, 64
        %v1723 = vpop.permute.xlu0 %1722
        %1724 = vrot.lane.b32.xlu0 %v1690, 64
        %v1725 = vpop.permute.xlu0 %1724
        %1726 = vrot.lane.b32.xlu0 %v1691, 64
        %v1727 = vpop.permute.xlu0 %1726
        %1728 = vrot.lane.b32.xlu0 %v1692, 64
        %v1729 = vpop.permute.xlu0 %1728
        %1730 = vrot.lane.b32.xlu0 %v1693, 64
        %v1731 = vpop.permute.xlu0 %1730
        %1732 = vrot.lane.b32.xlu0 %v1694, 64
        %v1733 = vpop.permute.xlu0 %1732
        %1734 = vrot.lane.b32.xlu0 %v1695, 64
        %v1735 = vpop.permute.xlu0 %1734
        %1736 = vrot.lane.b32.xlu0 %v1696, 64
        %v1737 = vpop.permute.xlu0 %1736
        %1738 = vrot.lane.b32.xlu0 %v1697, 64
        %v1739 = vpop.permute.xlu0 %1738
        %1740 = vrot.lane.b32.xlu0 %v1698, 64
        %v1741 = vpop.permute.xlu0 %1740
        %1742 = vrot.lane.b32.xlu0 %v1699, 64
        %v1743 = vpop.permute.xlu0 %1742
        %1744 = vrot.lane.b32.xlu0 %v1700, 64
        %v1745 = vpop.permute.xlu0 %1744
        %1746 = vrot.lane.b32.xlu0 %v1701, 64
        %v1747 = vpop.permute.xlu0 %1746
        %1748 = vrot.lane.b32.xlu0 %v1702, 64
        %v1749 = vpop.permute.xlu0 %1748
        %1750 = vrot.lane.b32.xlu0 %v1703, 64
        %v1751 = vpop.permute.xlu0 %1750
        %v1768 = vadd.f32 %v1584, %v1721
        %v1769 = vadd.f32 %v1585, %v1723
        %v1770 = vadd.f32 %v1586, %v1725
        %v1771 = vadd.f32 %v1587, %v1727
        %v1772 = vadd.f32 %v1588, %v1729
        %v1773 = vadd.f32 %v1589, %v1731
        %v1774 = vadd.f32 %v1590, %v1733
        %v1775 = vadd.f32 %v1591, %v1735
        %v1776 = vadd.f32 %v1592, %v1737
        %v1777 = vadd.f32 %v1593, %v1739
        %v1778 = vadd.f32 %v1594, %v1741
        %v1779 = vadd.f32 %v1595, %v1743
        %v1780 = vadd.f32 %v1596, %v1745
        %v1781 = vadd.f32 %v1597, %v1747
        %v1782 = vadd.f32 %v1598, %v1749
        %v1783 = vadd.f32 %v1599, %v1751
        %v1784 = vtanh.pop %v1768
        %v1785 = vtanh.pop %v1769
        %v1786 = vtanh.pop %v1770
        %v1787 = vtanh.pop %v1771
        %v1788 = vtanh.pop %v1772
        %v1789 = vtanh.pop %v1773
        %v1790 = vtanh.pop %v1774
        %v1791 = vtanh.pop %v1775
        %v1792 = vtanh.pop %v1776
        %v1793 = vtanh.pop %v1777
        %v1794 = vtanh.pop %v1778
        %v1795 = vtanh.pop %v1779
        %v1796 = vtanh.pop %v1780
        %v1797 = vtanh.pop %v1781
        %v1798 = vtanh.pop %v1782
        %v1799 = vtanh.pop %v1783
        %v1800 = vsub.f32 1.0, %v1545
        %v1801 = vsub.f32 1.0, %v1547
        %v1802 = vsub.f32 1.0, %v1549
        %v1803 = vsub.f32 1.0, %v1551
        %v1804 = vsub.f32 1.0, %v1553
        %v1805 = vsub.f32 1.0, %v1555
        %v1806 = vsub.f32 1.0, %v1557
        %v1807 = vsub.f32 1.0, %v1559
        %v1808 = vsub.f32 1.0, %v1561
        %v1809 = vsub.f32 1.0, %v1563
        %v1810 = vsub.f32 1.0, %v1565
        %v1811 = vsub.f32 1.0, %v1567
        %v1812 = vsub.f32 1.0, %v1569
        %v1813 = vsub.f32 1.0, %v1571
        %v1814 = vsub.f32 1.0, %v1573
        %v1815 = vsub.f32 1.0, %v1575
        %1832 = vrot.lane.b32.xlu0 %v1784, 96
        %v1833 = vpop.permute.xlu0 %1832
        %1834 = vrot.lane.b32.xlu0 %v1785, 96
        %v1835 = vpop.permute.xlu0 %1834
        %1836 = vrot.lane.b32.xlu0 %v1786, 96
        %v1837 = vpop.permute.xlu0 %1836
        %1838 = vrot.lane.b32.xlu0 %v1787, 96
        %v1839 = vpop.permute.xlu0 %1838
        %1840 = vrot.lane.b32.xlu0 %v1788, 96
        %v1841 = vpop.permute.xlu0 %1840
        %1842 = vrot.lane.b32.xlu0 %v1789, 96
        %v1843 = vpop.permute.xlu0 %1842
        %1844 = vrot.lane.b32.xlu0 %v1790, 96
        %v1845 = vpop.permute.xlu0 %1844
        %1846 = vrot.lane.b32.xlu0 %v1791, 96
        %v1847 = vpop.permute.xlu0 %1846
        %1848 = vrot.lane.b32.xlu0 %v1792, 96
        %v1849 = vpop.permute.xlu0 %1848
        %1850 = vrot.lane.b32.xlu0 %v1793, 96
        %v1851 = vpop.permute.xlu0 %1850
        %1852 = vrot.lane.b32.xlu0 %v1794, 96
        %v1853 = vpop.permute.xlu0 %1852
        %1854 = vrot.lane.b32.xlu0 %v1795, 96
        %v1855 = vpop.permute.xlu0 %1854
        %1856 = vrot.lane.b32.xlu0 %v1796, 96
        %v1857 = vpop.permute.xlu0 %1856
        %1858 = vrot.lane.b32.xlu0 %v1797, 96
        %v1859 = vpop.permute.xlu0 %1858
        %1860 = vrot.lane.b32.xlu0 %v1798, 96
        %v1861 = vpop.permute.xlu0 %1860
        %1862 = vrot.lane.b32.xlu0 %v1799, 96
        %v1863 = vpop.permute.xlu0 %1862
        %v1880 = vmul.f32 %v1800, %v1833
        %v1881 = vmul.f32 %v1801, %v1835
        %v1882 = vmul.f32 %v1802, %v1837
        %v1883 = vmul.f32 %v1803, %v1839
        %v1884 = vmul.f32 %v1804, %v1841
        %v1885 = vmul.f32 %v1805, %v1843
        %v1886 = vmul.f32 %v1806, %v1845
        %v1887 = vmul.f32 %v1807, %v1847
        %v1888 = vmul.f32 %v1808, %v1849
        %v1889 = vmul.f32 %v1809, %v1851
        %v1890 = vmul.f32 %v1810, %v1853
        %v1891 = vmul.f32 %v1811, %v1855
        %v1892 = vmul.f32 %v1812, %v1857
        %v1893 = vmul.f32 %v1813, %v1859
        %v1894 = vmul.f32 %v1814, %v1861
        %v1895 = vmul.f32 %v1815, %v1863
        %1912 = vrot.lane.b32.xlu0 %v396, 32
        %v1913 = vpop.permute.xlu0 %1912
        %1914 = vrot.lane.b32.xlu0 %v399, 32
        %v1915 = vpop.permute.xlu0 %1914
        %1916 = vrot.lane.b32.xlu0 %v404, 32
        %v1917 = vpop.permute.xlu0 %1916
        %1918 = vrot.lane.b32.xlu0 %v407, 32
        %v1919 = vpop.permute.xlu0 %1918
        %1920 = vrot.lane.b32.xlu0 %v412, 32
        %v1921 = vpop.permute.xlu0 %1920
        %1922 = vrot.lane.b32.xlu0 %v415, 32
        %v1923 = vpop.permute.xlu0 %1922
        %1924 = vrot.lane.b32.xlu0 %v420, 32
        %v1925 = vpop.permute.xlu0 %1924
        %1926 = vrot.lane.b32.xlu0 %v423, 32
        %v1927 = vpop.permute.xlu0 %1926
        %1928 = vrot.lane.b32.xlu0 %v428, 32
        %v1929 = vpop.permute.xlu0 %1928
        %1930 = vrot.lane.b32.xlu0 %v431, 32
        %v1931 = vpop.permute.xlu0 %1930
        %1932 = vrot.lane.b32.xlu0 %v436, 32
        %v1933 = vpop.permute.xlu0 %1932
        %1934 = vrot.lane.b32.xlu0 %v439, 32
        %v1935 = vpop.permute.xlu0 %1934
        %1936 = vrot.lane.b32.xlu0 %v444, 32
        %v1937 = vpop.permute.xlu0 %1936
        %1938 = vrot.lane.b32.xlu0 %v447, 32
        %v1939 = vpop.permute.xlu0 %1938
        %1940 = vrot.lane.b32.xlu0 %v452, 32
        %v1941 = vpop.permute.xlu0 %1940
        %1942 = vrot.lane.b32.xlu0 %v455, 32
        %v1943 = vpop.permute.xlu0 %1942
        %v1960 = vmul.f32 %v1545, %v1913
        %v1961 = vmul.f32 %v1547, %v1915
        %v1962 = vmul.f32 %v1549, %v1917
        %v1963 = vmul.f32 %v1551, %v1919
        %v1964 = vmul.f32 %v1553, %v1921
        %v1965 = vmul.f32 %v1555, %v1923
        %v1966 = vmul.f32 %v1557, %v1925
        %v1967 = vmul.f32 %v1559, %v1927
        %v1968 = vmul.f32 %v1561, %v1929
        %v1969 = vmul.f32 %v1563, %v1931
        %v1970 = vmul.f32 %v1565, %v1933
        %v1971 = vmul.f32 %v1567, %v1935
        %v1972 = vmul.f32 %v1569, %v1937
        %v1973 = vmul.f32 %v1571, %v1939
        %v1974 = vmul.f32 %v1573, %v1941
        %v1975 = vmul.f32 %v1575, %v1943
        %v1976 = vadd.f32 %v1880, %v1960
        %v1977 = vadd.f32 %v1881, %v1961
        %v1978 = vadd.f32 %v1882, %v1962
        %v1979 = vadd.f32 %v1883, %v1963
        %v1980 = vadd.f32 %v1884, %v1964
        %v1981 = vadd.f32 %v1885, %v1965
        %v1982 = vadd.f32 %v1886, %v1966
        %v1983 = vadd.f32 %v1887, %v1967
        %v1984 = vadd.f32 %v1888, %v1968
        %v1985 = vadd.f32 %v1889, %v1969
        %v1986 = vadd.f32 %v1890, %v1970
        %v1987 = vadd.f32 %v1891, %v1971
        %v1988 = vadd.f32 %v1892, %v1972
        %v1989 = vadd.f32 %v1893, %v1973
        %v1990 = vadd.f32 %v1894, %v1974
        %v1991 = vadd.f32 %v1895, %v1975
        %v1992 = vld [vmem:[#allocation5 + $0x190] sm:$0xf]
        %v1993 = vld [vmem:[#allocation5 + $0x194] sm:$0xf]
        %v1994 = vld [vmem:[#allocation5 + $0x198] sm:$0xf]
        %v1995 = vld [vmem:[#allocation5 + $0x19c] sm:$0xf]
        %v1996 = vpack.c.bf16 %v1977, %v1976
        %v1997 = vpack.c.bf16 %v1979, %v1978
        %v1998 = vpack.c.bf16 %v1981, %v1980
        %v1999 = vpack.c.bf16 %v1983, %v1982
        %v2000 = vpack.c.bf16 %v1985, %v1984
        %v2001 = vpack.c.bf16 %v1987, %v1986
        %v2002 = vpack.c.bf16 %v1989, %v1988
        %v2003 = vpack.c.bf16 %v1991, %v1990
        %v2004 = vld [vmem:[%s3 + $0x3] sm:$0x1]
        %v2005 = vlaneseq
        %v2006 = vshrl.u32 %v2005, 7
        %v2007 = vsub.s32 0, %v2006
        %v2008 = vrot.slane %v2004, %v2007
        %2017 = vrot.lane.b32.xlu0 %v1996, 96
        %v2018 = vpop.permute.xlu0 %2017
        %2019 = vrot.lane.b32.xlu0 %v1997, 96
        %v2020 = vpop.permute.xlu0 %2019
        %2021 = vrot.lane.b32.xlu0 %v1998, 96
        %v2022 = vpop.permute.xlu0 %2021
        %2023 = vrot.lane.b32.xlu0 %v1999, 96
        %v2024 = vpop.permute.xlu0 %2023
        %2025 = vrot.lane.b32.xlu0 %v2000, 96
        %v2026 = vpop.permute.xlu0 %2025
        %2027 = vrot.lane.b32.xlu0 %v2001, 96
        %v2028 = vpop.permute.xlu0 %2027
        %2029 = vrot.lane.b32.xlu0 %v2002, 96
        %v2030 = vpop.permute.xlu0 %2029
        %2031 = vrot.lane.b32.xlu0 %v2003, 96
        %v2032 = vpop.permute.xlu0 %2031
        %v2037 = vunpack.c.l.b16 %v1992
        %v2038 = vunpack.c.l.b16 %v1993
        %v2039 = vunpack.c.l.b16 %v1994
        %v2040 = vunpack.c.l.b16 %v1995
        %v2041 = vpack.c.b16 %v2038, %v2037
        %v2042 = vpack.c.b16 %v2040, %v2039
        %v2046 = vsel %vm336, %v2018, 0
        %v2049 = vsel %vm336, %v2020, 0
        %v2052 = vsel %vm336, %v2022, 0
        %v2055 = vsel %vm336, %v2024, 0
        %v2058 = vsel %vm336, %v2026, 0
        %v2061 = vsel %vm336, %v2028, 0
        %v2064 = vsel %vm336, %v2030, 0
        %v2067 = vsel %vm336, %v2032, 0
        %2069 = vmatprep.subr.bf16.mxu0 0
        %2070 = vmatpush1.bf16.msra.mxu0 0
        %2071 = vmatprep.subr.bf16.mxu0 0
        %2072 = vmatpush1.bf16.msra.mxu0 0
        %2073 = vmatprep.subr.bf16.mxu0 0
        %2074 = vmatpush1.bf16.msra.mxu0 0
        %2075 = vmatprep.subr.bf16.mxu0 0
        %2076 = vmatpush1.bf16.msra.mxu0 0
        %2077 = vmatprep.subr.bf16.mxu0 0
        %2078 = vmatpush1.bf16.msra.mxu0 0
        %2079 = vmatprep.subr.bf16.mxu0 0
        %2080 = vmatpush1.bf16.msra.mxu0 0
        %2081 = vmatprep.subr.bf16.mxu0 0
        %2082 = vmatpush1.bf16.msra.mxu0 %v2042
        %2083 = vmatprep.subr.bf16.mxu0 0
        %2084 = vmatpush1.bf16.msra.mxu0 %v2041
        %2085 = vmatprep.subr.bf16.mxu0 0
        %2086 = vmatpush2.bf16.msra.mxu0 0
        %2087 = vmatprep.subr.bf16.mxu0 0
        %2088 = vmatpush2.bf16.msra.mxu0 0
        %2089 = vmatprep.subr.bf16.mxu0 0
        %2090 = vmatpush2.bf16.msra.mxu0 0
        %2091 = vmatprep.subr.bf16.mxu0 0
        %2092 = vmatpush2.bf16.msra.mxu0 0
        %2093 = vmatprep.subr.bf16.mxu0 0
        %2094 = vmatpush2.bf16.msra.mxu0 0
        %2095 = vmatprep.subr.bf16.mxu0 0
        %2096 = vmatpush2.bf16.msra.mxu0 0
        %2097 = vmatprep.subr.bf16.mxu0 0
        %2098 = vmatpush2.bf16.msra.mxu0 0
        %2099 = vmatprep.subr.bf16.mxu0 0
        %2100 = vmatpush2.bf16.msra.mxu0 0
        %2101 = vmatprep.mubr.bf16.mxu0 0
        %2102 = vmatmul.mubr.bf16.gmra.mxu0 %v2046
        %v2103 = vpop.f32.mrf.mxu0
        %v2104 = vadd.f32 %v2008, %v2103
        %v2105 = vpop.f32.mrf.mxu0
        %v2106 = vpop.f32.mrf.mxu0
        %v2107 = vadd.f32 %v2008, %v2106
        %v2108 = vpop.f32.mrf.mxu0
        %2109 = vmatprep.mubr.bf16.mxu0 0
        %2110 = vmatmul.mubr.bf16.gmra.mxu0 %v2049
        %v2111 = vpop.f32.mrf.mxu0
        %v2112 = vadd.f32 %v2008, %v2111
        %v2113 = vpop.f32.mrf.mxu0
        %v2114 = vpop.f32.mrf.mxu0
        %v2115 = vadd.f32 %v2008, %v2114
        %v2116 = vpop.f32.mrf.mxu0
        %2117 = vmatprep.mubr.bf16.mxu0 0
        %2118 = vmatmul.mubr.bf16.gmra.mxu0 %v2052
        %v2119 = vpop.f32.mrf.mxu0
        %v2120 = vadd.f32 %v2008, %v2119
        %v2121 = vpop.f32.mrf.mxu0
        %v2122 = vpop.f32.mrf.mxu0
        %v2123 = vadd.f32 %v2008, %v2122
        %v2124 = vpop.f32.mrf.mxu0
        %2125 = vmatprep.mubr.bf16.mxu0 0
        %2126 = vmatmul.mubr.bf16.gmra.mxu0 %v2055
        %v2127 = vpop.f32.mrf.mxu0
        %v2128 = vadd.f32 %v2008, %v2127
        %v2129 = vpop.f32.mrf.mxu0
        %v2130 = vpop.f32.mrf.mxu0
        %v2131 = vadd.f32 %v2008, %v2130
        %v2132 = vpop.f32.mrf.mxu0
        %2133 = vmatprep.mubr.bf16.mxu0 0
        %2134 = vmatmul.mubr.bf16.gmra.mxu0 %v2058
        %v2135 = vpop.f32.mrf.mxu0
        %v2136 = vadd.f32 %v2008, %v2135
        %v2137 = vpop.f32.mrf.mxu0
        %v2138 = vpop.f32.mrf.mxu0
        %v2139 = vadd.f32 %v2008, %v2138
        %v2140 = vpop.f32.mrf.mxu0
        %2141 = vmatprep.mubr.bf16.mxu0 0
        %2142 = vmatmul.mubr.bf16.gmra.mxu0 %v2061
        %v2143 = vpop.f32.mrf.mxu0
        %v2144 = vadd.f32 %v2008, %v2143
        %v2145 = vpop.f32.mrf.mxu0
        %v2146 = vpop.f32.mrf.mxu0
        %v2147 = vadd.f32 %v2008, %v2146
        %v2148 = vpop.f32.mrf.mxu0
        %2149 = vmatprep.mubr.bf16.mxu0 0
        %2150 = vmatmul.mubr.bf16.gmra.mxu0 %v2064
        %v2151 = vpop.f32.mrf.mxu0
        %v2152 = vadd.f32 %v2008, %v2151
        %v2153 = vpop.f32.mrf.mxu0
        %v2154 = vpop.f32.mrf.mxu0
        %v2155 = vadd.f32 %v2008, %v2154
        %v2156 = vpop.f32.mrf.mxu0
        %2157 = vmatprep.mubr.bf16.mxu0 0
        %2158 = vmatmul.mubr.bf16.gmra.mxu0 %v2067
        %v2159 = vpop.f32.mrf.mxu0
        %v2160 = vadd.f32 %v2008, %v2159
        %v2161 = vpop.f32.mrf.mxu0
        %v2162 = vpop.f32.mrf.mxu0
        %v2163 = vadd.f32 %v2008, %v2162
        %v2164 = vpop.f32.mrf.mxu0
        %2165 = vdwg.mxu0
        %v2166 = vpack.c.bf16 %v2107, %v2104
        %v2167 = vpack.c.bf16 %v2115, %v2112
        %v2168 = vpack.c.bf16 %v2123, %v2120
        %v2169 = vpack.c.bf16 %v2131, %v2128
        %v2170 = vpack.c.bf16 %v2139, %v2136
        %v2171 = vpack.c.bf16 %v2147, %v2144
        %v2172 = vpack.c.bf16 %v2155, %v2152
        %v2173 = vpack.c.bf16 %v2163, %v2160
        %2174 = vmatprep.subr.bf16.mxu0 0
        %2175 = vmatpush1.bf16.msra.mxu0 %v2173
        %2176 = vmatprep.subr.bf16.mxu0 0
        %2177 = vmatpush1.bf16.msra.mxu0 %v2172
        %2178 = vmatprep.subr.bf16.mxu0 0
        %2179 = vmatpush1.bf16.msra.mxu0 %v2171
        %2180 = vmatprep.subr.bf16.mxu0 0
        %2181 = vmatpush1.bf16.msra.mxu0 %v2170
        %2182 = vmatprep.subr.bf16.mxu0 0
        %2183 = vmatpush1.bf16.msra.mxu0 %v2169
        %2184 = vmatprep.subr.bf16.mxu0 0
        %2185 = vmatpush1.bf16.msra.mxu0 %v2168
        %2186 = vmatprep.subr.bf16.mxu0 0
        %2187 = vmatpush1.bf16.msra.mxu0 %v2167
        %2188 = vmatprep.subr.bf16.mxu0 0
        %2189 = vmatpush1.bf16.msra.mxu0 %v2166
        %2190 = vmatprep.subr.bf16.mxu0 0
        %2191 = vmatpush2.bf16.msra.mxu0 0
        %2192 = vmatprep.subr.bf16.mxu0 0
        %2193 = vmatpush2.bf16.msra.mxu0 0
        %2194 = vmatprep.subr.bf16.mxu0 0
        %2195 = vmatpush2.bf16.msra.mxu0 0
        %2196 = vmatprep.subr.bf16.mxu0 0
        %2197 = vmatpush2.bf16.msra.mxu0 0
        %2198 = vmatprep.subr.bf16.mxu0 0
        %2199 = vmatpush2.bf16.msra.mxu0 0
        %2200 = vmatprep.subr.bf16.mxu0 0
        %2201 = vmatpush2.bf16.msra.mxu0 0
        %2202 = vmatprep.subr.bf16.mxu0 0
        %2203 = vmatpush2.bf16.msra.mxu0 0
        %2204 = vmatprep.subr.bf16.mxu0 0
        %2205 = vmatpush2.bf16.msra.mxu0 0
        %2206 = vmatprep.mubr.bf16.mxu0 0
        %2207 = vmatmul.mubr.bf16.gmra.mxu0 %v723
        %v2208 = vpop.f32.mrf.mxu0
        %v2209 = vadd.f32 0.0, %v2208
        %v2210 = vpop.f32.mrf.mxu0
        %v2211 = vpop.f32.mrf.mxu0
        %v2212 = vadd.f32 0.0, %v2211
        %v2213 = vpop.f32.mrf.mxu0
        %2214 = vmatprep.mubr.bf16.mxu0 0
        %2215 = vmatmul.mubr.bf16.gmra.mxu0 %v724
        %v2216 = vpop.f32.mrf.mxu0
        %v2217 = vadd.f32 0.0, %v2216
        %v2218 = vpop.f32.mrf.mxu0
        %v2219 = vpop.f32.mrf.mxu0
        %v2220 = vadd.f32 0.0, %v2219
        %v2221 = vpop.f32.mrf.mxu0
        %2222 = vmatprep.mubr.bf16.mxu0 0
        %2223 = vmatmul.mubr.bf16.gmra.mxu0 %v725
        %v2224 = vpop.f32.mrf.mxu0
        %v2225 = vadd.f32 0.0, %v2224
        %v2226 = vpop.f32.mrf.mxu0
        %v2227 = vpop.f32.mrf.mxu0
        %v2228 = vadd.f32 0.0, %v2227
        %v2229 = vpop.f32.mrf.mxu0
        %2230 = vmatprep.mubr.bf16.mxu0 0
        %2231 = vmatmul.mubr.bf16.gmra.mxu0 %v726
        %v2232 = vpop.f32.mrf.mxu0
        %v2233 = vadd.f32 0.0, %v2232
        %v2234 = vpop.f32.mrf.mxu0
        %v2235 = vpop.f32.mrf.mxu0
        %v2236 = vadd.f32 0.0, %v2235
        %v2237 = vpop.f32.mrf.mxu0
        %2238 = vmatprep.mubr.bf16.mxu0 0
        %2239 = vmatmul.mubr.bf16.gmra.mxu0 %v727
        %v2240 = vpop.f32.mrf.mxu0
        %v2241 = vadd.f32 0.0, %v2240
        %v2242 = vpop.f32.mrf.mxu0
        %v2243 = vpop.f32.mrf.mxu0
        %v2244 = vadd.f32 0.0, %v2243
        %v2245 = vpop.f32.mrf.mxu0
        %2246 = vmatprep.mubr.bf16.mxu0 0
        %2247 = vmatmul.mubr.bf16.gmra.mxu0 %v728
        %v2248 = vpop.f32.mrf.mxu0
        %v2249 = vadd.f32 0.0, %v2248
        %v2250 = vpop.f32.mrf.mxu0
        %v2251 = vpop.f32.mrf.mxu0
        %v2252 = vadd.f32 0.0, %v2251
        %v2253 = vpop.f32.mrf.mxu0
        %2254 = vmatprep.mubr.bf16.mxu0 0
        %2255 = vmatmul.mubr.bf16.gmra.mxu0 %v729
        %v2256 = vpop.f32.mrf.mxu0
        %v2257 = vadd.f32 0.0, %v2256
        %v2258 = vpop.f32.mrf.mxu0
        %v2259 = vpop.f32.mrf.mxu0
        %v2260 = vadd.f32 0.0, %v2259
        %v2261 = vpop.f32.mrf.mxu0
        %2262 = vmatprep.mubr.bf16.mxu0 0
        %2263 = vmatmul.mubr.bf16.gmra.mxu0 %v730
        %v2264 = vpop.f32.mrf.mxu0
        %v2265 = vadd.f32 0.0, %v2264
        %v2266 = vpop.f32.mrf.mxu0
        %v2267 = vpop.f32.mrf.mxu0
        %v2268 = vadd.f32 0.0, %v2267
        %v2269 = vpop.f32.mrf.mxu0
        %2270 = vmatprep.mubr.bf16.mxu0 0
        %2271 = vmatmul.mubr.bf16.gmra.mxu0 %v731
        %v2272 = vpop.f32.mrf.mxu0
        %v2273 = vadd.f32 0.0, %v2272
        %v2274 = vpop.f32.mrf.mxu0
        %v2275 = vpop.f32.mrf.mxu0
        %v2276 = vadd.f32 0.0, %v2275
        %v2277 = vpop.f32.mrf.mxu0
        %2278 = vmatprep.mubr.bf16.mxu0 0
        %2279 = vmatmul.mubr.bf16.gmra.mxu0 %v732
        %v2280 = vpop.f32.mrf.mxu0
        %v2281 = vadd.f32 0.0, %v2280
        %v2282 = vpop.f32.mrf.mxu0
        %v2283 = vpop.f32.mrf.mxu0
        %v2284 = vadd.f32 0.0, %v2283
        %v2285 = vpop.f32.mrf.mxu0
        %2286 = vmatprep.mubr.bf16.mxu0 0
        %2287 = vmatmul.mubr.bf16.gmra.mxu0 %v733
        %v2288 = vpop.f32.mrf.mxu0
        %v2289 = vadd.f32 0.0, %v2288
        %v2290 = vpop.f32.mrf.mxu0
        %v2291 = vpop.f32.mrf.mxu0
        %v2292 = vadd.f32 0.0, %v2291
        %v2293 = vpop.f32.mrf.mxu0
        %2294 = vmatprep.mubr.bf16.mxu0 0
        %2295 = vmatmul.mubr.bf16.gmra.mxu0 %v734
        %v2296 = vpop.f32.mrf.mxu0
        %v2297 = vadd.f32 0.0, %v2296
        %v2298 = vpop.f32.mrf.mxu0
        %v2299 = vpop.f32.mrf.mxu0
        %v2300 = vadd.f32 0.0, %v2299
        %v2301 = vpop.f32.mrf.mxu0
        %2302 = vmatprep.mubr.bf16.mxu0 0
        %2303 = vmatmul.mubr.bf16.gmra.mxu0 %v735
        %v2304 = vpop.f32.mrf.mxu0
        %v2305 = vadd.f32 0.0, %v2304
        %v2306 = vpop.f32.mrf.mxu0
        %v2307 = vpop.f32.mrf.mxu0
        %v2308 = vadd.f32 0.0, %v2307
        %v2309 = vpop.f32.mrf.mxu0
        %2310 = vmatprep.mubr.bf16.mxu0 0
        %2311 = vmatmul.mubr.bf16.gmra.mxu0 %v736
        %v2312 = vpop.f32.mrf.mxu0
        %v2313 = vadd.f32 0.0, %v2312
        %v2314 = vpop.f32.mrf.mxu0
        %v2315 = vpop.f32.mrf.mxu0
        %v2316 = vadd.f32 0.0, %v2315
        %v2317 = vpop.f32.mrf.mxu0
        %2318 = vmatprep.mubr.bf16.mxu0 0
        %2319 = vmatmul.mubr.bf16.gmra.mxu0 %v737
        %v2320 = vpop.f32.mrf.mxu0
        %v2321 = vadd.f32 0.0, %v2320
        %v2322 = vpop.f32.mrf.mxu0
        %v2323 = vpop.f32.mrf.mxu0
        %v2324 = vadd.f32 0.0, %v2323
        %v2325 = vpop.f32.mrf.mxu0
        %2326 = vmatprep.mubr.bf16.mxu0 0
        %2327 = vmatmul.mubr.bf16.gmra.mxu0 %v738
        %v2328 = vpop.f32.mrf.mxu0
        %v2329 = vadd.f32 0.0, %v2328
        %v2330 = vpop.f32.mrf.mxu0
        %v2331 = vpop.f32.mrf.mxu0
        %v2332 = vadd.f32 0.0, %v2331
        %v2333 = vpop.f32.mrf.mxu0
        %2334 = vdwg.mxu0
        %v2335 = vpack.c.bf16 %v2212, %v2209
        %v2336 = vpack.c.bf16 %v2220, %v2217
        %v2337 = vpack.c.bf16 %v2228, %v2225
        %v2338 = vpack.c.bf16 %v2236, %v2233
        %v2339 = vpack.c.bf16 %v2244, %v2241
        %v2340 = vpack.c.bf16 %v2252, %v2249
        %v2341 = vpack.c.bf16 %v2260, %v2257
        %v2342 = vpack.c.bf16 %v2268, %v2265
        %v2343 = vpack.c.bf16 %v2276, %v2273
        %v2344 = vpack.c.bf16 %v2284, %v2281
        %v2345 = vpack.c.bf16 %v2292, %v2289
        %v2346 = vpack.c.bf16 %v2300, %v2297
        %v2347 = vpack.c.bf16 %v2308, %v2305
        %v2348 = vpack.c.bf16 %v2316, %v2313
        %v2349 = vpack.c.bf16 %v2324, %v2321
        %v2350 = vpack.c.bf16 %v2332, %v2329
        %v2351 = vld [vmem:[#allocation5 + $0x90] sm:$0xf]
        %v2352 = vld [vmem:[#allocation5 + $0x94] sm:$0xf]
        %v2353 = vld [vmem:[#allocation5 + $0x98] sm:$0xf]
        %v2354 = vld [vmem:[#allocation5 + $0x9c] sm:$0xf]
        %v2355 = vld [vmem:[#allocation5 + $0xa0] sm:$0xf]
        %v2356 = vld [vmem:[#allocation5 + $0xa4] sm:$0xf]
        %v2357 = vld [vmem:[#allocation5 + $0xa8] sm:$0xf]
        %v2358 = vld [vmem:[#allocation5 + $0xac] sm:$0xf]
        %v2359 = vld [vmem:[#allocation5 + $0xb0] sm:$0xf]
        %v2360 = vld [vmem:[#allocation5 + $0xb4] sm:$0xf]
        %v2361 = vld [vmem:[#allocation5 + $0xb8] sm:$0xf]
        %v2362 = vld [vmem:[#allocation5 + $0xbc] sm:$0xf]
        %v2363 = vld [vmem:[#allocation5 + $0xc0] sm:$0xf]
        %v2364 = vld [vmem:[#allocation5 + $0xc4] sm:$0xf]
        %v2365 = vld [vmem:[#allocation5 + $0xc8] sm:$0xf]
        %v2366 = vld [vmem:[#allocation5 + $0xcc] sm:$0xf]
        %v2367 = vld [vmem:[#allocation5 + $0xd0] sm:$0xf]
        %v2368 = vld [vmem:[#allocation5 + $0xd4] sm:$0xf]
        %v2369 = vld [vmem:[#allocation5 + $0xd8] sm:$0xf]
        %v2370 = vld [vmem:[#allocation5 + $0xdc] sm:$0xf]
        %v2371 = vld [vmem:[#allocation5 + $0xe0] sm:$0xf]
        %v2372 = vld [vmem:[#allocation5 + $0xe4] sm:$0xf]
        %v2373 = vld [vmem:[#allocation5 + $0xe8] sm:$0xf]
        %v2374 = vld [vmem:[#allocation5 + $0xec] sm:$0xf]
        %v2375 = vld [vmem:[#allocation5 + $0xf0] sm:$0xf]
        %v2376 = vld [vmem:[#allocation5 + $0xf4] sm:$0xf]
        %v2377 = vld [vmem:[#allocation5 + $0xf8] sm:$0xf]
        %v2378 = vld [vmem:[#allocation5 + $0xfc] sm:$0xf]
        %v2379 = vld [vmem:[#allocation5 + $0x100] sm:$0xf]
        %v2380 = vld [vmem:[#allocation5 + $0x104] sm:$0xf]
        %v2381 = vld [vmem:[#allocation5 + $0x108] sm:$0xf]
        %v2382 = vld [vmem:[#allocation5 + $0x10c] sm:$0xf]
        %v2399 = vunpack.c.l.b16 %v2367
        %v2400 = vunpack.c.l.b16 %v2368
        %v2401 = vunpack.c.l.b16 %v2369
        %v2402 = vunpack.c.l.b16 %v2370
        %v2403 = vunpack.c.l.b16 %v2371
        %v2404 = vunpack.c.l.b16 %v2372
        %v2405 = vunpack.c.l.b16 %v2373
        %v2406 = vunpack.c.l.b16 %v2374
        %v2407 = vunpack.c.l.b16 %v2375
        %v2408 = vunpack.c.l.b16 %v2376
        %v2409 = vunpack.c.l.b16 %v2377
        %v2410 = vunpack.c.l.b16 %v2378
        %v2411 = vunpack.c.l.b16 %v2379
        %v2412 = vunpack.c.l.b16 %v2380
        %v2413 = vunpack.c.l.b16 %v2381
        %v2414 = vunpack.c.l.b16 %v2382
        %v2415 = vpack.c.b16 %v2400, %v2399
        %v2416 = vpack.c.b16 %v2402, %v2401
        %v2417 = vpack.c.b16 %v2404, %v2403
        %v2418 = vpack.c.b16 %v2406, %v2405
        %v2419 = vpack.c.b16 %v2408, %v2407
        %v2420 = vpack.c.b16 %v2410, %v2409
        %v2421 = vpack.c.b16 %v2412, %v2411
        %v2422 = vpack.c.b16 %v2414, %v2413
        %2431 = vmatprep.subr.bf16.mxu0 0
        %2432 = vmatpush1.bf16.msra.mxu0 %v2422
        %2433 = vmatprep.subr.bf16.mxu0 0
        %2434 = vmatpush1.bf16.msra.mxu0 %v2421
        %2435 = vmatprep.subr.bf16.mxu0 0
        %2436 = vmatpush1.bf16.msra.mxu0 %v2420
        %2437 = vmatprep.subr.bf16.mxu0 0
        %2438 = vmatpush1.bf16.msra.mxu0 %v2419
        %2439 = vmatprep.subr.bf16.mxu0 0
        %2440 = vmatpush1.bf16.msra.mxu0 %v2418
        %2441 = vmatprep.subr.bf16.mxu0 0
        %2442 = vmatpush1.bf16.msra.mxu0 %v2417
        %2443 = vmatprep.subr.bf16.mxu0 0
        %2444 = vmatpush1.bf16.msra.mxu0 %v2416
        %2445 = vmatprep.subr.bf16.mxu0 0
        %2446 = vmatpush1.bf16.msra.mxu0 %v2415
        %2447 = vmatprep.subr.bf16.mxu0 0
        %2448 = vmatpush2.bf16.msra.mxu0 0
        %2449 = vmatprep.subr.bf16.mxu0 0
        %2450 = vmatpush2.bf16.msra.mxu0 0
        %2451 = vmatprep.subr.bf16.mxu0 0
        %2452 = vmatpush2.bf16.msra.mxu0 0
        %2453 = vmatprep.subr.bf16.mxu0 0
        %2454 = vmatpush2.bf16.msra.mxu0 0
        %2455 = vmatprep.subr.bf16.mxu0 0
        %2456 = vmatpush2.bf16.msra.mxu0 0
        %2457 = vmatprep.subr.bf16.mxu0 0
        %2458 = vmatpush2.bf16.msra.mxu0 0
        %2459 = vmatprep.subr.bf16.mxu0 0
        %2460 = vmatpush2.bf16.msra.mxu0 0
        %2461 = vmatprep.subr.bf16.mxu0 0
        %2462 = vmatpush2.bf16.msra.mxu0 0
        %2463 = vmatprep.mubr.bf16.mxu0 0
        %2464 = vmatmul.mubr.bf16.gmra.mxu0 %v2343
        %v2465 = vpop.f32.mrf.mxu0
        %v2466 = vadd.f32 0.0, %v2465
        %v2467 = vpop.f32.mrf.mxu0
        %v2468 = vpop.f32.mrf.mxu0
        %v2469 = vadd.f32 0.0, %v2468
        %v2470 = vpop.f32.mrf.mxu0
        %2471 = vmatprep.mubr.bf16.mxu0 0
        %2472 = vmatmul.mubr.bf16.gmra.mxu0 %v2344
        %v2473 = vpop.f32.mrf.mxu0
        %v2474 = vadd.f32 0.0, %v2473
        %v2475 = vpop.f32.mrf.mxu0
        %v2476 = vpop.f32.mrf.mxu0
        %v2477 = vadd.f32 0.0, %v2476
        %v2478 = vpop.f32.mrf.mxu0
        %2479 = vmatprep.mubr.bf16.mxu0 0
        %2480 = vmatmul.mubr.bf16.gmra.mxu0 %v2345
        %v2481 = vpop.f32.mrf.mxu0
        %v2482 = vadd.f32 0.0, %v2481
        %v2483 = vpop.f32.mrf.mxu0
        %v2484 = vpop.f32.mrf.mxu0
        %v2485 = vadd.f32 0.0, %v2484
        %v2486 = vpop.f32.mrf.mxu0
        %2487 = vmatprep.mubr.bf16.mxu0 0
        %2488 = vmatmul.mubr.bf16.gmra.mxu0 %v2346
        %v2489 = vpop.f32.mrf.mxu0
        %v2490 = vadd.f32 0.0, %v2489
        %v2491 = vpop.f32.mrf.mxu0
        %v2492 = vpop.f32.mrf.mxu0
        %v2493 = vadd.f32 0.0, %v2492
        %v2494 = vpop.f32.mrf.mxu0
        %2495 = vmatprep.mubr.bf16.mxu0 0
        %2496 = vmatmul.mubr.bf16.gmra.mxu0 %v2347
        %v2497 = vpop.f32.mrf.mxu0
        %v2498 = vadd.f32 0.0, %v2497
        %v2499 = vpop.f32.mrf.mxu0
        %v2500 = vpop.f32.mrf.mxu0
        %v2501 = vadd.f32 0.0, %v2500
        %v2502 = vpop.f32.mrf.mxu0
        %2503 = vmatprep.mubr.bf16.mxu0 0
        %2504 = vmatmul.mubr.bf16.gmra.mxu0 %v2348
        %v2505 = vpop.f32.mrf.mxu0
        %v2506 = vadd.f32 0.0, %v2505
        %v2507 = vpop.f32.mrf.mxu0
        %v2508 = vpop.f32.mrf.mxu0
        %v2509 = vadd.f32 0.0, %v2508
        %v2510 = vpop.f32.mrf.mxu0
        %2511 = vmatprep.mubr.bf16.mxu0 0
        %2512 = vmatmul.mubr.bf16.gmra.mxu0 %v2349
        %v2513 = vpop.f32.mrf.mxu0
        %v2514 = vadd.f32 0.0, %v2513
        %v2515 = vpop.f32.mrf.mxu0
        %v2516 = vpop.f32.mrf.mxu0
        %v2517 = vadd.f32 0.0, %v2516
        %v2518 = vpop.f32.mrf.mxu0
        %2519 = vmatprep.mubr.bf16.mxu0 0
        %2520 = vmatmul.mubr.bf16.gmra.mxu0 %v2350
        %v2521 = vpop.f32.mrf.mxu0
        %v2522 = vadd.f32 0.0, %v2521
        %v2523 = vpop.f32.mrf.mxu0
        %v2524 = vpop.f32.mrf.mxu0
        %v2525 = vadd.f32 0.0, %v2524
        %v2526 = vpop.f32.mrf.mxu0
        %2527 = vdwg.mxu0
        %v2544 = vunpack.c.l.b16 %v2351
        %v2545 = vunpack.c.l.b16 %v2352
        %v2546 = vunpack.c.l.b16 %v2353
        %v2547 = vunpack.c.l.b16 %v2354
        %v2548 = vunpack.c.l.b16 %v2355
        %v2549 = vunpack.c.l.b16 %v2356
        %v2550 = vunpack.c.l.b16 %v2357
        %v2551 = vunpack.c.l.b16 %v2358
        %v2552 = vunpack.c.l.b16 %v2359
        %v2553 = vunpack.c.l.b16 %v2360
        %v2554 = vunpack.c.l.b16 %v2361
        %v2555 = vunpack.c.l.b16 %v2362
        %v2556 = vunpack.c.l.b16 %v2363
        %v2557 = vunpack.c.l.b16 %v2364
        %v2558 = vunpack.c.l.b16 %v2365
        %v2559 = vunpack.c.l.b16 %v2366
        %v2560 = vpack.c.b16 %v2545, %v2544
        %v2561 = vpack.c.b16 %v2547, %v2546
        %v2562 = vpack.c.b16 %v2549, %v2548
        %v2563 = vpack.c.b16 %v2551, %v2550
        %v2564 = vpack.c.b16 %v2553, %v2552
        %v2565 = vpack.c.b16 %v2555, %v2554
        %v2566 = vpack.c.b16 %v2557, %v2556
        %v2567 = vpack.c.b16 %v2559, %v2558
        %2576 = vmatprep.subr.bf16.mxu0 0
        %2577 = vmatpush1.bf16.msra.mxu0 %v2567
        %2578 = vmatprep.subr.bf16.mxu0 0
        %2579 = vmatpush1.bf16.msra.mxu0 %v2566
        %2580 = vmatprep.subr.bf16.mxu0 0
        %2581 = vmatpush1.bf16.msra.mxu0 %v2565
        %2582 = vmatprep.subr.bf16.mxu0 0
        %2583 = vmatpush1.bf16.msra.mxu0 %v2564
        %2584 = vmatprep.subr.bf16.mxu0 0
        %2585 = vmatpush1.bf16.msra.mxu0 %v2563
        %2586 = vmatprep.subr.bf16.mxu0 0
        %2587 = vmatpush1.bf16.msra.mxu0 %v2562
        %2588 = vmatprep.subr.bf16.mxu0 0
        %2589 = vmatpush1.bf16.msra.mxu0 %v2561
        %2590 = vmatprep.subr.bf16.mxu0 0
        %2591 = vmatpush1.bf16.msra.mxu0 %v2560
        %2592 = vmatprep.subr.bf16.mxu0 0
        %2593 = vmatpush2.bf16.msra.mxu0 0
        %2594 = vmatprep.subr.bf16.mxu0 0
        %2595 = vmatpush2.bf16.msra.mxu0 0
        %2596 = vmatprep.subr.bf16.mxu0 0
        %2597 = vmatpush2.bf16.msra.mxu0 0
        %2598 = vmatprep.subr.bf16.mxu0 0
        %2599 = vmatpush2.bf16.msra.mxu0 0
        %2600 = vmatprep.subr.bf16.mxu0 0
        %2601 = vmatpush2.bf16.msra.mxu0 0
        %2602 = vmatprep.subr.bf16.mxu0 0
        %2603 = vmatpush2.bf16.msra.mxu0 0
        %2604 = vmatprep.subr.bf16.mxu0 0
        %2605 = vmatpush2.bf16.msra.mxu0 0
        %2606 = vmatprep.subr.bf16.mxu0 0
        %2607 = vmatpush2.bf16.msra.mxu0 0
        %2608 = vmatprep.mubr.bf16.mxu0 0
        %2609 = vmatmul.mubr.bf16.gmra.mxu0 %v2335
        %v2610 = vpop.f32.mrf.mxu0
        %v2611 = vadd.f32 %v2466, %v2610
        %v2612 = vpop.f32.mrf.mxu0
        %v2613 = vpop.f32.mrf.mxu0
        %v2614 = vadd.f32 %v2469, %v2613
        %v2615 = vpop.f32.mrf.mxu0
        %2616 = vmatprep.mubr.bf16.mxu0 0
        %2617 = vmatmul.mubr.bf16.gmra.mxu0 %v2336
        %v2618 = vpop.f32.mrf.mxu0
        %v2619 = vadd.f32 %v2474, %v2618
        %v2620 = vpop.f32.mrf.mxu0
        %v2621 = vpop.f32.mrf.mxu0
        %v2622 = vadd.f32 %v2477, %v2621
        %v2623 = vpop.f32.mrf.mxu0
        %2624 = vmatprep.mubr.bf16.mxu0 0
        %2625 = vmatmul.mubr.bf16.gmra.mxu0 %v2337
        %v2626 = vpop.f32.mrf.mxu0
        %v2627 = vadd.f32 %v2482, %v2626
        %v2628 = vpop.f32.mrf.mxu0
        %v2629 = vpop.f32.mrf.mxu0
        %v2630 = vadd.f32 %v2485, %v2629
        %v2631 = vpop.f32.mrf.mxu0
        %2632 = vmatprep.mubr.bf16.mxu0 0
        %2633 = vmatmul.mubr.bf16.gmra.mxu0 %v2338
        %v2634 = vpop.f32.mrf.mxu0
        %v2635 = vadd.f32 %v2490, %v2634
        %v2636 = vpop.f32.mrf.mxu0
        %v2637 = vpop.f32.mrf.mxu0
        %v2638 = vadd.f32 %v2493, %v2637
        %v2639 = vpop.f32.mrf.mxu0
        %2640 = vmatprep.mubr.bf16.mxu0 0
        %2641 = vmatmul.mubr.bf16.gmra.mxu0 %v2339
        %v2642 = vpop.f32.mrf.mxu0
        %v2643 = vadd.f32 %v2498, %v2642
        %v2644 = vpop.f32.mrf.mxu0
        %v2645 = vpop.f32.mrf.mxu0
        %v2646 = vadd.f32 %v2501, %v2645
        %v2647 = vpop.f32.mrf.mxu0
        %2648 = vmatprep.mubr.bf16.mxu0 0
        %2649 = vmatmul.mubr.bf16.gmra.mxu0 %v2340
        %v2650 = vpop.f32.mrf.mxu0
        %v2651 = vadd.f32 %v2506, %v2650
        %v2652 = vpop.f32.mrf.mxu0
        %v2653 = vpop.f32.mrf.mxu0
        %v2654 = vadd.f32 %v2509, %v2653
        %v2655 = vpop.f32.mrf.mxu0
        %2656 = vmatprep.mubr.bf16.mxu0 0
        %2657 = vmatmul.mubr.bf16.gmra.mxu0 %v2341
        %v2658 = vpop.f32.mrf.mxu0
        %v2659 = vadd.f32 %v2514, %v2658
        %v2660 = vpop.f32.mrf.mxu0
        %v2661 = vpop.f32.mrf.mxu0
        %v2662 = vadd.f32 %v2517, %v2661
        %v2663 = vpop.f32.mrf.mxu0
        %2664 = vmatprep.mubr.bf16.mxu0 0
        %2665 = vmatmul.mubr.bf16.gmra.mxu0 %v2342
        %v2666 = vpop.f32.mrf.mxu0
        %v2667 = vadd.f32 %v2522, %v2666
        %v2668 = vpop.f32.mrf.mxu0
        %v2669 = vpop.f32.mrf.mxu0
        %v2670 = vadd.f32 %v2525, %v2669
        %v2671 = vpop.f32.mrf.mxu0
        %2672 = vdwg.mxu0
        %v2673 = vld [vmem:[%s3 + $0x2] sm:$0x1]
        %v2674 = vlaneseq
        %v2675 = vshrl.u32 %v2674, 7
        %v2676 = vsub.s32 0, %v2675
        %v2677 = vrot.slane %v2673, %v2676
        %v2678 = vadd.f32 %v2611, %v2677
        %v2679 = vadd.f32 %v2614, %v2677
        %v2680 = vadd.f32 %v2619, %v2677
        %v2681 = vadd.f32 %v2622, %v2677
        %v2682 = vadd.f32 %v2627, %v2677
        %v2683 = vadd.f32 %v2630, %v2677
        %v2684 = vadd.f32 %v2635, %v2677
        %v2685 = vadd.f32 %v2638, %v2677
        %v2686 = vadd.f32 %v2643, %v2677
        %v2687 = vadd.f32 %v2646, %v2677
        %v2688 = vadd.f32 %v2651, %v2677
        %v2689 = vadd.f32 %v2654, %v2677
        %v2690 = vadd.f32 %v2659, %v2677
        %v2691 = vadd.f32 %v2662, %v2677
        %v2692 = vadd.f32 %v2667, %v2677
        %v2693 = vadd.f32 %v2670, %v2677
        %v2694 = vpack.c.bf16 %v2679, %v2678
        %v2695 = vpack.c.bf16 %v2681, %v2680
        %v2696 = vpack.c.bf16 %v2683, %v2682
        %v2697 = vpack.c.bf16 %v2685, %v2684
        %v2698 = vpack.c.bf16 %v2687, %v2686
        %v2699 = vpack.c.bf16 %v2689, %v2688
        %v2700 = vpack.c.bf16 %v2691, %v2690
        %v2701 = vpack.c.bf16 %v2693, %v2692
        %2702 = vmatprep.subr.bf16.mxu0 0
        %2703 = vmatpush1.bf16.msra.mxu0 %v1338
        %2704 = vmatprep.subr.bf16.mxu0 0
        %2705 = vmatpush1.bf16.msra.mxu0 %v1337
        %2706 = vmatprep.subr.bf16.mxu0 0
        %2707 = vmatpush1.bf16.msra.mxu0 %v1336
        %2708 = vmatprep.subr.bf16.mxu0 0
        %2709 = vmatpush1.bf16.msra.mxu0 %v1335
        %2710 = vmatprep.subr.bf16.mxu0 0
        %2711 = vmatpush1.bf16.msra.mxu0 %v1334
        %2712 = vmatprep.subr.bf16.mxu0 0
        %2713 = vmatpush1.bf16.msra.mxu0 %v1333
        %2714 = vmatprep.subr.bf16.mxu0 0
        %2715 = vmatpush1.bf16.msra.mxu0 %v1332
        %2716 = vmatprep.subr.bf16.mxu0 0
        %2717 = vmatpush1.bf16.msra.mxu0 %v1331
        %2718 = vmatprep.subr.bf16.mxu0 0
        %2719 = vmatpush2.bf16.msra.mxu0 0
        %2720 = vmatprep.subr.bf16.mxu0 0
        %2721 = vmatpush2.bf16.msra.mxu0 0
        %2722 = vmatprep.subr.bf16.mxu0 0
        %2723 = vmatpush2.bf16.msra.mxu0 0
        %2724 = vmatprep.subr.bf16.mxu0 0
        %2725 = vmatpush2.bf16.msra.mxu0 0
        %2726 = vmatprep.subr.bf16.mxu0 0
        %2727 = vmatpush2.bf16.msra.mxu0 0
        %2728 = vmatprep.subr.bf16.mxu0 0
        %2729 = vmatpush2.bf16.msra.mxu0 0
        %2730 = vmatprep.subr.bf16.mxu0 0
        %2731 = vmatpush2.bf16.msra.mxu0 0
        %2732 = vmatprep.subr.bf16.mxu0 0
        %2733 = vmatpush2.bf16.msra.mxu0 0
        %2734 = vmatprep.mubr.bf16.mxu0 0
        %2735 = vmatmul.mubr.bf16.gmra.mxu0 %v2694
        %v2736 = vpop.f32.mrf.mxu0
        %v2737 = vadd.f32 0.0, %v2736
        %v2738 = vpop.f32.mrf.mxu0
        %v2739 = vpop.f32.mrf.mxu0
        %v2740 = vadd.f32 0.0, %v2739
        %v2741 = vpop.f32.mrf.mxu0
        %2742 = vmatprep.mubr.bf16.mxu0 0
        %2743 = vmatmul.mubr.bf16.gmra.mxu0 %v2695
        %v2744 = vpop.f32.mrf.mxu0
        %v2745 = vadd.f32 0.0, %v2744
        %v2746 = vpop.f32.mrf.mxu0
        %v2747 = vpop.f32.mrf.mxu0
        %v2748 = vadd.f32 0.0, %v2747
        %v2749 = vpop.f32.mrf.mxu0
        %2750 = vmatprep.mubr.bf16.mxu0 0
        %2751 = vmatmul.mubr.bf16.gmra.mxu0 %v2696
        %v2752 = vpop.f32.mrf.mxu0
        %v2753 = vadd.f32 0.0, %v2752
        %v2754 = vpop.f32.mrf.mxu0
        %v2755 = vpop.f32.mrf.mxu0
        %v2756 = vadd.f32 0.0, %v2755
        %v2757 = vpop.f32.mrf.mxu0
        %2758 = vmatprep.mubr.bf16.mxu0 0
        %2759 = vmatmul.mubr.bf16.gmra.mxu0 %v2697
        %v2760 = vpop.f32.mrf.mxu0
        %v2761 = vadd.f32 0.0, %v2760
        %v2762 = vpop.f32.mrf.mxu0
        %v2763 = vpop.f32.mrf.mxu0
        %v2764 = vadd.f32 0.0, %v2763
        %v2765 = vpop.f32.mrf.mxu0
        %2766 = vmatprep.mubr.bf16.mxu0 0
        %2767 = vmatmul.mubr.bf16.gmra.mxu0 %v2698
        %v2768 = vpop.f32.mrf.mxu0
        %v2769 = vadd.f32 0.0, %v2768
        %v2770 = vpop.f32.mrf.mxu0
        %v2771 = vpop.f32.mrf.mxu0
        %v2772 = vadd.f32 0.0, %v2771
        %v2773 = vpop.f32.mrf.mxu0
        %2774 = vmatprep.mubr.bf16.mxu0 0
        %2775 = vmatmul.mubr.bf16.gmra.mxu0 %v2699
        %v2776 = vpop.f32.mrf.mxu0
        %v2777 = vadd.f32 0.0, %v2776
        %v2778 = vpop.f32.mrf.mxu0
        %v2779 = vpop.f32.mrf.mxu0
        %v2780 = vadd.f32 0.0, %v2779
        %v2781 = vpop.f32.mrf.mxu0
        %2782 = vmatprep.mubr.bf16.mxu0 0
        %2783 = vmatmul.mubr.bf16.gmra.mxu0 %v2700
        %v2784 = vpop.f32.mrf.mxu0
        %v2785 = vadd.f32 0.0, %v2784
        %v2786 = vpop.f32.mrf.mxu0
        %v2787 = vpop.f32.mrf.mxu0
        %v2788 = vadd.f32 0.0, %v2787
        %v2789 = vpop.f32.mrf.mxu0
        %2790 = vmatprep.mubr.bf16.mxu0 0
        %2791 = vmatmul.mubr.bf16.gmra.mxu0 %v2701
        %v2792 = vpop.f32.mrf.mxu0
        %v2793 = vadd.f32 0.0, %v2792
        %v2794 = vpop.f32.mrf.mxu0
        %v2795 = vpop.f32.mrf.mxu0
        %v2796 = vadd.f32 0.0, %v2795
        %v2797 = vpop.f32.mrf.mxu0
        %2798 = vdwg.mxu0
        %v2799 = vadd.f32 %v2737, %v565
        %v2800 = vadd.f32 %v2740, %v568
        %v2801 = vadd.f32 %v2745, %v573
        %v2802 = vadd.f32 %v2748, %v576
        %v2803 = vadd.f32 %v2753, %v581
        %v2804 = vadd.f32 %v2756, %v584
        %v2805 = vadd.f32 %v2761, %v589
        %v2806 = vadd.f32 %v2764, %v592
        %v2807 = vadd.f32 %v2769, %v597
        %v2808 = vadd.f32 %v2772, %v600
        %v2809 = vadd.f32 %v2777, %v605
        %v2810 = vadd.f32 %v2780, %v608
        %v2811 = vadd.f32 %v2785, %v613
        %v2812 = vadd.f32 %v2788, %v616
        %v2813 = vadd.f32 %v2793, %v621
        %v2814 = vadd.f32 %v2796, %v624
        %v2815 = vadd.f32 %v2799, %v1463
        %v2816 = vadd.f32 %v2800, %v1463
        %v2817 = vadd.f32 %v2801, %v1463
        %v2818 = vadd.f32 %v2802, %v1463
        %v2819 = vadd.f32 %v2803, %v1463
        %v2820 = vadd.f32 %v2804, %v1463
        %v2821 = vadd.f32 %v2805, %v1463
        %v2822 = vadd.f32 %v2806, %v1463
        %v2823 = vadd.f32 %v2807, %v1463
        %v2824 = vadd.f32 %v2808, %v1463
        %v2825 = vadd.f32 %v2809, %v1463
        %v2826 = vadd.f32 %v2810, %v1463
        %v2827 = vadd.f32 %v2811, %v1463
        %v2828 = vadd.f32 %v2812, %v1463
        %v2829 = vadd.f32 %v2813, %v1463
        %v2830 = vadd.f32 %v2814, %v1463
        %v2831 = vxor.u32 %v2815, 2147483648
        %v2832 = vxor.u32 %v2816, 2147483648
        %v2833 = vxor.u32 %v2817, 2147483648
        %v2834 = vxor.u32 %v2818, 2147483648
        %v2835 = vxor.u32 %v2819, 2147483648
        %v2836 = vxor.u32 %v2820, 2147483648
        %v2837 = vxor.u32 %v2821, 2147483648
        %v2838 = vxor.u32 %v2822, 2147483648
        %v2839 = vxor.u32 %v2823, 2147483648
        %v2840 = vxor.u32 %v2824, 2147483648
        %v2841 = vxor.u32 %v2825, 2147483648
        %v2842 = vxor.u32 %v2826, 2147483648
        %v2843 = vxor.u32 %v2827, 2147483648
        %v2844 = vxor.u32 %v2828, 2147483648
        %v2845 = vxor.u32 %v2829, 2147483648
        %v2846 = vxor.u32 %v2830, 2147483648
        %v2847 = vmul.f32 %v2831, 1.442695
        %v2848 = vpow.pop %v2847
        %v2849 = vmul.f32 %v2832, 1.442695
        %v2850 = vpow.pop %v2849
        %v2851 = vmul.f32 %v2833, 1.442695
        %v2852 = vpow.pop %v2851
        %v2853 = vmul.f32 %v2834, 1.442695
        %v2854 = vpow.pop %v2853
        %v2855 = vmul.f32 %v2835, 1.442695
        %v2856 = vpow.pop %v2855
        %v2857 = vmul.f32 %v2836, 1.442695
        %v2858 = vpow.pop %v2857
        %v2859 = vmul.f32 %v2837, 1.442695
        %v2860 = vpow.pop %v2859
        %v2861 = vmul.f32 %v2838, 1.442695
        %v2862 = vpow.pop %v2861
        %v2863 = vmul.f32 %v2839, 1.442695
        %v2864 = vpow.pop %v2863
        %v2865 = vmul.f32 %v2840, 1.442695
        %v2866 = vpow.pop %v2865
        %v2867 = vmul.f32 %v2841, 1.442695
        %v2868 = vpow.pop %v2867
        %v2869 = vmul.f32 %v2842, 1.442695
        %v2870 = vpow.pop %v2869
        %v2871 = vmul.f32 %v2843, 1.442695
        %v2872 = vpow.pop %v2871
        %v2873 = vmul.f32 %v2844, 1.442695
        %v2874 = vpow.pop %v2873
        %v2875 = vmul.f32 %v2845, 1.442695
        %v2876 = vpow.pop %v2875
        %v2877 = vmul.f32 %v2846, 1.442695
        %v2878 = vpow.pop %v2877
        %v2879 = vadd.f32 %v2848, 1.0
        %v2880 = vadd.f32 %v2850, 1.0
        %v2881 = vadd.f32 %v2852, 1.0
        %v2882 = vadd.f32 %v2854, 1.0
        %v2883 = vadd.f32 %v2856, 1.0
        %v2884 = vadd.f32 %v2858, 1.0
        %v2885 = vadd.f32 %v2860, 1.0
        %v2886 = vadd.f32 %v2862, 1.0
        %v2887 = vadd.f32 %v2864, 1.0
        %v2888 = vadd.f32 %v2866, 1.0
        %v2889 = vadd.f32 %v2868, 1.0
        %v2890 = vadd.f32 %v2870, 1.0
        %v2891 = vadd.f32 %v2872, 1.0
        %v2892 = vadd.f32 %v2874, 1.0
        %v2893 = vadd.f32 %v2876, 1.0
        %v2894 = vadd.f32 %v2878, 1.0
        %v2895 = vrcp.pop %v2879
        %v2896 = vmul.f32 1.0, %v2895
        %v2897 = vrcp.pop %v2880
        %v2898 = vmul.f32 1.0, %v2897
        %v2899 = vrcp.pop %v2881
        %v2900 = vmul.f32 1.0, %v2899
        %v2901 = vrcp.pop %v2882
        %v2902 = vmul.f32 1.0, %v2901
        %v2903 = vrcp.pop %v2883
        %v2904 = vmul.f32 1.0, %v2903
        %v2905 = vrcp.pop %v2884
        %v2906 = vmul.f32 1.0, %v2905
        %v2907 = vrcp.pop %v2885
        %v2908 = vmul.f32 1.0, %v2907
        %v2909 = vrcp.pop %v2886
        %v2910 = vmul.f32 1.0, %v2909
        %v2911 = vrcp.pop %v2887
        %v2912 = vmul.f32 1.0, %v2911
        %v2913 = vrcp.pop %v2888
        %v2914 = vmul.f32 1.0, %v2913
        %v2915 = vrcp.pop %v2889
        %v2916 = vmul.f32 1.0, %v2915
        %v2917 = vrcp.pop %v2890
        %v2918 = vmul.f32 1.0, %v2917
        %v2919 = vrcp.pop %v2891
        %v2920 = vmul.f32 1.0, %v2919
        %v2921 = vrcp.pop %v2892
        %v2922 = vmul.f32 1.0, %v2921
        %v2923 = vrcp.pop %v2893
        %v2924 = vmul.f32 1.0, %v2923
        %v2925 = vrcp.pop %v2894
        %v2926 = vmul.f32 1.0, %v2925
        %v2927 = vadd.f32 %v2737, %v1582
        %v2928 = vadd.f32 %v2740, %v1582
        %v2929 = vadd.f32 %v2745, %v1582
        %v2930 = vadd.f32 %v2748, %v1582
        %v2931 = vadd.f32 %v2753, %v1582
        %v2932 = vadd.f32 %v2756, %v1582
        %v2933 = vadd.f32 %v2761, %v1582
        %v2934 = vadd.f32 %v2764, %v1582
        %v2935 = vadd.f32 %v2769, %v1582
        %v2936 = vadd.f32 %v2772, %v1582
        %v2937 = vadd.f32 %v2777, %v1582
        %v2938 = vadd.f32 %v2780, %v1582
        %v2939 = vadd.f32 %v2785, %v1582
        %v2940 = vadd.f32 %v2788, %v1582
        %v2941 = vadd.f32 %v2793, %v1582
        %v2942 = vadd.f32 %v2796, %v1582
        %v2943 = vmul.f32 %v2896, %v1641
        %v2944 = vmul.f32 %v2898, %v1643
        %v2945 = vmul.f32 %v2900, %v1645
        %v2946 = vmul.f32 %v2902, %v1647
        %v2947 = vmul.f32 %v2904, %v1649
        %v2948 = vmul.f32 %v2906, %v1651
        %v2949 = vmul.f32 %v2908, %v1653
        %v2950 = vmul.f32 %v2910, %v1655
        %v2951 = vmul.f32 %v2912, %v1657
        %v2952 = vmul.f32 %v2914, %v1659
        %v2953 = vmul.f32 %v2916, %v1661
        %v2954 = vmul.f32 %v2918, %v1663
        %v2955 = vmul.f32 %v2920, %v1665
        %v2956 = vmul.f32 %v2922, %v1667
        %v2957 = vmul.f32 %v2924, %v1669
        %v2958 = vmul.f32 %v2926, %v1671
        %2975 = vrot.lane.b32.xlu0 %v2943, 64
        %v2976 = vpop.permute.xlu0 %2975
        %2977 = vrot.lane.b32.xlu0 %v2944, 64
        %v2978 = vpop.permute.xlu0 %2977
        %2979 = vrot.lane.b32.xlu0 %v2945, 64
        %v2980 = vpop.permute.xlu0 %2979
        %2981 = vrot.lane.b32.xlu0 %v2946, 64
        %v2982 = vpop.permute.xlu0 %2981
        %2983 = vrot.lane.b32.xlu0 %v2947, 64
        %v2984 = vpop.permute.xlu0 %2983
        %2985 = vrot.lane.b32.xlu0 %v2948, 64
        %v2986 = vpop.permute.xlu0 %2985
        %2987 = vrot.lane.b32.xlu0 %v2949, 64
        %v2988 = vpop.permute.xlu0 %2987
        %2989 = vrot.lane.b32.xlu0 %v2950, 64
        %v2990 = vpop.permute.xlu0 %2989
        %2991 = vrot.lane.b32.xlu0 %v2951, 64
        %v2992 = vpop.permute.xlu0 %2991
        %2993 = vrot.lane.b32.xlu0 %v2952, 64
        %v2994 = vpop.permute.xlu0 %2993
        %2995 = vrot.lane.b32.xlu0 %v2953, 64
        %v2996 = vpop.permute.xlu0 %2995
        %2997 = vrot.lane.b32.xlu0 %v2954, 64
        %v2998 = vpop.permute.xlu0 %2997
        %2999 = vrot.lane.b32.xlu0 %v2955, 64
        %v3000 = vpop.permute.xlu0 %2999
        %3001 = vrot.lane.b32.xlu0 %v2956, 64
        %v3002 = vpop.permute.xlu0 %3001
        %3003 = vrot.lane.b32.xlu0 %v2957, 64
        %v3004 = vpop.permute.xlu0 %3003
        %3005 = vrot.lane.b32.xlu0 %v2958, 64
        %v3006 = vpop.permute.xlu0 %3005
        %v3023 = vadd.f32 %v2927, %v2976
        %v3024 = vadd.f32 %v2928, %v2978
        %v3025 = vadd.f32 %v2929, %v2980
        %v3026 = vadd.f32 %v2930, %v2982
        %v3027 = vadd.f32 %v2931, %v2984
        %v3028 = vadd.f32 %v2932, %v2986
        %v3029 = vadd.f32 %v2933, %v2988
        %v3030 = vadd.f32 %v2934, %v2990
        %v3031 = vadd.f32 %v2935, %v2992
        %v3032 = vadd.f32 %v2936, %v2994
        %v3033 = vadd.f32 %v2937, %v2996
        %v3034 = vadd.f32 %v2938, %v2998
        %v3035 = vadd.f32 %v2939, %v3000
        %v3036 = vadd.f32 %v2940, %v3002
        %v3037 = vadd.f32 %v2941, %v3004
        %v3038 = vadd.f32 %v2942, %v3006
        %v3039 = vtanh.pop %v3023
        %v3040 = vtanh.pop %v3024
        %v3041 = vtanh.pop %v3025
        %v3042 = vtanh.pop %v3026
        %v3043 = vtanh.pop %v3027
        %v3044 = vtanh.pop %v3028
        %v3045 = vtanh.pop %v3029
        %v3046 = vtanh.pop %v3030
        %v3047 = vtanh.pop %v3031
        %v3048 = vtanh.pop %v3032
        %v3049 = vtanh.pop %v3033
        %v3050 = vtanh.pop %v3034
        %v3051 = vtanh.pop %v3035
        %v3052 = vtanh.pop %v3036
        %v3053 = vtanh.pop %v3037
        %v3054 = vtanh.pop %v3038
        %v3055 = vsub.f32 1.0, %v2896
        %v3056 = vsub.f32 1.0, %v2898
        %v3057 = vsub.f32 1.0, %v2900
        %v3058 = vsub.f32 1.0, %v2902
        %v3059 = vsub.f32 1.0, %v2904
        %v3060 = vsub.f32 1.0, %v2906
        %v3061 = vsub.f32 1.0, %v2908
        %v3062 = vsub.f32 1.0, %v2910
        %v3063 = vsub.f32 1.0, %v2912
        %v3064 = vsub.f32 1.0, %v2914
        %v3065 = vsub.f32 1.0, %v2916
        %v3066 = vsub.f32 1.0, %v2918
        %v3067 = vsub.f32 1.0, %v2920
        %v3068 = vsub.f32 1.0, %v2922
        %v3069 = vsub.f32 1.0, %v2924
        %v3070 = vsub.f32 1.0, %v2926
        %3087 = vrot.lane.b32.xlu0 %v3039, 96
        %v3088 = vpop.permute.xlu0 %3087
        %3089 = vrot.lane.b32.xlu0 %v3040, 96
        %v3090 = vpop.permute.xlu0 %3089
        %3091 = vrot.lane.b32.xlu0 %v3041, 96
        %v3092 = vpop.permute.xlu0 %3091
        %3093 = vrot.lane.b32.xlu0 %v3042, 96
        %v3094 = vpop.permute.xlu0 %3093
        %3095 = vrot.lane.b32.xlu0 %v3043, 96
        %v3096 = vpop.permute.xlu0 %3095
        %3097 = vrot.lane.b32.xlu0 %v3044, 96
        %v3098 = vpop.permute.xlu0 %3097
        %3099 = vrot.lane.b32.xlu0 %v3045, 96
        %v3100 = vpop.permute.xlu0 %3099
        %3101 = vrot.lane.b32.xlu0 %v3046, 96
        %v3102 = vpop.permute.xlu0 %3101
        %3103 = vrot.lane.b32.xlu0 %v3047, 96
        %v3104 = vpop.permute.xlu0 %3103
        %3105 = vrot.lane.b32.xlu0 %v3048, 96
        %v3106 = vpop.permute.xlu0 %3105
        %3107 = vrot.lane.b32.xlu0 %v3049, 96
        %v3108 = vpop.permute.xlu0 %3107
        %3109 = vrot.lane.b32.xlu0 %v3050, 96
        %v3110 = vpop.permute.xlu0 %3109
        %3111 = vrot.lane.b32.xlu0 %v3051, 96
        %v3112 = vpop.permute.xlu0 %3111
        %3113 = vrot.lane.b32.xlu0 %v3052, 96
        %v3114 = vpop.permute.xlu0 %3113
        %3115 = vrot.lane.b32.xlu0 %v3053, 96
        %v3116 = vpop.permute.xlu0 %3115
        %3117 = vrot.lane.b32.xlu0 %v3054, 96
        %v3118 = vpop.permute.xlu0 %3117
        %v3135 = vmul.f32 %v3055, %v3088
        %v3136 = vmul.f32 %v3056, %v3090
        %v3137 = vmul.f32 %v3057, %v3092
        %v3138 = vmul.f32 %v3058, %v3094
        %v3139 = vmul.f32 %v3059, %v3096
        %v3140 = vmul.f32 %v3060, %v3098
        %v3141 = vmul.f32 %v3061, %v3100
        %v3142 = vmul.f32 %v3062, %v3102
        %v3143 = vmul.f32 %v3063, %v3104
        %v3144 = vmul.f32 %v3064, %v3106
        %v3145 = vmul.f32 %v3065, %v3108
        %v3146 = vmul.f32 %v3066, %v3110
        %v3147 = vmul.f32 %v3067, %v3112
        %v3148 = vmul.f32 %v3068, %v3114
        %v3149 = vmul.f32 %v3069, %v3116
        %v3150 = vmul.f32 %v3070, %v3118
        %v3151 = vmul.f32 %v2896, %v1913
        %v3152 = vmul.f32 %v2898, %v1915
        %v3153 = vmul.f32 %v2900, %v1917
        %v3154 = vmul.f32 %v2902, %v1919
        %v3155 = vmul.f32 %v2904, %v1921
        %v3156 = vmul.f32 %v2906, %v1923
        %v3157 = vmul.f32 %v2908, %v1925
        %v3158 = vmul.f32 %v2910, %v1927
        %v3159 = vmul.f32 %v2912, %v1929
        %v3160 = vmul.f32 %v2914, %v1931
        %v3161 = vmul.f32 %v2916, %v1933
        %v3162 = vmul.f32 %v2918, %v1935
        %v3163 = vmul.f32 %v2920, %v1937
        %v3164 = vmul.f32 %v2922, %v1939
        %v3165 = vmul.f32 %v2924, %v1941
        %v3166 = vmul.f32 %v2926, %v1943
        %v3167 = vadd.f32 %v3135, %v3151
        %v3168 = vadd.f32 %v3136, %v3152
        %v3169 = vadd.f32 %v3137, %v3153
        %v3170 = vadd.f32 %v3138, %v3154
        %v3171 = vadd.f32 %v3139, %v3155
        %v3172 = vadd.f32 %v3140, %v3156
        %v3173 = vadd.f32 %v3141, %v3157
        %v3174 = vadd.f32 %v3142, %v3158
        %v3175 = vadd.f32 %v3143, %v3159
        %v3176 = vadd.f32 %v3144, %v3160
        %v3177 = vadd.f32 %v3145, %v3161
        %v3178 = vadd.f32 %v3146, %v3162
        %v3179 = vadd.f32 %v3147, %v3163
        %v3180 = vadd.f32 %v3148, %v3164
        %v3181 = vadd.f32 %v3149, %v3165
        %v3182 = vadd.f32 %v3150, %v3166
        %v3183 = vld [vmem:[#allocation5 + $0x1a0] sm:$0xf]
        %v3184 = vld [vmem:[#allocation5 + $0x1a4] sm:$0xf]
        %v3185 = vld [vmem:[#allocation5 + $0x1a8] sm:$0xf]
        %v3186 = vld [vmem:[#allocation5 + $0x1ac] sm:$0xf]
        %v3187 = vpack.c.bf16 %v3168, %v3167
        %v3188 = vpack.c.bf16 %v3170, %v3169
        %v3189 = vpack.c.bf16 %v3172, %v3171
        %v3190 = vpack.c.bf16 %v3174, %v3173
        %v3191 = vpack.c.bf16 %v3176, %v3175
        %v3192 = vpack.c.bf16 %v3178, %v3177
        %v3193 = vpack.c.bf16 %v3180, %v3179
        %v3194 = vpack.c.bf16 %v3182, %v3181
        %v3195 = vld [vmem:[%s3 + $0x7] sm:$0x1]
        %v3196 = vlaneseq
        %v3197 = vshrl.u32 %v3196, 7
        %v3198 = vsub.s32 0, %v3197
        %v3199 = vrot.slane %v3195, %v3198
        %3208 = vrot.lane.b32.xlu0 %v3187, 96
        %v3209 = vpop.permute.xlu0 %3208
        %3210 = vrot.lane.b32.xlu0 %v3188, 96
        %v3211 = vpop.permute.xlu0 %3210
        %3212 = vrot.lane.b32.xlu0 %v3189, 96
        %v3213 = vpop.permute.xlu0 %3212
        %3214 = vrot.lane.b32.xlu0 %v3190, 96
        %v3215 = vpop.permute.xlu0 %3214
        %3216 = vrot.lane.b32.xlu0 %v3191, 96
        %v3217 = vpop.permute.xlu0 %3216
        %3218 = vrot.lane.b32.xlu0 %v3192, 96
        %v3219 = vpop.permute.xlu0 %3218
        %3220 = vrot.lane.b32.xlu0 %v3193, 96
        %v3221 = vpop.permute.xlu0 %3220
        %3222 = vrot.lane.b32.xlu0 %v3194, 96
        %v3223 = vpop.permute.xlu0 %3222
        %v3228 = vunpack.c.l.b16 %v3183
        %v3229 = vunpack.c.l.b16 %v3184
        %v3230 = vunpack.c.l.b16 %v3185
        %v3231 = vunpack.c.l.b16 %v3186
        %v3232 = vpack.c.b16 %v3229, %v3228
        %v3233 = vpack.c.b16 %v3231, %v3230
        %v3237 = vsel %vm336, %v3209, 0
        %v3240 = vsel %vm336, %v3211, 0
        %v3243 = vsel %vm336, %v3213, 0
        %v3246 = vsel %vm336, %v3215, 0
        %v3249 = vsel %vm336, %v3217, 0
        %v3252 = vsel %vm336, %v3219, 0
        %v3255 = vsel %vm336, %v3221, 0
        %v3258 = vsel %vm336, %v3223, 0
        %3260 = vmatprep.subr.bf16.mxu0 0
        %3261 = vmatpush1.bf16.msra.mxu0 0
        %3262 = vmatprep.subr.bf16.mxu0 0
        %3263 = vmatpush1.bf16.msra.mxu0 0
        %3264 = vmatprep.subr.bf16.mxu0 0
        %3265 = vmatpush1.bf16.msra.mxu0 0
        %3266 = vmatprep.subr.bf16.mxu0 0
        %3267 = vmatpush1.bf16.msra.mxu0 0
        %3268 = vmatprep.subr.bf16.mxu0 0
        %3269 = vmatpush1.bf16.msra.mxu0 0
        %3270 = vmatprep.subr.bf16.mxu0 0
        %3271 = vmatpush1.bf16.msra.mxu0 0
        %3272 = vmatprep.subr.bf16.mxu0 0
        %3273 = vmatpush1.bf16.msra.mxu0 %v3233
        %3274 = vmatprep.subr.bf16.mxu0 0
        %3275 = vmatpush1.bf16.msra.mxu0 %v3232
        %3276 = vmatprep.subr.bf16.mxu0 0
        %3277 = vmatpush2.bf16.msra.mxu0 0
        %3278 = vmatprep.subr.bf16.mxu0 0
        %3279 = vmatpush2.bf16.msra.mxu0 0
        %3280 = vmatprep.subr.bf16.mxu0 0
        %3281 = vmatpush2.bf16.msra.mxu0 0
        %3282 = vmatprep.subr.bf16.mxu0 0
        %3283 = vmatpush2.bf16.msra.mxu0 0
        %3284 = vmatprep.subr.bf16.mxu0 0
        %3285 = vmatpush2.bf16.msra.mxu0 0
        %3286 = vmatprep.subr.bf16.mxu0 0
        %3287 = vmatpush2.bf16.msra.mxu0 0
        %3288 = vmatprep.subr.bf16.mxu0 0
        %3289 = vmatpush2.bf16.msra.mxu0 0
        %3290 = vmatprep.subr.bf16.mxu0 0
        %3291 = vmatpush2.bf16.msra.mxu0 0
        %3292 = vmatprep.mubr.bf16.mxu0 0
        %3293 = vmatmul.mubr.bf16.gmra.mxu0 %v3237
        %v3294 = vpop.f32.mrf.mxu0
        %v3295 = vadd.f32 %v3199, %v3294
        %v3296 = vpop.f32.mrf.mxu0
        %v3297 = vpop.f32.mrf.mxu0
        %v3298 = vadd.f32 %v3199, %v3297
        %v3299 = vpop.f32.mrf.mxu0
        %3300 = vmatprep.mubr.bf16.mxu0 0
        %3301 = vmatmul.mubr.bf16.gmra.mxu0 %v3240
        %v3302 = vpop.f32.mrf.mxu0
        %v3303 = vadd.f32 %v3199, %v3302
        %v3304 = vpop.f32.mrf.mxu0
        %v3305 = vpop.f32.mrf.mxu0
        %v3306 = vadd.f32 %v3199, %v3305
        %v3307 = vpop.f32.mrf.mxu0
        %3308 = vmatprep.mubr.bf16.mxu0 0
        %3309 = vmatmul.mubr.bf16.gmra.mxu0 %v3243
        %v3310 = vpop.f32.mrf.mxu0
        %v3311 = vadd.f32 %v3199, %v3310
        %v3312 = vpop.f32.mrf.mxu0
        %v3313 = vpop.f32.mrf.mxu0
        %v3314 = vadd.f32 %v3199, %v3313
        %v3315 = vpop.f32.mrf.mxu0
        %3316 = vmatprep.mubr.bf16.mxu0 0
        %3317 = vmatmul.mubr.bf16.gmra.mxu0 %v3246
        %v3318 = vpop.f32.mrf.mxu0
        %v3319 = vadd.f32 %v3199, %v3318
        %v3320 = vpop.f32.mrf.mxu0
        %v3321 = vpop.f32.mrf.mxu0
        %v3322 = vadd.f32 %v3199, %v3321
        %v3323 = vpop.f32.mrf.mxu0
        %3324 = vmatprep.mubr.bf16.mxu0 0
        %3325 = vmatmul.mubr.bf16.gmra.mxu0 %v3249
        %v3326 = vpop.f32.mrf.mxu0
        %v3327 = vadd.f32 %v3199, %v3326
        %v3328 = vpop.f32.mrf.mxu0
        %v3329 = vpop.f32.mrf.mxu0
        %v3330 = vadd.f32 %v3199, %v3329
        %v3331 = vpop.f32.mrf.mxu0
        %3332 = vmatprep.mubr.bf16.mxu0 0
        %3333 = vmatmul.mubr.bf16.gmra.mxu0 %v3252
        %v3334 = vpop.f32.mrf.mxu0
        %v3335 = vadd.f32 %v3199, %v3334
        %v3336 = vpop.f32.mrf.mxu0
        %v3337 = vpop.f32.mrf.mxu0
        %v3338 = vadd.f32 %v3199, %v3337
        %v3339 = vpop.f32.mrf.mxu0
        %3340 = vmatprep.mubr.bf16.mxu0 0
        %3341 = vmatmul.mubr.bf16.gmra.mxu0 %v3255
        %v3342 = vpop.f32.mrf.mxu0
        %v3343 = vadd.f32 %v3199, %v3342
        %v3344 = vpop.f32.mrf.mxu0
        %v3345 = vpop.f32.mrf.mxu0
        %v3346 = vadd.f32 %v3199, %v3345
        %v3347 = vpop.f32.mrf.mxu0
        %3348 = vmatprep.mubr.bf16.mxu0 0
        %3349 = vmatmul.mubr.bf16.gmra.mxu0 %v3258
        %v3350 = vpop.f32.mrf.mxu0
        %v3351 = vadd.f32 %v3199, %v3350
        %v3352 = vpop.f32.mrf.mxu0
        %v3353 = vpop.f32.mrf.mxu0
        %v3354 = vadd.f32 %v3199, %v3353
        %v3355 = vpop.f32.mrf.mxu0
        %3356 = vdwg.mxu0
        %vm3357 = vcmask 64512
        %v3358 = vsel %vm3357, %v3295, -inf
        %3359 = vmax.xlane.f32.xlu0 %v3358
        %v3360 = vpop.xlane.xlu0 %3359
        %v3361 = vsel %vm3357, %v3298, -inf
        %3362 = vmax.xlane.f32.xlu0 %v3361
        %v3363 = vpop.xlane.xlu0 %3362
        %v3364 = vsel %vm3357, %v3303, -inf
        %3365 = vmax.xlane.f32.xlu0 %v3364
        %v3366 = vpop.xlane.xlu0 %3365
        %v3367 = vsel %vm3357, %v3306, -inf
        %3368 = vmax.xlane.f32.xlu0 %v3367
        %v3369 = vpop.xlane.xlu0 %3368
        %v3370 = vsel %vm3357, %v3311, -inf
        %3371 = vmax.xlane.f32.xlu0 %v3370
        %v3372 = vpop.xlane.xlu0 %3371
        %v3373 = vsel %vm3357, %v3314, -inf
        %3374 = vmax.xlane.f32.xlu0 %v3373
        %v3375 = vpop.xlane.xlu0 %3374
        %v3376 = vsel %vm3357, %v3319, -inf
        %3377 = vmax.xlane.f32.xlu0 %v3376
        %v3378 = vpop.xlane.xlu0 %3377
        %v3379 = vsel %vm3357, %v3322, -inf
        %3380 = vmax.xlane.f32.xlu0 %v3379
        %v3381 = vpop.xlane.xlu0 %3380
        %v3382 = vsel %vm3357, %v3327, -inf
        %3383 = vmax.xlane.f32.xlu0 %v3382
        %v3384 = vpop.xlane.xlu0 %3383
        %v3385 = vsel %vm3357, %v3330, -inf
        %3386 = vmax.xlane.f32.xlu0 %v3385
        %v3387 = vpop.xlane.xlu0 %3386
        %v3388 = vsel %vm3357, %v3335, -inf
        %3389 = vmax.xlane.f32.xlu0 %v3388
        %v3390 = vpop.xlane.xlu0 %3389
        %v3391 = vsel %vm3357, %v3338, -inf
        %3392 = vmax.xlane.f32.xlu0 %v3391
        %v3393 = vpop.xlane.xlu0 %3392
        %v3394 = vsel %vm3357, %v3343, -inf
        %3395 = vmax.xlane.f32.xlu0 %v3394
        %v3396 = vpop.xlane.xlu0 %3395
        %v3397 = vsel %vm3357, %v3346, -inf
        %3398 = vmax.xlane.f32.xlu0 %v3397
        %v3399 = vpop.xlane.xlu0 %3398
        %v3400 = vsel %vm3357, %v3351, -inf
        %3401 = vmax.xlane.f32.xlu0 %v3400
        %v3402 = vpop.xlane.xlu0 %3401
        %v3403 = vsel %vm3357, %v3354, -inf
        %3404 = vmax.xlane.f32.xlu0 %v3403
        %v3405 = vpop.xlane.xlu0 %3404
        %v3406 = vsub.f32 %v3295, %v3360
        %v3407 = vsub.f32 %v3298, %v3363
        %v3408 = vsub.f32 %v3303, %v3366
        %v3409 = vsub.f32 %v3306, %v3369
        %v3410 = vsub.f32 %v3311, %v3372
        %v3411 = vsub.f32 %v3314, %v3375
        %v3412 = vsub.f32 %v3319, %v3378
        %v3413 = vsub.f32 %v3322, %v3381
        %v3414 = vsub.f32 %v3327, %v3384
        %v3415 = vsub.f32 %v3330, %v3387
        %v3416 = vsub.f32 %v3335, %v3390
        %v3417 = vsub.f32 %v3338, %v3393
        %v3418 = vsub.f32 %v3343, %v3396
        %v3419 = vsub.f32 %v3346, %v3399
        %v3420 = vsub.f32 %v3351, %v3402
        %v3421 = vsub.f32 %v3354, %v3405
        %v3422 = vmul.f32 %v3406, 1.442695
        %v3423 = vpow.pop %v3422
        %v3424 = vmul.f32 %v3407, 1.442695
        %v3425 = vpow.pop %v3424
        %v3426 = vmul.f32 %v3408, 1.442695
        %v3427 = vpow.pop %v3426
        %v3428 = vmul.f32 %v3409, 1.442695
        %v3429 = vpow.pop %v3428
        %v3430 = vmul.f32 %v3410, 1.442695
        %v3431 = vpow.pop %v3430
        %v3432 = vmul.f32 %v3411, 1.442695
        %v3433 = vpow.pop %v3432
        %v3434 = vmul.f32 %v3412, 1.442695
        %v3435 = vpow.pop %v3434
        %v3436 = vmul.f32 %v3413, 1.442695
        %v3437 = vpow.pop %v3436
        %v3438 = vmul.f32 %v3414, 1.442695
        %v3439 = vpow.pop %v3438
        %v3440 = vmul.f32 %v3415, 1.442695
        %v3441 = vpow.pop %v3440
        %v3442 = vmul.f32 %v3416, 1.442695
        %v3443 = vpow.pop %v3442
        %v3444 = vmul.f32 %v3417, 1.442695
        %v3445 = vpow.pop %v3444
        %v3446 = vmul.f32 %v3418, 1.442695
        %v3447 = vpow.pop %v3446
        %v3448 = vmul.f32 %v3419, 1.442695
        %v3449 = vpow.pop %v3448
        %v3450 = vmul.f32 %v3420, 1.442695
        %v3451 = vpow.pop %v3450
        %v3452 = vmul.f32 %v3421, 1.442695
        %v3453 = vpow.pop %v3452
        %v3454 = vsel %vm3357, %v3423, 0.0
        %3455 = vadd.xlane.f32.xlu0 %v3454
        %v3456 = vpop.xlane.xlu0 %3455
        %v3457 = vsel %vm3357, %v3425, 0.0
        %3458 = vadd.xlane.f32.xlu0 %v3457
        %v3459 = vpop.xlane.xlu0 %3458
        %v3460 = vsel %vm3357, %v3427, 0.0
        %3461 = vadd.xlane.f32.xlu0 %v3460
        %v3462 = vpop.xlane.xlu0 %3461
        %v3463 = vsel %vm3357, %v3429, 0.0
        %3464 = vadd.xlane.f32.xlu0 %v3463
        %v3465 = vpop.xlane.xlu0 %3464
        %v3466 = vsel %vm3357, %v3431, 0.0
        %3467 = vadd.xlane.f32.xlu0 %v3466
        %v3468 = vpop.xlane.xlu0 %3467
        %v3469 = vsel %vm3357, %v3433, 0.0
        %3470 = vadd.xlane.f32.xlu0 %v3469
        %v3471 = vpop.xlane.xlu0 %3470
        %v3472 = vsel %vm3357, %v3435, 0.0
        %3473 = vadd.xlane.f32.xlu0 %v3472
        %v3474 = vpop.xlane.xlu0 %3473
        %v3475 = vsel %vm3357, %v3437, 0.0
        %3476 = vadd.xlane.f32.xlu0 %v3475
        %v3477 = vpop.xlane.xlu0 %3476
        %v3478 = vsel %vm3357, %v3439, 0.0
        %3479 = vadd.xlane.f32.xlu0 %v3478
        %v3480 = vpop.xlane.xlu0 %3479
        %v3481 = vsel %vm3357, %v3441, 0.0
        %3482 = vadd.xlane.f32.xlu0 %v3481
        %v3483 = vpop.xlane.xlu0 %3482
        %v3484 = vsel %vm3357, %v3443, 0.0
        %3485 = vadd.xlane.f32.xlu0 %v3484
        %v3486 = vpop.xlane.xlu0 %3485
        %v3487 = vsel %vm3357, %v3445, 0.0
        %3488 = vadd.xlane.f32.xlu0 %v3487
        %v3489 = vpop.xlane.xlu0 %3488
        %v3490 = vsel %vm3357, %v3447, 0.0
        %3491 = vadd.xlane.f32.xlu0 %v3490
        %v3492 = vpop.xlane.xlu0 %3491
        %v3493 = vsel %vm3357, %v3449, 0.0
        %3494 = vadd.xlane.f32.xlu0 %v3493
        %v3495 = vpop.xlane.xlu0 %3494
        %v3496 = vsel %vm3357, %v3451, 0.0
        %3497 = vadd.xlane.f32.xlu0 %v3496
        %v3498 = vpop.xlane.xlu0 %3497
        %v3499 = vsel %vm3357, %v3453, 0.0
        %3500 = vadd.xlane.f32.xlu0 %v3499
        %v3501 = vpop.xlane.xlu0 %3500
        %v3502 = vlog2.pop %v3456
        %v3503 = vmul.f32 %v3502, 0.6931472
        %v3504 = vlog2.pop %v3459
        %v3505 = vmul.f32 %v3504, 0.6931472
        %v3506 = vlog2.pop %v3462
        %v3507 = vmul.f32 %v3506, 0.6931472
        %v3508 = vlog2.pop %v3465
        %v3509 = vmul.f32 %v3508, 0.6931472
        %v3510 = vlog2.pop %v3468
        %v3511 = vmul.f32 %v3510, 0.6931472
        %v3512 = vlog2.pop %v3471
        %v3513 = vmul.f32 %v3512, 0.6931472
        %v3514 = vlog2.pop %v3474
        %v3515 = vmul.f32 %v3514, 0.6931472
        %v3516 = vlog2.pop %v3477
        %v3517 = vmul.f32 %v3516, 0.6931472
        %v3518 = vlog2.pop %v3480
        %v3519 = vmul.f32 %v3518, 0.6931472
        %v3520 = vlog2.pop %v3483
        %v3521 = vmul.f32 %v3520, 0.6931472
        %v3522 = vlog2.pop %v3486
        %v3523 = vmul.f32 %v3522, 0.6931472
        %v3524 = vlog2.pop %v3489
        %v3525 = vmul.f32 %v3524, 0.6931472
        %v3526 = vlog2.pop %v3492
        %v3527 = vmul.f32 %v3526, 0.6931472
        %v3528 = vlog2.pop %v3495
        %v3529 = vmul.f32 %v3528, 0.6931472
        %v3530 = vlog2.pop %v3498
        %v3531 = vmul.f32 %v3530, 0.6931472
        %v3532 = vlog2.pop %v3501
        %v3533 = vmul.f32 %v3532, 0.6931472
        %v3534 = vadd.f32 %v3360, %v3503
        %v3535 = vadd.f32 %v3363, %v3505
        %v3536 = vadd.f32 %v3366, %v3507
        %v3537 = vadd.f32 %v3369, %v3509
        %v3538 = vadd.f32 %v3372, %v3511
        %v3539 = vadd.f32 %v3375, %v3513
        %v3540 = vadd.f32 %v3378, %v3515
        %v3541 = vadd.f32 %v3381, %v3517
        %v3542 = vadd.f32 %v3384, %v3519
        %v3543 = vadd.f32 %v3387, %v3521
        %v3544 = vadd.f32 %v3390, %v3523
        %v3545 = vadd.f32 %v3393, %v3525
        %v3546 = vadd.f32 %v3396, %v3527
        %v3547 = vadd.f32 %v3399, %v3529
        %v3548 = vadd.f32 %v3402, %v3531
        %v3549 = vadd.f32 %v3405, %v3533
        %v3550 = vsub.f32 %v3295, %v3534
        %v3551 = vsub.f32 %v3298, %v3535
        %v3552 = vsub.f32 %v3303, %v3536
        %v3553 = vsub.f32 %v3306, %v3537
        %v3554 = vsub.f32 %v3311, %v3538
        %v3555 = vsub.f32 %v3314, %v3539
        %v3556 = vsub.f32 %v3319, %v3540
        %v3557 = vsub.f32 %v3322, %v3541
        %v3558 = vsub.f32 %v3327, %v3542
        %v3559 = vsub.f32 %v3330, %v3543
        %v3560 = vsub.f32 %v3335, %v3544
        %v3561 = vsub.f32 %v3338, %v3545
        %v3562 = vsub.f32 %v3343, %v3546
        %v3563 = vsub.f32 %v3346, %v3547
        %v3564 = vsub.f32 %v3351, %v3548
        %v3565 = vsub.f32 %v3354, %v3549
        %3566 = vst [vmem:[%s246] sm:$0xff] %v3550
        %3567 = vst [vmem:[%s246 + $0x8] sm:$0xff] %v3551
        %3568 = vst [vmem:[%s246 + $0x10] sm:$0xff] %v3552
        %3569 = vst [vmem:[%s246 + $0x18] sm:$0xff] %v3553
        %3570 = vst [vmem:[%s246 + $0x20] sm:$0xff] %v3554
        %3571 = vst [vmem:[%s246 + $0x28] sm:$0xff] %v3555
        %3572 = vst [vmem:[%s246 + $0x30] sm:$0xff] %v3556
        %3573 = vst [vmem:[%s246 + $0x38] sm:$0xff] %v3557
        %3574 = vst [vmem:[%s246 + $0x40] sm:$0xff] %v3558
        %3575 = vst [vmem:[%s246 + $0x48] sm:$0xff] %v3559
        %3576 = vst [vmem:[%s246 + $0x50] sm:$0xff] %v3560
        %3577 = vst [vmem:[%s246 + $0x58] sm:$0xff] %v3561
        %3578 = vst [vmem:[%s246 + $0x60] sm:$0xff] %v3562
        %3579 = vst [vmem:[%s246 + $0x68] sm:$0xff] %v3563
        %3580 = vst [vmem:[%s246 + $0x70] sm:$0xff] %v3564
        %3581 = vst [vmem:[%s246 + $0x78] sm:$0xff] %v3565
        %s3582 = sand.u32 %s124, 1
        %s3583 = scalar_lea.sflag [#allocation4], %s3582
        %s3584 = sand.u32 %s124, 1
        %s3585 = smul.addr %s3584, 128
        %s3586 = scalar_lea.vmem [#allocation7], %s3585
        // Predicated region
        $region45: #{tpu_custom_call.1} parent=35 // pred_check
          %p3587 = pneg %p134
        $region46: #{tpu_custom_call.1} parent=35 // pred_check_branch
          %3589 = sbr.rel (%p3587) target = $region48
        $region47: #{tpu_custom_call.1} parent=35 // pred_region
          %s3590 = smul.u32 16, %s22
          %s3592 = ssub.s32 2048, 2048
          %3593 = vsyncadd %s3583, %s3592
          %s3594 = smul.addr %s3590, 128
          %s3595 = scalar_lea.hbm %s4, %s3594
          %s3596 = sshll.u32 %s3586, 4
          %s3597 = int_to_ptr.vmem [resolvable:$true] %s3596
          %3602 = dma.vmem_to_hbm [thread:$0]  %s3597, 2048, %s3595, %s3583, 128, 128, 8
        $region48: #{tpu_custom_call.1} parent=35 // pred_fallthru
          _
      $region36: #{tpu_custom_call.1} parent=5 // pred_fallthru
        _
      %p3603 = scmp.le.s32.totalorder 2, %s17
      // Predicated region
      $region49: #{tpu_custom_call.1} parent=5 // pred_check
        %p3604 = pneg %p3603
      $region50: #{tpu_custom_call.1} parent=5 // pred_check_branch
        %3606 = sbr.rel (%p3604) target = $region52
      $region51: #{tpu_custom_call.1} parent=5 // pred_region
        %s3607 = ssub.s32 %s17, 2
        // Predicated region
        $region53: #{tpu_custom_call.1} parent=51 // pred_check
          %p3608 = pneg %p140
        $region54: #{tpu_custom_call.1} parent=51 // pred_check_branch
          %3610 = sbr.rel (%p3608) target = $region56
        $region55: #{tpu_custom_call.1} parent=51 // pred_region
          %s3611 = sand.u32 %s125, 1
          %s3612 = scalar_lea.sflag [#allocation4], %s3611
          %s3613 = sand.u32 %s125, 1
          %s3614 = smul.addr %s3613, 128
          %s3615 = scalar_lea.vmem [#allocation7], %s3614
          %3616 = dma.done %s3612, 2048
        $region56: #{tpu_custom_call.1} parent=51 // pred_fallthru
          _
      $region52: #{tpu_custom_call.1} parent=5 // pred_fallthru
        _
    $region6: #{tpu_custom_call.1} parent=1 // loop_footer
      %s21 = sadd.s32 1, %s17
    $region7: #{tpu_custom_call.1} parent=1 // loop_footer_branch
      %16 = sbr.rel target = $region3
    $region8: #{tpu_custom_call.1} parent=1 // loop_exit
      _
    %3617 = vsyncpa [#allocation3], 1
    %s3618 = scalar_lea.sflag [#allocation3], 1
    %3619 = vsyncpa %s3618, 1
    %3620 = vsyncpa [#allocation6], 1
    %3621 = vsyncpa [#allocation4], 1
    %s3622 = scalar_lea.sflag [#allocation4], 1
    %3623 = vsyncpa %s3622, 1

</llo_original>
